<compile_context>
chip_gen: v5e
topology: v5e:2x2
jax: 0.10.0
libtpu: 0.0.40
codegen_flags: <defaults>
</compile_context>

<pallas_src>
import functools

import jax
import jax.numpy as jnp
from jax.experimental import pallas as pl
from jax.experimental.pallas import tpu as pltpu


def _round_up(x, m):
    return ((x + m - 1) // m) * m


def _max_tile_m():
    """MXU-matched M-tile cap per TPU generation."""
    try:
        kind = jax.devices()[0].device_kind.lower()
    except Exception:
        return 128
    if "v6" in kind or "v7" in kind or "7x" in kind:
        return 256        # 2x256x256 MXU: 256-row LHS fills the M dimension
    return 128            # v5e: 4x128x128 MXU, single vst slot -> keep tiles modest


def _mlp_kernel(x_ref, w1_ref, b1_ref, w2_ref, b2_ref, w3_ref, b3_ref, o_ref):
    # Fused 3-layer MLP for one batch tile.  bf16 operands -> MXU-native,
    # f32 accumulation requested on every dot; ReLU + bias on the VPU.
    x = x_ref[...]                                                     # (TM, IN_PAD) bf16
    h1 = jnp.dot(x, w1_ref[...], preferred_element_type=jnp.float32)
    h1 = jnp.maximum(h1 + b1_ref[...], 0.0).astype(jnp.bfloat16)       # (TM, 512)
    h2 = jnp.dot(h1, w2_ref[...], preferred_element_type=jnp.float32)
    h2 = jnp.maximum(h2 + b2_ref[...], 0.0).astype(jnp.bfloat16)       # (TM, 128)
    out = jnp.dot(h2, w3_ref[...], preferred_element_type=jnp.float32)
    o_ref[...] = (out + b3_ref[...]).astype(o_ref.dtype)               # (TM, OUT_PAD)


def prepare_params(params):
    """One-time cast + pad of the weights/biases to TPU-friendly bf16 layouts.

    Call once and reuse the result across forward calls (this is where the old
    per-call HBM traffic came from).
    """
    w1, b1, w2, b2, w3, b3 = params
    in_features = w1.shape[0]
    n_actions = w3.shape[1]
    in_pad = _round_up(in_features, 128)
    out_pad = _round_up(n_actions, 128)

    w1b = jnp.pad(w1.astype(jnp.bfloat16), ((0, in_pad - in_features), (0, 0)))
    w2b = w2.astype(jnp.bfloat16)
    w3b = jnp.pad(w3.astype(jnp.bfloat16), ((0, 0), (0, out_pad - n_actions)))
    b1f = b1.astype(jnp.float32).reshape(1, -1)
    b2f = b2.astype(jnp.float32).reshape(1, -1)
    b3f = jnp.pad(b3.astype(jnp.float32).reshape(1, -1),
                  ((0, 0), (0, out_pad - n_actions)))
    return (w1b, b1f, w2b, b2f, w3b, b3f)


@functools.partial(jax.jit, static_argnames=("n_actions", "single_buffer"))
def _forward_impl(x, padded_params, n_actions, single_buffer):
    w1b, b1f, w2b, b2f, w3b, b3f = padded_params

    batch = x.shape[0]
    x2d = x.reshape(batch, -1)
    in_features = x2d.shape[1]
    in_pad = w1b.shape[0]
    out_pad = w3b.shape[1]
    h1_dim = w1b.shape[1]
    h2_dim = w2b.shape[1]
    assert in_features <= in_pad, "input width does not match prepared params"

    # Batch tile: multiple of 16 (bf16 sublane packing), capped per generation,
    # shrunk for tiny batches so we never pad more than (16 - 1) dead rows there.
    tm = min(_max_tile_m(), _round_up(max(batch, 1), 16))
    batch_pad = _round_up(batch, tm)

    # Single fused pad: batch rows to the tile multiple, features to lane width.
    xb = jnp.pad(x2d.astype(jnp.bfloat16),
                 ((0, batch_pad - batch), (0, in_pad - in_features)))

    grid = (batch_pad // tm,)

    # Constant-index weight/bias blocks: fetched once, VMEM-resident across all
    # batch steps; single-buffered since their block index never changes.
    def const_spec(shape):
        idx = lambda *_: (0,) * len(shape)
        if single_buffer:
            return pl.BlockSpec(shape, idx, pipeline_mode=pl.Buffered(1))
        return pl.BlockSpec(shape, idx)

    flops = 2 * batch_pad * (in_pad * h1_dim + h1_dim * h2_dim + h2_dim * out_pad)
    bytes_accessed = (
        (xb.size + w1b.size + w2b.size + w3b.size) * 2      # bf16 streams
        + (b1f.size + b2f.size + b3f.size) * 4               # f32 biases
        + batch_pad * out_pad * 4                             # f32 output
    )

    # VMEM footprint (weights single/double buffered + pipelined x/out blocks).
    weight_bytes = (w1b.size + w2b.size + w3b.size) * 2 \
        + (b1f.size + b2f.size + b3f.size) * 4
    if not single_buffer:
        weight_bytes *= 2
    act_bytes = 2 * tm * in_pad * 2 + 2 * tm * out_pad * 4
    vmem_needed = weight_bytes + act_bytes + (2 << 20)        # + headroom

    compiler_kwargs = dict(dimension_semantics=("parallel",))
    if vmem_needed > (24 << 20):
        # TODO(synk): beyond this point, switch to K-tiling of layer 1 (second
        # grid axis over in_features + f32 accumulator scratch) instead of just
        # raising the limit — required for very large obs on v7x (64 MiB VMEM).
        compiler_kwargs["vmem_limit_bytes"] = int(min(vmem_needed + (8 << 20),
                                                      100 << 20))

    out = pl.pallas_call(
        _mlp_kernel,
        out_shape=jax.ShapeDtypeStruct((batch_pad, out_pad), jnp.float32),
        grid=grid,
        in_specs=[
            pl.BlockSpec((tm, in_pad), lambda i: (i, 0)),
            const_spec(w1b.shape), const_spec(b1f.shape),
            const_spec(w2b.shape), const_spec(b2f.shape),
            const_spec(w3b.shape), const_spec(b3f.shape),
        ],
        out_specs=pl.BlockSpec((tm, out_pad), lambda i: (i, 0)),
        compiler_params=pltpu.CompilerParams(**compiler_kwargs),
        cost_estimate=pl.CostEstimate(
            flops=flops, transcendentals=0, bytes_accessed=bytes_accessed),
    )(xb, w1b, b1f, w2b, b2f, w3b, b3f)

    return out[:batch, :n_actions]


def net_forward(x, padded_params, n_actions):
    """x: (B, C, H, W) or any (B, ...) array. Returns (B, n_actions) float32."""
    try:
        return _forward_impl(x, padded_params, n_actions, single_buffer=True)
    except Exception:
        # Fallback for Pallas builds without pipeline_mode=pl.Buffered support.
        return _forward_impl(x, padded_params, n_actions, single_buffer=False)


def init_params(input_size, n_actions, key):
    """Deterministic init matching the layer shapes of the PyTorch module."""
    k1, k2, k3, k4, k5, k6 = jax.random.split(key, 6)

    def lin_init(kw, kb, fan_in, fan_out):
        # torch default: U(-1/sqrt(fan_in), 1/sqrt(fan_in))
        bound = 1.0 / jnp.sqrt(jnp.float32(fan_in))
        w = jax.random.uniform(kw, (fan_in, fan_out), jnp.float32, -bound, bound)
        b = jax.random.uniform(kb, (fan_out,), jnp.float32, -bound, bound)
        return w, b

    w1, b1 = lin_init(k1, k2, input_size, 512)
    w2, b2 = lin_init(k3, k4, 512, 128)
    w3, b3 = lin_init(k5, k6, 128, n_actions)
    return (w1, b1, w2, b2, w3, b3)


if __name__ == "__main__":
    key = jax.random.PRNGKey(0)
    k_x, k_p = jax.random.split(key)

    # obs_shape = (4, 16, 16) -> input_size = 1024, n_actions = 8, batch = 2
    obs_shape = (4, 16, 16)
    n_actions = 8
    batch = 2
    input_size = int(obs_shape[0] * obs_shape[1] * obs_shape[2])

    x = jax.random.normal(k_x, (batch,) + obs_shape, dtype=jnp.float32)
    params = init_params(input_size, n_actions, k_p)

    # One-time parameter preparation (cache/reuse across forward calls).
    padded_params = jax.block_until_ready(prepare_params(params))

    out = net_forward(x, padded_params, n_actions)
    jax.block_until_ready(out)
    assert out.shape == (batch, n_actions)

    # Reference in plain JAX mirroring the kernel's numerics
    # (bf16 operands, f32 accumulation, bf16 intermediate activations).
    w1, b1, w2, b2, w3, b3 = params
    xf = x.reshape(batch, -1).astype(jnp.bfloat16).astype(jnp.float32)
    w1r = w1.astype(jnp.bfloat16).astype(jnp.float32)
    w2r = w2.astype(jnp.bfloat16).astype(jnp.float32)
    w3r = w3.astype(jnp.bfloat16).astype(jnp.float32)
    r1 = jnp.maximum(xf @ w1r + b1, 0.0).astype(jnp.bfloat16).astype(jnp.float32)
    r2 = jnp.maximum(r1 @ w2r + b2, 0.0).astype(jnp.bfloat16).astype(jnp.float32)
    ref = r2 @ w3r + b3

    assert jnp.allclose(out, ref, atol=2e-2, rtol=2e-2), (
        f"max abs diff {float(jnp.max(jnp.abs(out - ref)))}")

    print("KERNEL_OK")
</pallas_src>

<mosaic_0001>
module attributes {stable_mosaic.version = 11 : i64} {
  func.func @_mlp_kernel(%arg0: i32, %arg1: memref<16x1024xbf16, #tpu.memory_space<vmem>>, %arg2: memref<1024x512xbf16, #tpu.memory_space<vmem>>, %arg3: memref<1x512xf32, #tpu.memory_space<vmem>>, %arg4: memref<512x128xbf16, #tpu.memory_space<vmem>>, %arg5: memref<1x128xf32, #tpu.memory_space<vmem>>, %arg6: memref<128x128xbf16, #tpu.memory_space<vmem>>, %arg7: memref<1x128xf32, #tpu.memory_space<vmem>>, %arg8: memref<16x128xf32, #tpu.memory_space<vmem>>) attributes {dimension_semantics = [#tpu.dimension_semantics<parallel>], iteration_bounds = array<i64: 1>, scalar_prefetch = 0 : i64, scratch_operands = 0 : i64, tpu.core_type = #tpu.core_type<tc>, window_params = [{transform_indices = @transform_0, window_bounds = array<i64: 16, 1024>}, {pipeline_mode = #tpu.pipeline_mode<synchronous>, transform_indices = @transform_1, window_bounds = array<i64: 1024, 512>}, {pipeline_mode = #tpu.pipeline_mode<synchronous>, transform_indices = @transform_2, window_bounds = array<i64: 1, 512>}, {pipeline_mode = #tpu.pipeline_mode<synchronous>, transform_indices = @transform_3, window_bounds = array<i64: 512, 128>}, {pipeline_mode = #tpu.pipeline_mode<synchronous>, transform_indices = @transform_4, window_bounds = array<i64: 1, 128>}, {pipeline_mode = #tpu.pipeline_mode<synchronous>, transform_indices = @transform_5, window_bounds = array<i64: 128, 128>}, {pipeline_mode = #tpu.pipeline_mode<synchronous>, transform_indices = @transform_6, window_bounds = array<i64: 1, 128>}, {transform_indices = @transform_7, window_bounds = array<i64: 16, 128>}]} {
    %c0 = arith.constant 0 : index
    %c0_0 = arith.constant 0 : index
    %0 = vector.load %arg1[%c0, %c0_0] : memref<16x1024xbf16, #tpu.memory_space<vmem>>, vector<16x1024xbf16>
    %c0_1 = arith.constant 0 : index
    %c0_2 = arith.constant 0 : index
    %1 = vector.load %arg2[%c0_1, %c0_2] : memref<1024x512xbf16, #tpu.memory_space<vmem>>, vector<1024x512xbf16>
    %cst = arith.constant dense<0.000000e+00> : vector<16x512xf32>
    %2 = tpu.matmul %0, %1, %cst {dimension_numbers = #tpu.dot_dimension_numbers<[1], [0], [0], [1], [0, 0, 1, 1], [], []>} : vector<16x1024xbf16>, vector<1024x512xbf16>, vector<16x512xf32> -> vector<16x512xf32>
    %c0_3 = arith.constant 0 : index
    %c0_4 = arith.constant 0 : index
    %3 = vector.load %arg3[%c0_3, %c0_4] : memref<1x512xf32, #tpu.memory_space<vmem>>, vector<1x512xf32>
    %4 = vector.broadcast %3 : vector<1x512xf32> to vector<16x512xf32>
    %5 = arith.addf %2, %4 : vector<16x512xf32>
    %cst_5 = arith.constant 0.000000e+00 : f32
    %6 = vector.broadcast %cst_5 : f32 to vector<16x512xf32>
    %7 = arith.maximumf %5, %6 : vector<16x512xf32>
    %8 = arith.truncf %7 : vector<16x512xf32> to vector<16x512xbf16>
    %c0_6 = arith.constant 0 : index
    %c0_7 = arith.constant 0 : index
    %9 = vector.load %arg4[%c0_6, %c0_7] : memref<512x128xbf16, #tpu.memory_space<vmem>>, vector<512x128xbf16>
    %cst_8 = arith.constant dense<0.000000e+00> : vector<16x128xf32>
    %10 = tpu.matmul %8, %9, %cst_8 {dimension_numbers = #tpu.dot_dimension_numbers<[1], [0], [0], [1], [0, 0, 1, 1], [], []>} : vector<16x512xbf16>, vector<512x128xbf16>, vector<16x128xf32> -> vector<16x128xf32>
    %c0_9 = arith.constant 0 : index
    %c0_10 = arith.constant 0 : index
    %11 = vector.load %arg5[%c0_9, %c0_10] : memref<1x128xf32, #tpu.memory_space<vmem>>, vector<1x128xf32>
    %12 = vector.broadcast %11 : vector<1x128xf32> to vector<16x128xf32>
    %13 = arith.addf %10, %12 : vector<16x128xf32>
    %cst_11 = arith.constant 0.000000e+00 : f32
    %14 = vector.broadcast %cst_11 : f32 to vector<16x128xf32>
    %15 = arith.maximumf %13, %14 : vector<16x128xf32>
    %16 = arith.truncf %15 : vector<16x128xf32> to vector<16x128xbf16>
    %c0_12 = arith.constant 0 : index
    %c0_13 = arith.constant 0 : index
    %17 = vector.load %arg6[%c0_12, %c0_13] : memref<128x128xbf16, #tpu.memory_space<vmem>>, vector<128x128xbf16>
    %cst_14 = arith.constant dense<0.000000e+00> : vector<16x128xf32>
    %18 = tpu.matmul %16, %17, %cst_14 {dimension_numbers = #tpu.dot_dimension_numbers<[1], [0], [0], [1], [0, 0, 1, 1], [], []>} : vector<16x128xbf16>, vector<128x128xbf16>, vector<16x128xf32> -> vector<16x128xf32>
    %c0_15 = arith.constant 0 : index
    %c0_16 = arith.constant 0 : index
    %19 = vector.load %arg7[%c0_15, %c0_16] : memref<1x128xf32, #tpu.memory_space<vmem>>, vector<1x128xf32>
    %20 = vector.broadcast %19 : vector<1x128xf32> to vector<16x128xf32>
    %21 = arith.addf %18, %20 : vector<16x128xf32>
    %c0_17 = arith.constant 0 : index
    %c0_18 = arith.constant 0 : index
    %22 = vector.load %arg8[%c0_17, %c0_18] : memref<16x128xf32, #tpu.memory_space<vmem>>, vector<16x128xf32>
    tpu.vector_store %arg8[%c0_17, %c0_18], %21 {strides = array<i32>} : memref<16x128xf32, #tpu.memory_space<vmem>>, vector<16x128xf32>,
    return
  }
  func.func @transform_0(%arg0: i32) -> (i32, i32) {
    %c0_i32 = arith.constant 0 : i32
    %c0_i32_0 = arith.constant 0 : i32
    return %arg0, %c0_i32 : i32, i32
  }
  func.func @transform_1(%arg0: i32) -> (i32, i32) {
    %c0_i32 = arith.constant 0 : i32
    %c0_i32_0 = arith.constant 0 : i32
    %c0_i32_1 = arith.constant 0 : i32
    return %c0_i32, %c0_i32_0 : i32, i32
  }
  func.func @transform_2(%arg0: i32) -> (i32, i32) {
    %c0_i32 = arith.constant 0 : i32
    %c0_i32_0 = arith.constant 0 : i32
    %c0_i32_1 = arith.constant 0 : i32
    return %c0_i32, %c0_i32_0 : i32, i32
  }
  func.func @transform_3(%arg0: i32) -> (i32, i32) {
    %c0_i32 = arith.constant 0 : i32
    %c0_i32_0 = arith.constant 0 : i32
    %c0_i32_1 = arith.constant 0 : i32
    return %c0_i32, %c0_i32_0 : i32, i32
  }
  func.func @transform_4(%arg0: i32) -> (i32, i32) {
    %c0_i32 = arith.constant 0 : i32
    %c0_i32_0 = arith.constant 0 : i32
    %c0_i32_1 = arith.constant 0 : i32
    return %c0_i32, %c0_i32_0 : i32, i32
  }
  func.func @transform_5(%arg0: i32) -> (i32, i32) {
    %c0_i32 = arith.constant 0 : i32
    %c0_i32_0 = arith.constant 0 : i32
    %c0_i32_1 = arith.constant 0 : i32
    return %c0_i32, %c0_i32_0 : i32, i32
  }
  func.func @transform_6(%arg0: i32) -> (i32, i32) {
    %c0_i32 = arith.constant 0 : i32
    %c0_i32_0 = arith.constant 0 : i32
    %c0_i32_1 = arith.constant 0 : i32
    return %c0_i32, %c0_i32_0 : i32, i32
  }
  func.func @transform_7(%arg0: i32) -> (i32, i32) {
    %c0_i32 = arith.constant 0 : i32
    %c0_i32_0 = arith.constant 0 : i32
    return %arg0, %c0_i32 : i32, i32
  }
}

module attributes {stable_mosaic.version = 11 : i64} {
  func.func @_mlp_kernel(%arg0: i32, %arg1: memref<16x1024xbf16, #tpu.memory_space<vmem>>, %arg2: memref<1024x512xbf16, #tpu.memory_space<vmem>>, %arg3: memref<1x512xf32, #tpu.memory_space<vmem>>, %arg4: memref<512x128xbf16, #tpu.memory_space<vmem>>, %arg5: memref<1x128xf32, #tpu.memory_space<vmem>>, %arg6: memref<128x128xbf16, #tpu.memory_space<vmem>>, %arg7: memref<1x128xf32, #tpu.memory_space<vmem>>, %arg8: memref<16x128xf32, #tpu.memory_space<vmem>>) attributes {dimension_semantics = [#tpu.dimension_semantics<parallel>], iteration_bounds = array<i64: 1>, scalar_prefetch = 0 : i64, scratch_operands = 0 : i64, tpu.core_type = #tpu.core_type<tc>, window_params = [{transform_indices = @transform_0, window_bounds = array<i64: 16, 1024>}, {pipeline_mode = #tpu.pipeline_mode<synchronous>, transform_indices = @transform_1, window_bounds = array<i64: 1024, 512>}, {pipeline_mode = #tpu.pipeline_mode<synchronous>, transform_indices = @transform_2, window_bounds = array<i64: 1, 512>}, {pipeline_mode = #tpu.pipeline_mode<synchronous>, transform_indices = @transform_3, window_bounds = array<i64: 512, 128>}, {pipeline_mode = #tpu.pipeline_mode<synchronous>, transform_indices = @transform_4, window_bounds = array<i64: 1, 128>}, {pipeline_mode = #tpu.pipeline_mode<synchronous>, transform_indices = @transform_5, window_bounds = array<i64: 128, 128>}, {pipeline_mode = #tpu.pipeline_mode<synchronous>, transform_indices = @transform_6, window_bounds = array<i64: 1, 128>}, {transform_indices = @transform_7, window_bounds = array<i64: 16, 128>}]} {
    %c0 = arith.constant 0 : index
    %c0_0 = arith.constant 0 : index
    %0 = vector.load %arg1[%c0, %c0_0] : memref<16x1024xbf16, #tpu.memory_space<vmem>>, vector<16x1024xbf16>
    %c0_1 = arith.constant 0 : index
    %c0_2 = arith.constant 0 : index
    %1 = vector.load %arg2[%c0_1, %c0_2] : memref<1024x512xbf16, #tpu.memory_space<vmem>>, vector<1024x512xbf16>
    %cst = arith.constant dense<0.000000e+00> : vector<16x512xf32>
    %2 = tpu.matmul %0, %1, %cst {dimension_numbers = #tpu.dot_dimension_numbers<[1], [0], [0], [1], [0, 0, 1, 1], [], []>} : vector<16x1024xbf16>, vector<1024x512xbf16>, vector<16x512xf32> -> vector<16x512xf32>
    %c0_3 = arith.constant 0 : index
    %c0_4 = arith.constant 0 : index
    %3 = vector.load %arg3[%c0_3, %c0_4] : memref<1x512xf32, #tpu.memory_space<vmem>>, vector<1x512xf32>
    %4 = vector.broadcast %3 : vector<1x512xf32> to vector<16x512xf32>
    %5 = arith.addf %2, %4 : vector<16x512xf32>
    %cst_5 = arith.constant 0.000000e+00 : f32
    %6 = vector.broadcast %cst_5 : f32 to vector<16x512xf32>
    %7 = arith.maximumf %5, %6 : vector<16x512xf32>
    %8 = arith.truncf %7 : vector<16x512xf32> to vector<16x512xbf16>
    %c0_6 = arith.constant 0 : index
    %c0_7 = arith.constant 0 : index
    %9 = vector.load %arg4[%c0_6, %c0_7] : memref<512x128xbf16, #tpu.memory_space<vmem>>, vector<512x128xbf16>
    %cst_8 = arith.constant dense<0.000000e+00> : vector<16x128xf32>
    %10 = tpu.matmul %8, %9, %cst_8 {dimension_numbers = #tpu.dot_dimension_numbers<[1], [0], [0], [1], [0, 0, 1, 1], [], []>} : vector<16x512xbf16>, vector<512x128xbf16>, vector<16x128xf32> -> vector<16x128xf32>
    %c0_9 = arith.constant 0 : index
    %c0_10 = arith.constant 0 : index
    %11 = vector.load %arg5[%c0_9, %c0_10] : memref<1x128xf32, #tpu.memory_space<vmem>>, vector<1x128xf32>
    %12 = vector.broadcast %11 : vector<1x128xf32> to vector<16x128xf32>
    %13 = arith.addf %10, %12 : vector<16x128xf32>
    %cst_11 = arith.constant 0.000000e+00 : f32
    %14 = vector.broadcast %cst_11 : f32 to vector<16x128xf32>
    %15 = arith.maximumf %13, %14 : vector<16x128xf32>
    %16 = arith.truncf %15 : vector<16x128xf32> to vector<16x128xbf16>
    %c0_12 = arith.constant 0 : index
    %c0_13 = arith.constant 0 : index
    %17 = vector.load %arg6[%c0_12, %c0_13] : memref<128x128xbf16, #tpu.memory_space<vmem>>, vector<128x128xbf16>
    %cst_14 = arith.constant dense<0.000000e+00> : vector<16x128xf32>
    %18 = tpu.matmul %16, %17, %cst_14 {dimension_numbers = #tpu.dot_dimension_numbers<[1], [0], [0], [1], [0, 0, 1, 1], [], []>} : vector<16x128xbf16>, vector<128x128xbf16>, vector<16x128xf32> -> vector<16x128xf32>
    %c0_15 = arith.constant 0 : index
    %c0_16 = arith.constant 0 : index
    %19 = vector.load %arg7[%c0_15, %c0_16] : memref<1x128xf32, #tpu.memory_space<vmem>>, vector<1x128xf32>
    %20 = vector.broadcast %19 : vector<1x128xf32> to vector<16x128xf32>
    %21 = arith.addf %18, %20 : vector<16x128xf32>
    %c0_17 = arith.constant 0 : index
    %c0_18 = arith.constant 0 : index
    %22 = vector.load %arg8[%c0_17, %c0_18] : memref<16x128xf32, #tpu.memory_space<vmem>>, vector<16x128xf32>
    tpu.vector_store %arg8[%c0_17, %c0_18], %21 {strides = array<i32>} : memref<16x128xf32, #tpu.memory_space<vmem>>, vector<16x128xf32>,
    return
  }
  func.func @transform_0(%arg0: i32) -> (i32, i32) {
    %c0_i32 = arith.constant 0 : i32
    %c0_i32_0 = arith.constant 0 : i32
    return %arg0, %c0_i32 : i32, i32
  }
  func.func @transform_1(%arg0: i32) -> (i32, i32) {
    %c0_i32 = arith.constant 0 : i32
    %c0_i32_0 = arith.constant 0 : i32
    %c0_i32_1 = arith.constant 0 : i32
    return %c0_i32, %c0_i32_0 : i32, i32
  }
  func.func @transform_2(%arg0: i32) -> (i32, i32) {
    %c0_i32 = arith.constant 0 : i32
    %c0_i32_0 = arith.constant 0 : i32
    %c0_i32_1 = arith.constant 0 : i32
    return %c0_i32, %c0_i32_0 : i32, i32
  }
  func.func @transform_3(%arg0: i32) -> (i32, i32) {
    %c0_i32 = arith.constant 0 : i32
    %c0_i32_0 = arith.constant 0 : i32
    %c0_i32_1 = arith.constant 0 : i32
    return %c0_i32, %c0_i32_0 : i32, i32
  }
  func.func @transform_4(%arg0: i32) -> (i32, i32) {
    %c0_i32 = arith.constant 0 : i32
    %c0_i32_0 = arith.constant 0 : i32
    %c0_i32_1 = arith.constant 0 : i32
    return %c0_i32, %c0_i32_0 : i32, i32
  }
  func.func @transform_5(%arg0: i32) -> (i32, i32) {
    %c0_i32 = arith.constant 0 : i32
    %c0_i32_0 = arith.constant 0 : i32
    %c0_i32_1 = arith.constant 0 : i32
    return %c0_i32, %c0_i32_0 : i32, i32
  }
  func.func @transform_6(%arg0: i32) -> (i32, i32) {
    %c0_i32 = arith.constant 0 : i32
    %c0_i32_0 = arith.constant 0 : i32
    %c0_i32_1 = arith.constant 0 : i32
    return %c0_i32, %c0_i32_0 : i32, i32
  }
  func.func @transform_7(%arg0: i32) -> (i32, i32) {
    %c0_i32 = arith.constant 0 : i32
    %c0_i32_0 = arith.constant 0 : i32
    return %arg0, %c0_i32 : i32, i32
  }
}

</mosaic_0001>

<llo_original>
// kernel: _forward_impl.1
$region0: #{_forward_impl.1}
  #allocation0 [shape = 'u32[]', space=smem, size = 0x4, offset = 0x4, fixed_abs, tag = 'smem constant byte address 0x4 - core index']
  #allocation1 [shape = 'u32[72,128]{1,0:T(1,128)}', space=vmem, size = 0x9000, scoped, tag = 'internal scratch']
  %s0 = inlined_call_operand.vmem [shape: bf16[16,1024], index: 0, kind: input, shape index: {}]
  %s1 = inlined_call_operand.hbm [shape: bf16[1024,512], index: 1, kind: input, shape index: {}]
  %s2 = inlined_call_operand.vmem [shape: f32[1,512], index: 2, kind: input, shape index: {}]
  %s3 = inlined_call_operand.vmem [shape: bf16[512,128], index: 3, kind: input, shape index: {}]
  %s4 = inlined_call_operand.vmem [shape: f32[1,128], index: 4, kind: input, shape index: {}]
  %s5 = inlined_call_operand.vmem [shape: bf16[128,128], index: 5, kind: input, shape index: {}]
  %s6 = inlined_call_operand.vmem [shape: f32[1,128], index: 6, kind: input, shape index: {}]
  %s7 = inlined_call_operand.vmem [shape: f32[16,128], index: 7, kind: output, shape index: {}]
  %s8 = sld [smem:[#allocation0]]
  $region42: #{_forward_impl.1} parent=0
    _
  %s10 = ssub.s32 1, %s8
  %s11 = scalar_select 0, %s10, %s8
  $region1: #{_forward_impl.1} parent=0
    #allocation2 [shape = 'u8[1048576]{0}', space=vmem, size = 0x100000, scoped, tag = 'input window, operand 1, single buffered']
    #allocation3 [shape = 's32[1]{0}', space=sflag, size = 0x4, scoped, tag = 'scoped memory for _forward_impl.1']
    %12 = vsyncpa [#allocation3], 0
    // Predicated region
    $region2: #{_forward_impl.1} parent=1 // pred_check
      _
    $region3: #{_forward_impl.1} parent=1 // pred_check_branch
      %14 = sbr.rel (0) target = $region5
    $region4: #{_forward_impl.1} parent=1 // pred_region
      _
    $region5: #{_forward_impl.1} parent=1 // pred_fallthru
      _
    // Predicated region
    $region6: #{_forward_impl.1} parent=1 // pred_check
      _
    $region7: #{_forward_impl.1} parent=1 // pred_check_branch
      %16 = sbr.rel (0) target = $region9
    $region8: #{_forward_impl.1} parent=1 // pred_region
      %18 = vsyncadd [#allocation3], 0
      %s19 = sshll.u32 %s1, 4
      %s20 = int_to_ptr.hbm [resolvable:$true] %s19
      %s21 = sshll.u32 [#allocation2], 4
      %s22 = int_to_ptr.vmem [resolvable:$true] %s21
      %27 = dma.hbm_to_vmem [thread:$0]  %s20, 32768, %s22, [#allocation3], 256, 256, 16
    $region9: #{_forward_impl.1} parent=1 // pred_fallthru
      _
    // Predicated region
    $region10: #{_forward_impl.1} parent=1 // pred_check
      _
    $region11: #{_forward_impl.1} parent=1 // pred_check_branch
      %29 = sbr.rel (0) target = $region13
    $region12: #{_forward_impl.1} parent=1 // pred_region
      _
    $region13: #{_forward_impl.1} parent=1 // pred_fallthru
      _
    // Predicated region
    $region14: #{_forward_impl.1} parent=1 // pred_check
      _
    $region15: #{_forward_impl.1} parent=1 // pred_check_branch
      %31 = sbr.rel (0) target = $region17
    $region16: #{_forward_impl.1} parent=1 // pred_region
      _
    $region17: #{_forward_impl.1} parent=1 // pred_fallthru
      _
    // Predicated region
    $region18: #{_forward_impl.1} parent=1 // pred_check
      _
    $region19: #{_forward_impl.1} parent=1 // pred_check_branch
      %33 = sbr.rel (0) target = $region21
    $region20: #{_forward_impl.1} parent=1 // pred_region
      _
    $region21: #{_forward_impl.1} parent=1 // pred_fallthru
      _
    // Predicated region
    $region22: #{_forward_impl.1} parent=1 // pred_check
      _
    $region23: #{_forward_impl.1} parent=1 // pred_check_branch
      %35 = sbr.rel (0) target = $region25
    $region24: #{_forward_impl.1} parent=1 // pred_region
      _
    $region25: #{_forward_impl.1} parent=1 // pred_fallthru
      _
    // Predicated region
    $region26: #{_forward_impl.1} parent=1 // pred_check
      _
    $region27: #{_forward_impl.1} parent=1 // pred_check_branch
      %37 = sbr.rel (0) target = $region29
    $region28: #{_forward_impl.1} parent=1 // pred_region
      _
    $region29: #{_forward_impl.1} parent=1 // pred_fallthru
      _
    // Predicated region
    $region30: #{_forward_impl.1} parent=1 // pred_check
      _
    $region31: #{_forward_impl.1} parent=1 // pred_check_branch
      %39 = sbr.rel (0) target = $region33
    $region32: #{_forward_impl.1} parent=1 // pred_region
      %41 = dma.done [#allocation3], 32768
    $region33: #{_forward_impl.1} parent=1 // pred_fallthru
      _
    %v42 = vld [vmem:[%s0] sm:$0xff]
    %v43 = vld [vmem:[%s0 + $0x8] sm:$0xff]
    %v44 = vld [vmem:[%s0 + $0x10] sm:$0xff]
    %v45 = vld [vmem:[%s0 + $0x18] sm:$0xff]
    %v46 = vld [vmem:[%s0 + $0x20] sm:$0xff]
    %v47 = vld [vmem:[%s0 + $0x28] sm:$0xff]
    %v48 = vld [vmem:[%s0 + $0x30] sm:$0xff]
    %v49 = vld [vmem:[%s0 + $0x38] sm:$0xff]
    %v50 = vld [vmem:[#allocation2] sm:$0xff]
    %v51 = vld [vmem:[#allocation2 + $0x8] sm:$0xff]
    %v52 = vld [vmem:[#allocation2 + $0x10] sm:$0xff]
    %v53 = vld [vmem:[#allocation2 + $0x18] sm:$0xff]
    %v54 = vld [vmem:[#allocation2 + $0x20] sm:$0xff]
    %v55 = vld [vmem:[#allocation2 + $0x28] sm:$0xff]
    %v56 = vld [vmem:[#allocation2 + $0x30] sm:$0xff]
    %v57 = vld [vmem:[#allocation2 + $0x38] sm:$0xff]
    %v58 = vld [vmem:[#allocation2 + $0x40] sm:$0xff]
    %v59 = vld [vmem:[#allocation2 + $0x48] sm:$0xff]
    %v60 = vld [vmem:[#allocation2 + $0x50] sm:$0xff]
    %v61 = vld [vmem:[#allocation2 + $0x58] sm:$0xff]
    %v62 = vld [vmem:[#allocation2 + $0x60] sm:$0xff]
    %v63 = vld [vmem:[#allocation2 + $0x68] sm:$0xff]
    %v64 = vld [vmem:[#allocation2 + $0x70] sm:$0xff]
    %v65 = vld [vmem:[#allocation2 + $0x78] sm:$0xff]
    %v66 = vld [vmem:[#allocation2 + $0x80] sm:$0xff]
    %v67 = vld [vmem:[#allocation2 + $0x88] sm:$0xff]
    %v68 = vld [vmem:[#allocation2 + $0x90] sm:$0xff]
    %v69 = vld [vmem:[#allocation2 + $0x98] sm:$0xff]
    %v70 = vld [vmem:[#allocation2 + $0xa0] sm:$0xff]
    %v71 = vld [vmem:[#allocation2 + $0xa8] sm:$0xff]
    %v72 = vld [vmem:[#allocation2 + $0xb0] sm:$0xff]
    %v73 = vld [vmem:[#allocation2 + $0xb8] sm:$0xff]
    %v74 = vld [vmem:[#allocation2 + $0xc0] sm:$0xff]
    %v75 = vld [vmem:[#allocation2 + $0xc8] sm:$0xff]
    %v76 = vld [vmem:[#allocation2 + $0xd0] sm:$0xff]
    %v77 = vld [vmem:[#allocation2 + $0xd8] sm:$0xff]
    %v78 = vld [vmem:[#allocation2 + $0xe0] sm:$0xff]
    %v79 = vld [vmem:[#allocation2 + $0xe8] sm:$0xff]
    %v80 = vld [vmem:[#allocation2 + $0xf0] sm:$0xff]
    %v81 = vld [vmem:[#allocation2 + $0xf8] sm:$0xff]
    %v82 = vld [vmem:[#allocation2 + $0x100] sm:$0xff]
    %v83 = vld [vmem:[#allocation2 + $0x108] sm:$0xff]
    %v84 = vld [vmem:[#allocation2 + $0x110] sm:$0xff]
    %v85 = vld [vmem:[#allocation2 + $0x118] sm:$0xff]
    %v86 = vld [vmem:[#allocation2 + $0x120] sm:$0xff]
    %v87 = vld [vmem:[#allocation2 + $0x128] sm:$0xff]
    %v88 = vld [vmem:[#allocation2 + $0x130] sm:$0xff]
    %v89 = vld [vmem:[#allocation2 + $0x138] sm:$0xff]
    %v90 = vld [vmem:[#allocation2 + $0x140] sm:$0xff]
    %v91 = vld [vmem:[#allocation2 + $0x148] sm:$0xff]
    %v92 = vld [vmem:[#allocation2 + $0x150] sm:$0xff]
    %v93 = vld [vmem:[#allocation2 + $0x158] sm:$0xff]
    %v94 = vld [vmem:[#allocation2 + $0x160] sm:$0xff]
    %v95 = vld [vmem:[#allocation2 + $0x168] sm:$0xff]
    %v96 = vld [vmem:[#allocation2 + $0x170] sm:$0xff]
    %v97 = vld [vmem:[#allocation2 + $0x178] sm:$0xff]
    %v98 = vld [vmem:[#allocation2 + $0x180] sm:$0xff]
    %v99 = vld [vmem:[#allocation2 + $0x188] sm:$0xff]
    %v100 = vld [vmem:[#allocation2 + $0x190] sm:$0xff]
    %v101 = vld [vmem:[#allocation2 + $0x198] sm:$0xff]
    %v102 = vld [vmem:[#allocation2 + $0x1a0] sm:$0xff]
    %v103 = vld [vmem:[#allocation2 + $0x1a8] sm:$0xff]
    %v104 = vld [vmem:[#allocation2 + $0x1b0] sm:$0xff]
    %v105 = vld [vmem:[#allocation2 + $0x1b8] sm:$0xff]
    %v106 = vld [vmem:[#allocation2 + $0x1c0] sm:$0xff]
    %v107 = vld [vmem:[#allocation2 + $0x1c8] sm:$0xff]
    %v108 = vld [vmem:[#allocation2 + $0x1d0] sm:$0xff]
    %v109 = vld [vmem:[#allocation2 + $0x1d8] sm:$0xff]
    %v110 = vld [vmem:[#allocation2 + $0x1e0] sm:$0xff]
    %v111 = vld [vmem:[#allocation2 + $0x1e8] sm:$0xff]
    %v112 = vld [vmem:[#allocation2 + $0x1f0] sm:$0xff]
    %v113 = vld [vmem:[#allocation2 + $0x1f8] sm:$0xff]
    %v114 = vld [vmem:[#allocation2 + $0x200] sm:$0xff]
    %v115 = vld [vmem:[#allocation2 + $0x208] sm:$0xff]
    %v116 = vld [vmem:[#allocation2 + $0x210] sm:$0xff]
    %v117 = vld [vmem:[#allocation2 + $0x218] sm:$0xff]
    %v118 = vld [vmem:[#allocation2 + $0x220] sm:$0xff]
    %v119 = vld [vmem:[#allocation2 + $0x228] sm:$0xff]
    %v120 = vld [vmem:[#allocation2 + $0x230] sm:$0xff]
    %v121 = vld [vmem:[#allocation2 + $0x238] sm:$0xff]
    %v122 = vld [vmem:[#allocation2 + $0x240] sm:$0xff]
    %v123 = vld [vmem:[#allocation2 + $0x248] sm:$0xff]
    %v124 = vld [vmem:[#allocation2 + $0x250] sm:$0xff]
    %v125 = vld [vmem:[#allocation2 + $0x258] sm:$0xff]
    %v126 = vld [vmem:[#allocation2 + $0x260] sm:$0xff]
    %v127 = vld [vmem:[#allocation2 + $0x268] sm:$0xff]
    %v128 = vld [vmem:[#allocation2 + $0x270] sm:$0xff]
    %v129 = vld [vmem:[#allocation2 + $0x278] sm:$0xff]
    %v130 = vld [vmem:[#allocation2 + $0x280] sm:$0xff]
    %v131 = vld [vmem:[#allocation2 + $0x288] sm:$0xff]
    %v132 = vld [vmem:[#allocation2 + $0x290] sm:$0xff]
    %v133 = vld [vmem:[#allocation2 + $0x298] sm:$0xff]
    %v134 = vld [vmem:[#allocation2 + $0x2a0] sm:$0xff]
    %v135 = vld [vmem:[#allocation2 + $0x2a8] sm:$0xff]
    %v136 = vld [vmem:[#allocation2 + $0x2b0] sm:$0xff]
    %v137 = vld [vmem:[#allocation2 + $0x2b8] sm:$0xff]
    %v138 = vld [vmem:[#allocation2 + $0x2c0] sm:$0xff]
    %v139 = vld [vmem:[#allocation2 + $0x2c8] sm:$0xff]
    %v140 = vld [vmem:[#allocation2 + $0x2d0] sm:$0xff]
    %v141 = vld [vmem:[#allocation2 + $0x2d8] sm:$0xff]
    %v142 = vld [vmem:[#allocation2 + $0x2e0] sm:$0xff]
    %v143 = vld [vmem:[#allocation2 + $0x2e8] sm:$0xff]
    %v144 = vld [vmem:[#allocation2 + $0x2f0] sm:$0xff]
    %v145 = vld [vmem:[#allocation2 + $0x2f8] sm:$0xff]
    %v146 = vld [vmem:[#allocation2 + $0x300] sm:$0xff]
    %v147 = vld [vmem:[#allocation2 + $0x308] sm:$0xff]
    %v148 = vld [vmem:[#allocation2 + $0x310] sm:$0xff]
    %v149 = vld [vmem:[#allocation2 + $0x318] sm:$0xff]
    %v150 = vld [vmem:[#allocation2 + $0x320] sm:$0xff]
    %v151 = vld [vmem:[#allocation2 + $0x328] sm:$0xff]
    %v152 = vld [vmem:[#allocation2 + $0x330] sm:$0xff]
    %v153 = vld [vmem:[#allocation2 + $0x338] sm:$0xff]
    %v154 = vld [vmem:[#allocation2 + $0x340] sm:$0xff]
    %v155 = vld [vmem:[#allocation2 + $0x348] sm:$0xff]
    %v156 = vld [vmem:[#allocation2 + $0x350] sm:$0xff]
    %v157 = vld [vmem:[#allocation2 + $0x358] sm:$0xff]
    %v158 = vld [vmem:[#allocation2 + $0x360] sm:$0xff]
    %v159 = vld [vmem:[#allocation2 + $0x368] sm:$0xff]
    %v160 = vld [vmem:[#allocation2 + $0x370] sm:$0xff]
    %v161 = vld [vmem:[#allocation2 + $0x378] sm:$0xff]
    %v162 = vld [vmem:[#allocation2 + $0x380] sm:$0xff]
    %v163 = vld [vmem:[#allocation2 + $0x388] sm:$0xff]
    %v164 = vld [vmem:[#allocation2 + $0x390] sm:$0xff]
    %v165 = vld [vmem:[#allocation2 + $0x398] sm:$0xff]
    %v166 = vld [vmem:[#allocation2 + $0x3a0] sm:$0xff]
    %v167 = vld [vmem:[#allocation2 + $0x3a8] sm:$0xff]
    %v168 = vld [vmem:[#allocation2 + $0x3b0] sm:$0xff]
    %v169 = vld [vmem:[#allocation2 + $0x3b8] sm:$0xff]
    %v170 = vld [vmem:[#allocation2 + $0x3c0] sm:$0xff]
    %v171 = vld [vmem:[#allocation2 + $0x3c8] sm:$0xff]
    %v172 = vld [vmem:[#allocation2 + $0x3d0] sm:$0xff]
    %v173 = vld [vmem:[#allocation2 + $0x3d8] sm:$0xff]
    %v174 = vld [vmem:[#allocation2 + $0x3e0] sm:$0xff]
    %v175 = vld [vmem:[#allocation2 + $0x3e8] sm:$0xff]
    %v176 = vld [vmem:[#allocation2 + $0x3f0] sm:$0xff]
    %v177 = vld [vmem:[#allocation2 + $0x3f8] sm:$0xff]
    %v178 = vld [vmem:[#allocation2 + $0x400] sm:$0xff]
    %v179 = vld [vmem:[#allocation2 + $0x408] sm:$0xff]
    %v180 = vld [vmem:[#allocation2 + $0x410] sm:$0xff]
    %v181 = vld [vmem:[#allocation2 + $0x418] sm:$0xff]
    %v182 = vld [vmem:[#allocation2 + $0x420] sm:$0xff]
    %v183 = vld [vmem:[#allocation2 + $0x428] sm:$0xff]
    %v184 = vld [vmem:[#allocation2 + $0x430] sm:$0xff]
    %v185 = vld [vmem:[#allocation2 + $0x438] sm:$0xff]
    %v186 = vld [vmem:[#allocation2 + $0x440] sm:$0xff]
    %v187 = vld [vmem:[#allocation2 + $0x448] sm:$0xff]
    %v188 = vld [vmem:[#allocation2 + $0x450] sm:$0xff]
    %v189 = vld [vmem:[#allocation2 + $0x458] sm:$0xff]
    %v190 = vld [vmem:[#allocation2 + $0x460] sm:$0xff]
    %v191 = vld [vmem:[#allocation2 + $0x468] sm:$0xff]
    %v192 = vld [vmem:[#allocation2 + $0x470] sm:$0xff]
    %v193 = vld [vmem:[#allocation2 + $0x478] sm:$0xff]
    %v194 = vld [vmem:[#allocation2 + $0x480] sm:$0xff]
    %v195 = vld [vmem:[#allocation2 + $0x488] sm:$0xff]
    %v196 = vld [vmem:[#allocation2 + $0x490] sm:$0xff]
    %v197 = vld [vmem:[#allocation2 + $0x498] sm:$0xff]
    %v198 = vld [vmem:[#allocation2 + $0x4a0] sm:$0xff]
    %v199 = vld [vmem:[#allocation2 + $0x4a8] sm:$0xff]
    %v200 = vld [vmem:[#allocation2 + $0x4b0] sm:$0xff]
    %v201 = vld [vmem:[#allocation2 + $0x4b8] sm:$0xff]
    %v202 = vld [vmem:[#allocation2 + $0x4c0] sm:$0xff]
    %v203 = vld [vmem:[#allocation2 + $0x4c8] sm:$0xff]
    %v204 = vld [vmem:[#allocation2 + $0x4d0] sm:$0xff]
    %v205 = vld [vmem:[#allocation2 + $0x4d8] sm:$0xff]
    %v206 = vld [vmem:[#allocation2 + $0x4e0] sm:$0xff]
    %v207 = vld [vmem:[#allocation2 + $0x4e8] sm:$0xff]
    %v208 = vld [vmem:[#allocation2 + $0x4f0] sm:$0xff]
    %v209 = vld [vmem:[#allocation2 + $0x4f8] sm:$0xff]
    %v210 = vld [vmem:[#allocation2 + $0x500] sm:$0xff]
    %v211 = vld [vmem:[#allocation2 + $0x508] sm:$0xff]
    %v212 = vld [vmem:[#allocation2 + $0x510] sm:$0xff]
    %v213 = vld [vmem:[#allocation2 + $0x518] sm:$0xff]
    %v214 = vld [vmem:[#allocation2 + $0x520] sm:$0xff]
    %v215 = vld [vmem:[#allocation2 + $0x528] sm:$0xff]
    %v216 = vld [vmem:[#allocation2 + $0x530] sm:$0xff]
    %v217 = vld [vmem:[#allocation2 + $0x538] sm:$0xff]
    %v218 = vld [vmem:[#allocation2 + $0x540] sm:$0xff]
    %v219 = vld [vmem:[#allocation2 + $0x548] sm:$0xff]
    %v220 = vld [vmem:[#allocation2 + $0x550] sm:$0xff]
    %v221 = vld [vmem:[#allocation2 + $0x558] sm:$0xff]
    %v222 = vld [vmem:[#allocation2 + $0x560] sm:$0xff]
    %v223 = vld [vmem:[#allocation2 + $0x568] sm:$0xff]
    %v224 = vld [vmem:[#allocation2 + $0x570] sm:$0xff]
    %v225 = vld [vmem:[#allocation2 + $0x578] sm:$0xff]
    %v226 = vld [vmem:[#allocation2 + $0x580] sm:$0xff]
    %v227 = vld [vmem:[#allocation2 + $0x588] sm:$0xff]
    %v228 = vld [vmem:[#allocation2 + $0x590] sm:$0xff]
    %v229 = vld [vmem:[#allocation2 + $0x598] sm:$0xff]
    %v230 = vld [vmem:[#allocation2 + $0x5a0] sm:$0xff]
    %v231 = vld [vmem:[#allocation2 + $0x5a8] sm:$0xff]
    %v232 = vld [vmem:[#allocation2 + $0x5b0] sm:$0xff]
    %v233 = vld [vmem:[#allocation2 + $0x5b8] sm:$0xff]
    %v234 = vld [vmem:[#allocation2 + $0x5c0] sm:$0xff]
    %v235 = vld [vmem:[#allocation2 + $0x5c8] sm:$0xff]
    %v236 = vld [vmem:[#allocation2 + $0x5d0] sm:$0xff]
    %v237 = vld [vmem:[#allocation2 + $0x5d8] sm:$0xff]
    %v238 = vld [vmem:[#allocation2 + $0x5e0] sm:$0xff]
    %v239 = vld [vmem:[#allocation2 + $0x5e8] sm:$0xff]
    %v240 = vld [vmem:[#allocation2 + $0x5f0] sm:$0xff]
    %v241 = vld [vmem:[#allocation2 + $0x5f8] sm:$0xff]
    %v242 = vld [vmem:[#allocation2 + $0x600] sm:$0xff]
    %v243 = vld [vmem:[#allocation2 + $0x608] sm:$0xff]
    %v244 = vld [vmem:[#allocation2 + $0x610] sm:$0xff]
    %v245 = vld [vmem:[#allocation2 + $0x618] sm:$0xff]
    %v246 = vld [vmem:[#allocation2 + $0x620] sm:$0xff]
    %v247 = vld [vmem:[#allocation2 + $0x628] sm:$0xff]
    %v248 = vld [vmem:[#allocation2 + $0x630] sm:$0xff]
    %v249 = vld [vmem:[#allocation2 + $0x638] sm:$0xff]
    %v250 = vld [vmem:[#allocation2 + $0x640] sm:$0xff]
    %v251 = vld [vmem:[#allocation2 + $0x648] sm:$0xff]
    %v252 = vld [vmem:[#allocation2 + $0x650] sm:$0xff]
    %v253 = vld [vmem:[#allocation2 + $0x658] sm:$0xff]
    %v254 = vld [vmem:[#allocation2 + $0x660] sm:$0xff]
    %v255 = vld [vmem:[#allocation2 + $0x668] sm:$0xff]
    %v256 = vld [vmem:[#allocation2 + $0x670] sm:$0xff]
    %v257 = vld [vmem:[#allocation2 + $0x678] sm:$0xff]
    %v258 = vld [vmem:[#allocation2 + $0x680] sm:$0xff]
    %v259 = vld [vmem:[#allocation2 + $0x688] sm:$0xff]
    %v260 = vld [vmem:[#allocation2 + $0x690] sm:$0xff]
    %v261 = vld [vmem:[#allocation2 + $0x698] sm:$0xff]
    %v262 = vld [vmem:[#allocation2 + $0x6a0] sm:$0xff]
    %v263 = vld [vmem:[#allocation2 + $0x6a8] sm:$0xff]
    %v264 = vld [vmem:[#allocation2 + $0x6b0] sm:$0xff]
    %v265 = vld [vmem:[#allocation2 + $0x6b8] sm:$0xff]
    %v266 = vld [vmem:[#allocation2 + $0x6c0] sm:$0xff]
    %v267 = vld [vmem:[#allocation2 + $0x6c8] sm:$0xff]
    %v268 = vld [vmem:[#allocation2 + $0x6d0] sm:$0xff]
    %v269 = vld [vmem:[#allocation2 + $0x6d8] sm:$0xff]
    %v270 = vld [vmem:[#allocation2 + $0x6e0] sm:$0xff]
    %v271 = vld [vmem:[#allocation2 + $0x6e8] sm:$0xff]
    %v272 = vld [vmem:[#allocation2 + $0x6f0] sm:$0xff]
    %v273 = vld [vmem:[#allocation2 + $0x6f8] sm:$0xff]
    %v274 = vld [vmem:[#allocation2 + $0x700] sm:$0xff]
    %v275 = vld [vmem:[#allocation2 + $0x708] sm:$0xff]
    %v276 = vld [vmem:[#allocation2 + $0x710] sm:$0xff]
    %v277 = vld [vmem:[#allocation2 + $0x718] sm:$0xff]
    %v278 = vld [vmem:[#allocation2 + $0x720] sm:$0xff]
    %v279 = vld [vmem:[#allocation2 + $0x728] sm:$0xff]
    %v280 = vld [vmem:[#allocation2 + $0x730] sm:$0xff]
    %v281 = vld [vmem:[#allocation2 + $0x738] sm:$0xff]
    %v282 = vld [vmem:[#allocation2 + $0x740] sm:$0xff]
    %v283 = vld [vmem:[#allocation2 + $0x748] sm:$0xff]
    %v284 = vld [vmem:[#allocation2 + $0x750] sm:$0xff]
    %v285 = vld [vmem:[#allocation2 + $0x758] sm:$0xff]
    %v286 = vld [vmem:[#allocation2 + $0x760] sm:$0xff]
    %v287 = vld [vmem:[#allocation2 + $0x768] sm:$0xff]
    %v288 = vld [vmem:[#allocation2 + $0x770] sm:$0xff]
    %v289 = vld [vmem:[#allocation2 + $0x778] sm:$0xff]
    %v290 = vld [vmem:[#allocation2 + $0x780] sm:$0xff]
    %v291 = vld [vmem:[#allocation2 + $0x788] sm:$0xff]
    %v292 = vld [vmem:[#allocation2 + $0x790] sm:$0xff]
    %v293 = vld [vmem:[#allocation2 + $0x798] sm:$0xff]
    %v294 = vld [vmem:[#allocation2 + $0x7a0] sm:$0xff]
    %v295 = vld [vmem:[#allocation2 + $0x7a8] sm:$0xff]
    %v296 = vld [vmem:[#allocation2 + $0x7b0] sm:$0xff]
    %v297 = vld [vmem:[#allocation2 + $0x7b8] sm:$0xff]
    %v298 = vld [vmem:[#allocation2 + $0x7c0] sm:$0xff]
    %v299 = vld [vmem:[#allocation2 + $0x7c8] sm:$0xff]
    %v300 = vld [vmem:[#allocation2 + $0x7d0] sm:$0xff]
    %v301 = vld [vmem:[#allocation2 + $0x7d8] sm:$0xff]
    %v302 = vld [vmem:[#allocation2 + $0x7e0] sm:$0xff]
    %v303 = vld [vmem:[#allocation2 + $0x7e8] sm:$0xff]
    %v304 = vld [vmem:[#allocation2 + $0x7f0] sm:$0xff]
    %v305 = vld [vmem:[#allocation2 + $0x7f8] sm:$0xff]
    %v306 = vld [vmem:[%s2] sm:$0xf]
    %v308 = vperm.slane %v306, 0
    %v309 = vperm.slane %v306, 1
    %v310 = vperm.slane %v306, 2
    %v311 = vperm.slane %v306, 3
    %v324 = vunpack.c.l.b16 %v42
    %v325 = vunpack.c.h.b16 %v42
    %v326 = vunpack.c.l.b16 %v43
    %v327 = vunpack.c.h.b16 %v43
    %v328 = vunpack.c.l.b16 %v44
    %v329 = vunpack.c.h.b16 %v44
    %v330 = vunpack.c.l.b16 %v45
    %v331 = vunpack.c.h.b16 %v45
    %v332 = vunpack.c.l.b16 %v46
    %v333 = vunpack.c.h.b16 %v46
    %v334 = vunpack.c.l.b16 %v47
    %v335 = vunpack.c.h.b16 %v47
    %v336 = vunpack.c.l.b16 %v48
    %v337 = vunpack.c.h.b16 %v48
    %v338 = vunpack.c.l.b16 %v49
    %v339 = vunpack.c.h.b16 %v49
    %v340 = vpack.c.b16 %v332, %v324
    %v341 = vpack.c.b16 %v333, %v325
    %v342 = vpack.c.b16 %v334, %v326
    %v343 = vpack.c.b16 %v335, %v327
    %v344 = vpack.c.b16 %v336, %v328
    %v345 = vpack.c.b16 %v337, %v329
    %v346 = vpack.c.b16 %v338, %v330
    %v347 = vpack.c.b16 %v339, %v331
    %v612 = vunpack.c.l.b16 %v50
    %v613 = vunpack.c.h.b16 %v50
    %v614 = vunpack.c.l.b16 %v51
    %v615 = vunpack.c.h.b16 %v51
    %v616 = vunpack.c.l.b16 %v52
    %v617 = vunpack.c.h.b16 %v52
    %v618 = vunpack.c.l.b16 %v53
    %v619 = vunpack.c.h.b16 %v53
    %v620 = vunpack.c.l.b16 %v54
    %v621 = vunpack.c.h.b16 %v54
    %v622 = vunpack.c.l.b16 %v55
    %v623 = vunpack.c.h.b16 %v55
    %v624 = vunpack.c.l.b16 %v56
    %v625 = vunpack.c.h.b16 %v56
    %v626 = vunpack.c.l.b16 %v57
    %v627 = vunpack.c.h.b16 %v57
    %v628 = vunpack.c.l.b16 %v58
    %v629 = vunpack.c.h.b16 %v58
    %v630 = vunpack.c.l.b16 %v59
    %v631 = vunpack.c.h.b16 %v59
    %v632 = vunpack.c.l.b16 %v60
    %v633 = vunpack.c.h.b16 %v60
    %v634 = vunpack.c.l.b16 %v61
    %v635 = vunpack.c.h.b16 %v61
    %v636 = vunpack.c.l.b16 %v62
    %v637 = vunpack.c.h.b16 %v62
    %v638 = vunpack.c.l.b16 %v63
    %v639 = vunpack.c.h.b16 %v63
    %v640 = vunpack.c.l.b16 %v64
    %v641 = vunpack.c.h.b16 %v64
    %v642 = vunpack.c.l.b16 %v65
    %v643 = vunpack.c.h.b16 %v65
    %v644 = vunpack.c.l.b16 %v66
    %v645 = vunpack.c.h.b16 %v66
    %v646 = vunpack.c.l.b16 %v67
    %v647 = vunpack.c.h.b16 %v67
    %v648 = vunpack.c.l.b16 %v68
    %v649 = vunpack.c.h.b16 %v68
    %v650 = vunpack.c.l.b16 %v69
    %v651 = vunpack.c.h.b16 %v69
    %v652 = vunpack.c.l.b16 %v70
    %v653 = vunpack.c.h.b16 %v70
    %v654 = vunpack.c.l.b16 %v71
    %v655 = vunpack.c.h.b16 %v71
    %v656 = vunpack.c.l.b16 %v72
    %v657 = vunpack.c.h.b16 %v72
    %v658 = vunpack.c.l.b16 %v73
    %v659 = vunpack.c.h.b16 %v73
    %v660 = vunpack.c.l.b16 %v74
    %v661 = vunpack.c.h.b16 %v74
    %v662 = vunpack.c.l.b16 %v75
    %v663 = vunpack.c.h.b16 %v75
    %v664 = vunpack.c.l.b16 %v76
    %v665 = vunpack.c.h.b16 %v76
    %v666 = vunpack.c.l.b16 %v77
    %v667 = vunpack.c.h.b16 %v77
    %v668 = vunpack.c.l.b16 %v78
    %v669 = vunpack.c.h.b16 %v78
    %v670 = vunpack.c.l.b16 %v79
    %v671 = vunpack.c.h.b16 %v79
    %v672 = vunpack.c.l.b16 %v80
    %v673 = vunpack.c.h.b16 %v80
    %v674 = vunpack.c.l.b16 %v81
    %v675 = vunpack.c.h.b16 %v81
    %v676 = vunpack.c.l.b16 %v82
    %v677 = vunpack.c.h.b16 %v82
    %v678 = vunpack.c.l.b16 %v83
    %v679 = vunpack.c.h.b16 %v83
    %v680 = vunpack.c.l.b16 %v84
    %v681 = vunpack.c.h.b16 %v84
    %v682 = vunpack.c.l.b16 %v85
    %v683 = vunpack.c.h.b16 %v85
    %v684 = vunpack.c.l.b16 %v86
    %v685 = vunpack.c.h.b16 %v86
    %v686 = vunpack.c.l.b16 %v87
    %v687 = vunpack.c.h.b16 %v87
    %v688 = vunpack.c.l.b16 %v88
    %v689 = vunpack.c.h.b16 %v88
    %v690 = vunpack.c.l.b16 %v89
    %v691 = vunpack.c.h.b16 %v89
    %v692 = vunpack.c.l.b16 %v90
    %v693 = vunpack.c.h.b16 %v90
    %v694 = vunpack.c.l.b16 %v91
    %v695 = vunpack.c.h.b16 %v91
    %v696 = vunpack.c.l.b16 %v92
    %v697 = vunpack.c.h.b16 %v92
    %v698 = vunpack.c.l.b16 %v93
    %v699 = vunpack.c.h.b16 %v93
    %v700 = vunpack.c.l.b16 %v94
    %v701 = vunpack.c.h.b16 %v94
    %v702 = vunpack.c.l.b16 %v95
    %v703 = vunpack.c.h.b16 %v95
    %v704 = vunpack.c.l.b16 %v96
    %v705 = vunpack.c.h.b16 %v96
    %v706 = vunpack.c.l.b16 %v97
    %v707 = vunpack.c.h.b16 %v97
    %v708 = vunpack.c.l.b16 %v98
    %v709 = vunpack.c.h.b16 %v98
    %v710 = vunpack.c.l.b16 %v99
    %v711 = vunpack.c.h.b16 %v99
    %v712 = vunpack.c.l.b16 %v100
    %v713 = vunpack.c.h.b16 %v100
    %v714 = vunpack.c.l.b16 %v101
    %v715 = vunpack.c.h.b16 %v101
    %v716 = vunpack.c.l.b16 %v102
    %v717 = vunpack.c.h.b16 %v102
    %v718 = vunpack.c.l.b16 %v103
    %v719 = vunpack.c.h.b16 %v103
    %v720 = vunpack.c.l.b16 %v104
    %v721 = vunpack.c.h.b16 %v104
    %v722 = vunpack.c.l.b16 %v105
    %v723 = vunpack.c.h.b16 %v105
    %v724 = vunpack.c.l.b16 %v106
    %v725 = vunpack.c.h.b16 %v106
    %v726 = vunpack.c.l.b16 %v107
    %v727 = vunpack.c.h.b16 %v107
    %v728 = vunpack.c.l.b16 %v108
    %v729 = vunpack.c.h.b16 %v108
    %v730 = vunpack.c.l.b16 %v109
    %v731 = vunpack.c.h.b16 %v109
    %v732 = vunpack.c.l.b16 %v110
    %v733 = vunpack.c.h.b16 %v110
    %v734 = vunpack.c.l.b16 %v111
    %v735 = vunpack.c.h.b16 %v111
    %v736 = vunpack.c.l.b16 %v112
    %v737 = vunpack.c.h.b16 %v112
    %v738 = vunpack.c.l.b16 %v113
    %v739 = vunpack.c.h.b16 %v113
    %v740 = vunpack.c.l.b16 %v114
    %v741 = vunpack.c.h.b16 %v114
    %v742 = vunpack.c.l.b16 %v115
    %v743 = vunpack.c.h.b16 %v115
    %v744 = vunpack.c.l.b16 %v116
    %v745 = vunpack.c.h.b16 %v116
    %v746 = vunpack.c.l.b16 %v117
    %v747 = vunpack.c.h.b16 %v117
    %v748 = vunpack.c.l.b16 %v118
    %v749 = vunpack.c.h.b16 %v118
    %v750 = vunpack.c.l.b16 %v119
    %v751 = vunpack.c.h.b16 %v119
    %v752 = vunpack.c.l.b16 %v120
    %v753 = vunpack.c.h.b16 %v120
    %v754 = vunpack.c.l.b16 %v121
    %v755 = vunpack.c.h.b16 %v121
    %v756 = vunpack.c.l.b16 %v122
    %v757 = vunpack.c.h.b16 %v122
    %v758 = vunpack.c.l.b16 %v123
    %v759 = vunpack.c.h.b16 %v123
    %v760 = vunpack.c.l.b16 %v124
    %v761 = vunpack.c.h.b16 %v124
    %v762 = vunpack.c.l.b16 %v125
    %v763 = vunpack.c.h.b16 %v125
    %v764 = vunpack.c.l.b16 %v126
    %v765 = vunpack.c.h.b16 %v126
    %v766 = vunpack.c.l.b16 %v127
    %v767 = vunpack.c.h.b16 %v127
    %v768 = vunpack.c.l.b16 %v128
    %v769 = vunpack.c.h.b16 %v128
    %v770 = vunpack.c.l.b16 %v129
    %v771 = vunpack.c.h.b16 %v129
    %v772 = vunpack.c.l.b16 %v130
    %v773 = vunpack.c.h.b16 %v130
    %v774 = vunpack.c.l.b16 %v131
    %v775 = vunpack.c.h.b16 %v131
    %v776 = vunpack.c.l.b16 %v132
    %v777 = vunpack.c.h.b16 %v132
    %v778 = vunpack.c.l.b16 %v133
    %v779 = vunpack.c.h.b16 %v133
    %v780 = vunpack.c.l.b16 %v134
    %v781 = vunpack.c.h.b16 %v134
    %v782 = vunpack.c.l.b16 %v135
    %v783 = vunpack.c.h.b16 %v135
    %v784 = vunpack.c.l.b16 %v136
    %v785 = vunpack.c.h.b16 %v136
    %v786 = vunpack.c.l.b16 %v137
    %v787 = vunpack.c.h.b16 %v137
    %v788 = vunpack.c.l.b16 %v138
    %v789 = vunpack.c.h.b16 %v138
    %v790 = vunpack.c.l.b16 %v139
    %v791 = vunpack.c.h.b16 %v139
    %v792 = vunpack.c.l.b16 %v140
    %v793 = vunpack.c.h.b16 %v140
    %v794 = vunpack.c.l.b16 %v141
    %v795 = vunpack.c.h.b16 %v141
    %v796 = vunpack.c.l.b16 %v142
    %v797 = vunpack.c.h.b16 %v142
    %v798 = vunpack.c.l.b16 %v143
    %v799 = vunpack.c.h.b16 %v143
    %v800 = vunpack.c.l.b16 %v144
    %v801 = vunpack.c.h.b16 %v144
    %v802 = vunpack.c.l.b16 %v145
    %v803 = vunpack.c.h.b16 %v145
    %v804 = vunpack.c.l.b16 %v146
    %v805 = vunpack.c.h.b16 %v146
    %v806 = vunpack.c.l.b16 %v147
    %v807 = vunpack.c.h.b16 %v147
    %v808 = vunpack.c.l.b16 %v148
    %v809 = vunpack.c.h.b16 %v148
    %v810 = vunpack.c.l.b16 %v149
    %v811 = vunpack.c.h.b16 %v149
    %v812 = vunpack.c.l.b16 %v150
    %v813 = vunpack.c.h.b16 %v150
    %v814 = vunpack.c.l.b16 %v151
    %v815 = vunpack.c.h.b16 %v151
    %v816 = vunpack.c.l.b16 %v152
    %v817 = vunpack.c.h.b16 %v152
    %v818 = vunpack.c.l.b16 %v153
    %v819 = vunpack.c.h.b16 %v153
    %v820 = vunpack.c.l.b16 %v154
    %v821 = vunpack.c.h.b16 %v154
    %v822 = vunpack.c.l.b16 %v155
    %v823 = vunpack.c.h.b16 %v155
    %v824 = vunpack.c.l.b16 %v156
    %v825 = vunpack.c.h.b16 %v156
    %v826 = vunpack.c.l.b16 %v157
    %v827 = vunpack.c.h.b16 %v157
    %v828 = vunpack.c.l.b16 %v158
    %v829 = vunpack.c.h.b16 %v158
    %v830 = vunpack.c.l.b16 %v159
    %v831 = vunpack.c.h.b16 %v159
    %v832 = vunpack.c.l.b16 %v160
    %v833 = vunpack.c.h.b16 %v160
    %v834 = vunpack.c.l.b16 %v161
    %v835 = vunpack.c.h.b16 %v161
    %v836 = vunpack.c.l.b16 %v162
    %v837 = vunpack.c.h.b16 %v162
    %v838 = vunpack.c.l.b16 %v163
    %v839 = vunpack.c.h.b16 %v163
    %v840 = vunpack.c.l.b16 %v164
    %v841 = vunpack.c.h.b16 %v164
    %v842 = vunpack.c.l.b16 %v165
    %v843 = vunpack.c.h.b16 %v165
    %v844 = vunpack.c.l.b16 %v166
    %v845 = vunpack.c.h.b16 %v166
    %v846 = vunpack.c.l.b16 %v167
    %v847 = vunpack.c.h.b16 %v167
    %v848 = vunpack.c.l.b16 %v168
    %v849 = vunpack.c.h.b16 %v168
    %v850 = vunpack.c.l.b16 %v169
    %v851 = vunpack.c.h.b16 %v169
    %v852 = vunpack.c.l.b16 %v170
    %v853 = vunpack.c.h.b16 %v170
    %v854 = vunpack.c.l.b16 %v171
    %v855 = vunpack.c.h.b16 %v171
    %v856 = vunpack.c.l.b16 %v172
    %v857 = vunpack.c.h.b16 %v172
    %v858 = vunpack.c.l.b16 %v173
    %v859 = vunpack.c.h.b16 %v173
    %v860 = vunpack.c.l.b16 %v174
    %v861 = vunpack.c.h.b16 %v174
    %v862 = vunpack.c.l.b16 %v175
    %v863 = vunpack.c.h.b16 %v175
    %v864 = vunpack.c.l.b16 %v176
    %v865 = vunpack.c.h.b16 %v176
    %v866 = vunpack.c.l.b16 %v177
    %v867 = vunpack.c.h.b16 %v177
    %v868 = vunpack.c.l.b16 %v178
    %v869 = vunpack.c.h.b16 %v178
    %v870 = vunpack.c.l.b16 %v179
    %v871 = vunpack.c.h.b16 %v179
    %v872 = vunpack.c.l.b16 %v180
    %v873 = vunpack.c.h.b16 %v180
    %v874 = vunpack.c.l.b16 %v181
    %v875 = vunpack.c.h.b16 %v181
    %v876 = vunpack.c.l.b16 %v182
    %v877 = vunpack.c.h.b16 %v182
    %v878 = vunpack.c.l.b16 %v183
    %v879 = vunpack.c.h.b16 %v183
    %v880 = vunpack.c.l.b16 %v184
    %v881 = vunpack.c.h.b16 %v184
    %v882 = vunpack.c.l.b16 %v185
    %v883 = vunpack.c.h.b16 %v185
    %v884 = vunpack.c.l.b16 %v186
    %v885 = vunpack.c.h.b16 %v186
    %v886 = vunpack.c.l.b16 %v187
    %v887 = vunpack.c.h.b16 %v187
    %v888 = vunpack.c.l.b16 %v188
    %v889 = vunpack.c.h.b16 %v188
    %v890 = vunpack.c.l.b16 %v189
    %v891 = vunpack.c.h.b16 %v189
    %v892 = vunpack.c.l.b16 %v190
    %v893 = vunpack.c.h.b16 %v190
    %v894 = vunpack.c.l.b16 %v191
    %v895 = vunpack.c.h.b16 %v191
    %v896 = vunpack.c.l.b16 %v192
    %v897 = vunpack.c.h.b16 %v192
    %v898 = vunpack.c.l.b16 %v193
    %v899 = vunpack.c.h.b16 %v193
    %v900 = vunpack.c.l.b16 %v194
    %v901 = vunpack.c.h.b16 %v194
    %v902 = vunpack.c.l.b16 %v195
    %v903 = vunpack.c.h.b16 %v195
    %v904 = vunpack.c.l.b16 %v196
    %v905 = vunpack.c.h.b16 %v196
    %v906 = vunpack.c.l.b16 %v197
    %v907 = vunpack.c.h.b16 %v197
    %v908 = vunpack.c.l.b16 %v198
    %v909 = vunpack.c.h.b16 %v198
    %v910 = vunpack.c.l.b16 %v199
    %v911 = vunpack.c.h.b16 %v199
    %v912 = vunpack.c.l.b16 %v200
    %v913 = vunpack.c.h.b16 %v200
    %v914 = vunpack.c.l.b16 %v201
    %v915 = vunpack.c.h.b16 %v201
    %v916 = vunpack.c.l.b16 %v202
    %v917 = vunpack.c.h.b16 %v202
    %v918 = vunpack.c.l.b16 %v203
    %v919 = vunpack.c.h.b16 %v203
    %v920 = vunpack.c.l.b16 %v204
    %v921 = vunpack.c.h.b16 %v204
    %v922 = vunpack.c.l.b16 %v205
    %v923 = vunpack.c.h.b16 %v205
    %v924 = vunpack.c.l.b16 %v206
    %v925 = vunpack.c.h.b16 %v206
    %v926 = vunpack.c.l.b16 %v207
    %v927 = vunpack.c.h.b16 %v207
    %v928 = vunpack.c.l.b16 %v208
    %v929 = vunpack.c.h.b16 %v208
    %v930 = vunpack.c.l.b16 %v209
    %v931 = vunpack.c.h.b16 %v209
    %v932 = vunpack.c.l.b16 %v210
    %v933 = vunpack.c.h.b16 %v210
    %v934 = vunpack.c.l.b16 %v211
    %v935 = vunpack.c.h.b16 %v211
    %v936 = vunpack.c.l.b16 %v212
    %v937 = vunpack.c.h.b16 %v212
    %v938 = vunpack.c.l.b16 %v213
    %v939 = vunpack.c.h.b16 %v213
    %v940 = vunpack.c.l.b16 %v214
    %v941 = vunpack.c.h.b16 %v214
    %v942 = vunpack.c.l.b16 %v215
    %v943 = vunpack.c.h.b16 %v215
    %v944 = vunpack.c.l.b16 %v216
    %v945 = vunpack.c.h.b16 %v216
    %v946 = vunpack.c.l.b16 %v217
    %v947 = vunpack.c.h.b16 %v217
    %v948 = vunpack.c.l.b16 %v218
    %v949 = vunpack.c.h.b16 %v218
    %v950 = vunpack.c.l.b16 %v219
    %v951 = vunpack.c.h.b16 %v219
    %v952 = vunpack.c.l.b16 %v220
    %v953 = vunpack.c.h.b16 %v220
    %v954 = vunpack.c.l.b16 %v221
    %v955 = vunpack.c.h.b16 %v221
    %v956 = vunpack.c.l.b16 %v222
    %v957 = vunpack.c.h.b16 %v222
    %v958 = vunpack.c.l.b16 %v223
    %v959 = vunpack.c.h.b16 %v223
    %v960 = vunpack.c.l.b16 %v224
    %v961 = vunpack.c.h.b16 %v224
    %v962 = vunpack.c.l.b16 %v225
    %v963 = vunpack.c.h.b16 %v225
    %v964 = vunpack.c.l.b16 %v226
    %v965 = vunpack.c.h.b16 %v226
    %v966 = vunpack.c.l.b16 %v227
    %v967 = vunpack.c.h.b16 %v227
    %v968 = vunpack.c.l.b16 %v228
    %v969 = vunpack.c.h.b16 %v228
    %v970 = vunpack.c.l.b16 %v229
    %v971 = vunpack.c.h.b16 %v229
    %v972 = vunpack.c.l.b16 %v230
    %v973 = vunpack.c.h.b16 %v230
    %v974 = vunpack.c.l.b16 %v231
    %v975 = vunpack.c.h.b16 %v231
    %v976 = vunpack.c.l.b16 %v232
    %v977 = vunpack.c.h.b16 %v232
    %v978 = vunpack.c.l.b16 %v233
    %v979 = vunpack.c.h.b16 %v233
    %v980 = vunpack.c.l.b16 %v234
    %v981 = vunpack.c.h.b16 %v234
    %v982 = vunpack.c.l.b16 %v235
    %v983 = vunpack.c.h.b16 %v235
    %v984 = vunpack.c.l.b16 %v236
    %v985 = vunpack.c.h.b16 %v236
    %v986 = vunpack.c.l.b16 %v237
    %v987 = vunpack.c.h.b16 %v237
    %v988 = vunpack.c.l.b16 %v238
    %v989 = vunpack.c.h.b16 %v238
    %v990 = vunpack.c.l.b16 %v239
    %v991 = vunpack.c.h.b16 %v239
    %v992 = vunpack.c.l.b16 %v240
    %v993 = vunpack.c.h.b16 %v240
    %v994 = vunpack.c.l.b16 %v241
    %v995 = vunpack.c.h.b16 %v241
    %v996 = vunpack.c.l.b16 %v242
    %v997 = vunpack.c.h.b16 %v242
    %v998 = vunpack.c.l.b16 %v243
    %v999 = vunpack.c.h.b16 %v243
    %v1000 = vunpack.c.l.b16 %v244
    %v1001 = vunpack.c.h.b16 %v244
    %v1002 = vunpack.c.l.b16 %v245
    %v1003 = vunpack.c.h.b16 %v245
    %v1004 = vunpack.c.l.b16 %v246
    %v1005 = vunpack.c.h.b16 %v246
    %v1006 = vunpack.c.l.b16 %v247
    %v1007 = vunpack.c.h.b16 %v247
    %v1008 = vunpack.c.l.b16 %v248
    %v1009 = vunpack.c.h.b16 %v248
    %v1010 = vunpack.c.l.b16 %v249
    %v1011 = vunpack.c.h.b16 %v249
    %v1012 = vunpack.c.l.b16 %v250
    %v1013 = vunpack.c.h.b16 %v250
    %v1014 = vunpack.c.l.b16 %v251
    %v1015 = vunpack.c.h.b16 %v251
    %v1016 = vunpack.c.l.b16 %v252
    %v1017 = vunpack.c.h.b16 %v252
    %v1018 = vunpack.c.l.b16 %v253
    %v1019 = vunpack.c.h.b16 %v253
    %v1020 = vunpack.c.l.b16 %v254
    %v1021 = vunpack.c.h.b16 %v254
    %v1022 = vunpack.c.l.b16 %v255
    %v1023 = vunpack.c.h.b16 %v255
    %v1024 = vunpack.c.l.b16 %v256
    %v1025 = vunpack.c.h.b16 %v256
    %v1026 = vunpack.c.l.b16 %v257
    %v1027 = vunpack.c.h.b16 %v257
    %v1028 = vunpack.c.l.b16 %v258
    %v1029 = vunpack.c.h.b16 %v258
    %v1030 = vunpack.c.l.b16 %v259
    %v1031 = vunpack.c.h.b16 %v259
    %v1032 = vunpack.c.l.b16 %v260
    %v1033 = vunpack.c.h.b16 %v260
    %v1034 = vunpack.c.l.b16 %v261
    %v1035 = vunpack.c.h.b16 %v261
    %v1036 = vunpack.c.l.b16 %v262
    %v1037 = vunpack.c.h.b16 %v262
    %v1038 = vunpack.c.l.b16 %v263
    %v1039 = vunpack.c.h.b16 %v263
    %v1040 = vunpack.c.l.b16 %v264
    %v1041 = vunpack.c.h.b16 %v264
    %v1042 = vunpack.c.l.b16 %v265
    %v1043 = vunpack.c.h.b16 %v265
    %v1044 = vunpack.c.l.b16 %v266
    %v1045 = vunpack.c.h.b16 %v266
    %v1046 = vunpack.c.l.b16 %v267
    %v1047 = vunpack.c.h.b16 %v267
    %v1048 = vunpack.c.l.b16 %v268
    %v1049 = vunpack.c.h.b16 %v268
    %v1050 = vunpack.c.l.b16 %v269
    %v1051 = vunpack.c.h.b16 %v269
    %v1052 = vunpack.c.l.b16 %v270
    %v1053 = vunpack.c.h.b16 %v270
    %v1054 = vunpack.c.l.b16 %v271
    %v1055 = vunpack.c.h.b16 %v271
    %v1056 = vunpack.c.l.b16 %v272
    %v1057 = vunpack.c.h.b16 %v272
    %v1058 = vunpack.c.l.b16 %v273
    %v1059 = vunpack.c.h.b16 %v273
    %v1060 = vunpack.c.l.b16 %v274
    %v1061 = vunpack.c.h.b16 %v274
    %v1062 = vunpack.c.l.b16 %v275
    %v1063 = vunpack.c.h.b16 %v275
    %v1064 = vunpack.c.l.b16 %v276
    %v1065 = vunpack.c.h.b16 %v276
    %v1066 = vunpack.c.l.b16 %v277
    %v1067 = vunpack.c.h.b16 %v277
    %v1068 = vunpack.c.l.b16 %v278
    %v1069 = vunpack.c.h.b16 %v278
    %v1070 = vunpack.c.l.b16 %v279
    %v1071 = vunpack.c.h.b16 %v279
    %v1072 = vunpack.c.l.b16 %v280
    %v1073 = vunpack.c.h.b16 %v280
    %v1074 = vunpack.c.l.b16 %v281
    %v1075 = vunpack.c.h.b16 %v281
    %v1076 = vunpack.c.l.b16 %v282
    %v1077 = vunpack.c.h.b16 %v282
    %v1078 = vunpack.c.l.b16 %v283
    %v1079 = vunpack.c.h.b16 %v283
    %v1080 = vunpack.c.l.b16 %v284
    %v1081 = vunpack.c.h.b16 %v284
    %v1082 = vunpack.c.l.b16 %v285
    %v1083 = vunpack.c.h.b16 %v285
    %v1084 = vunpack.c.l.b16 %v286
    %v1085 = vunpack.c.h.b16 %v286
    %v1086 = vunpack.c.l.b16 %v287
    %v1087 = vunpack.c.h.b16 %v287
    %v1088 = vunpack.c.l.b16 %v288
    %v1089 = vunpack.c.h.b16 %v288
    %v1090 = vunpack.c.l.b16 %v289
    %v1091 = vunpack.c.h.b16 %v289
    %v1092 = vunpack.c.l.b16 %v290
    %v1093 = vunpack.c.h.b16 %v290
    %v1094 = vunpack.c.l.b16 %v291
    %v1095 = vunpack.c.h.b16 %v291
    %v1096 = vunpack.c.l.b16 %v292
    %v1097 = vunpack.c.h.b16 %v292
    %v1098 = vunpack.c.l.b16 %v293
    %v1099 = vunpack.c.h.b16 %v293
    %v1100 = vunpack.c.l.b16 %v294
    %v1101 = vunpack.c.h.b16 %v294
    %v1102 = vunpack.c.l.b16 %v295
    %v1103 = vunpack.c.h.b16 %v295
    %v1104 = vunpack.c.l.b16 %v296
    %v1105 = vunpack.c.h.b16 %v296
    %v1106 = vunpack.c.l.b16 %v297
    %v1107 = vunpack.c.h.b16 %v297
    %v1108 = vunpack.c.l.b16 %v298
    %v1109 = vunpack.c.h.b16 %v298
    %v1110 = vunpack.c.l.b16 %v299
    %v1111 = vunpack.c.h.b16 %v299
    %v1112 = vunpack.c.l.b16 %v300
    %v1113 = vunpack.c.h.b16 %v300
    %v1114 = vunpack.c.l.b16 %v301
    %v1115 = vunpack.c.h.b16 %v301
    %v1116 = vunpack.c.l.b16 %v302
    %v1117 = vunpack.c.h.b16 %v302
    %v1118 = vunpack.c.l.b16 %v303
    %v1119 = vunpack.c.h.b16 %v303
    %v1120 = vunpack.c.l.b16 %v304
    %v1121 = vunpack.c.h.b16 %v304
    %v1122 = vunpack.c.l.b16 %v305
    %v1123 = vunpack.c.h.b16 %v305
    %v1124 = vpack.c.b16 %v616, %v612
    %v1125 = vpack.c.b16 %v617, %v613
    %v1126 = vpack.c.b16 %v618, %v614
    %v1127 = vpack.c.b16 %v619, %v615
    %v1128 = vpack.c.b16 %v624, %v620
    %v1129 = vpack.c.b16 %v625, %v621
    %v1130 = vpack.c.b16 %v626, %v622
    %v1131 = vpack.c.b16 %v627, %v623
    %v1132 = vpack.c.b16 %v632, %v628
    %v1133 = vpack.c.b16 %v633, %v629
    %v1134 = vpack.c.b16 %v634, %v630
    %v1135 = vpack.c.b16 %v635, %v631
    %v1136 = vpack.c.b16 %v640, %v636
    %v1137 = vpack.c.b16 %v641, %v637
    %v1138 = vpack.c.b16 %v642, %v638
    %v1139 = vpack.c.b16 %v643, %v639
    %v1140 = vpack.c.b16 %v648, %v644
    %v1141 = vpack.c.b16 %v649, %v645
    %v1142 = vpack.c.b16 %v650, %v646
    %v1143 = vpack.c.b16 %v651, %v647
    %v1144 = vpack.c.b16 %v656, %v652
    %v1145 = vpack.c.b16 %v657, %v653
    %v1146 = vpack.c.b16 %v658, %v654
    %v1147 = vpack.c.b16 %v659, %v655
    %v1148 = vpack.c.b16 %v664, %v660
    %v1149 = vpack.c.b16 %v665, %v661
    %v1150 = vpack.c.b16 %v666, %v662
    %v1151 = vpack.c.b16 %v667, %v663
    %v1152 = vpack.c.b16 %v672, %v668
    %v1153 = vpack.c.b16 %v673, %v669
    %v1154 = vpack.c.b16 %v674, %v670
    %v1155 = vpack.c.b16 %v675, %v671
    %v1156 = vpack.c.b16 %v680, %v676
    %v1157 = vpack.c.b16 %v681, %v677
    %v1158 = vpack.c.b16 %v682, %v678
    %v1159 = vpack.c.b16 %v683, %v679
    %v1160 = vpack.c.b16 %v688, %v684
    %v1161 = vpack.c.b16 %v689, %v685
    %v1162 = vpack.c.b16 %v690, %v686
    %v1163 = vpack.c.b16 %v691, %v687
    %v1164 = vpack.c.b16 %v696, %v692
    %v1165 = vpack.c.b16 %v697, %v693
    %v1166 = vpack.c.b16 %v698, %v694
    %v1167 = vpack.c.b16 %v699, %v695
    %v1168 = vpack.c.b16 %v704, %v700
    %v1169 = vpack.c.b16 %v705, %v701
    %v1170 = vpack.c.b16 %v706, %v702
    %v1171 = vpack.c.b16 %v707, %v703
    %v1172 = vpack.c.b16 %v712, %v708
    %v1173 = vpack.c.b16 %v713, %v709
    %v1174 = vpack.c.b16 %v714, %v710
    %v1175 = vpack.c.b16 %v715, %v711
    %v1176 = vpack.c.b16 %v720, %v716
    %v1177 = vpack.c.b16 %v721, %v717
    %v1178 = vpack.c.b16 %v722, %v718
    %v1179 = vpack.c.b16 %v723, %v719
    %v1180 = vpack.c.b16 %v728, %v724
    %v1181 = vpack.c.b16 %v729, %v725
    %v1182 = vpack.c.b16 %v730, %v726
    %v1183 = vpack.c.b16 %v731, %v727
    %v1184 = vpack.c.b16 %v736, %v732
    %v1185 = vpack.c.b16 %v737, %v733
    %v1186 = vpack.c.b16 %v738, %v734
    %v1187 = vpack.c.b16 %v739, %v735
    %v1188 = vpack.c.b16 %v744, %v740
    %v1189 = vpack.c.b16 %v745, %v741
    %v1190 = vpack.c.b16 %v746, %v742
    %v1191 = vpack.c.b16 %v747, %v743
    %v1192 = vpack.c.b16 %v752, %v748
    %v1193 = vpack.c.b16 %v753, %v749
    %v1194 = vpack.c.b16 %v754, %v750
    %v1195 = vpack.c.b16 %v755, %v751
    %v1196 = vpack.c.b16 %v760, %v756
    %v1197 = vpack.c.b16 %v761, %v757
    %v1198 = vpack.c.b16 %v762, %v758
    %v1199 = vpack.c.b16 %v763, %v759
    %v1200 = vpack.c.b16 %v768, %v764
    %v1201 = vpack.c.b16 %v769, %v765
    %v1202 = vpack.c.b16 %v770, %v766
    %v1203 = vpack.c.b16 %v771, %v767
    %v1204 = vpack.c.b16 %v776, %v772
    %v1205 = vpack.c.b16 %v777, %v773
    %v1206 = vpack.c.b16 %v778, %v774
    %v1207 = vpack.c.b16 %v779, %v775
    %v1208 = vpack.c.b16 %v784, %v780
    %v1209 = vpack.c.b16 %v785, %v781
    %v1210 = vpack.c.b16 %v786, %v782
    %v1211 = vpack.c.b16 %v787, %v783
    %v1212 = vpack.c.b16 %v792, %v788
    %v1213 = vpack.c.b16 %v793, %v789
    %v1214 = vpack.c.b16 %v794, %v790
    %v1215 = vpack.c.b16 %v795, %v791
    %v1216 = vpack.c.b16 %v800, %v796
    %v1217 = vpack.c.b16 %v801, %v797
    %v1218 = vpack.c.b16 %v802, %v798
    %v1219 = vpack.c.b16 %v803, %v799
    %v1220 = vpack.c.b16 %v808, %v804
    %v1221 = vpack.c.b16 %v809, %v805
    %v1222 = vpack.c.b16 %v810, %v806
    %v1223 = vpack.c.b16 %v811, %v807
    %v1224 = vpack.c.b16 %v816, %v812
    %v1225 = vpack.c.b16 %v817, %v813
    %v1226 = vpack.c.b16 %v818, %v814
    %v1227 = vpack.c.b16 %v819, %v815
    %v1228 = vpack.c.b16 %v824, %v820
    %v1229 = vpack.c.b16 %v825, %v821
    %v1230 = vpack.c.b16 %v826, %v822
    %v1231 = vpack.c.b16 %v827, %v823
    %v1232 = vpack.c.b16 %v832, %v828
    %v1233 = vpack.c.b16 %v833, %v829
    %v1234 = vpack.c.b16 %v834, %v830
    %v1235 = vpack.c.b16 %v835, %v831
    %v1236 = vpack.c.b16 %v840, %v836
    %v1237 = vpack.c.b16 %v841, %v837
    %v1238 = vpack.c.b16 %v842, %v838
    %v1239 = vpack.c.b16 %v843, %v839
    %v1240 = vpack.c.b16 %v848, %v844
    %v1241 = vpack.c.b16 %v849, %v845
    %v1242 = vpack.c.b16 %v850, %v846
    %v1243 = vpack.c.b16 %v851, %v847
    %v1244 = vpack.c.b16 %v856, %v852
    %v1245 = vpack.c.b16 %v857, %v853
    %v1246 = vpack.c.b16 %v858, %v854
    %v1247 = vpack.c.b16 %v859, %v855
    %v1248 = vpack.c.b16 %v864, %v860
    %v1249 = vpack.c.b16 %v865, %v861
    %v1250 = vpack.c.b16 %v866, %v862
    %v1251 = vpack.c.b16 %v867, %v863
    %v1252 = vpack.c.b16 %v872, %v868
    %v1253 = vpack.c.b16 %v873, %v869
    %v1254 = vpack.c.b16 %v874, %v870
    %v1255 = vpack.c.b16 %v875, %v871
    %v1256 = vpack.c.b16 %v880, %v876
    %v1257 = vpack.c.b16 %v881, %v877
    %v1258 = vpack.c.b16 %v882, %v878
    %v1259 = vpack.c.b16 %v883, %v879
    %v1260 = vpack.c.b16 %v888, %v884
    %v1261 = vpack.c.b16 %v889, %v885
    %v1262 = vpack.c.b16 %v890, %v886
    %v1263 = vpack.c.b16 %v891, %v887
    %v1264 = vpack.c.b16 %v896, %v892
    %v1265 = vpack.c.b16 %v897, %v893
    %v1266 = vpack.c.b16 %v898, %v894
    %v1267 = vpack.c.b16 %v899, %v895
    %v1268 = vpack.c.b16 %v904, %v900
    %v1269 = vpack.c.b16 %v905, %v901
    %v1270 = vpack.c.b16 %v906, %v902
    %v1271 = vpack.c.b16 %v907, %v903
    %v1272 = vpack.c.b16 %v912, %v908
    %v1273 = vpack.c.b16 %v913, %v909
    %v1274 = vpack.c.b16 %v914, %v910
    %v1275 = vpack.c.b16 %v915, %v911
    %v1276 = vpack.c.b16 %v920, %v916
    %v1277 = vpack.c.b16 %v921, %v917
    %v1278 = vpack.c.b16 %v922, %v918
    %v1279 = vpack.c.b16 %v923, %v919
    %v1280 = vpack.c.b16 %v928, %v924
    %v1281 = vpack.c.b16 %v929, %v925
    %v1282 = vpack.c.b16 %v930, %v926
    %v1283 = vpack.c.b16 %v931, %v927
    %v1284 = vpack.c.b16 %v936, %v932
    %v1285 = vpack.c.b16 %v937, %v933
    %v1286 = vpack.c.b16 %v938, %v934
    %v1287 = vpack.c.b16 %v939, %v935
    %v1288 = vpack.c.b16 %v944, %v940
    %v1289 = vpack.c.b16 %v945, %v941
    %v1290 = vpack.c.b16 %v946, %v942
    %v1291 = vpack.c.b16 %v947, %v943
    %v1292 = vpack.c.b16 %v952, %v948
    %v1293 = vpack.c.b16 %v953, %v949
    %v1294 = vpack.c.b16 %v954, %v950
    %v1295 = vpack.c.b16 %v955, %v951
    %v1296 = vpack.c.b16 %v960, %v956
    %v1297 = vpack.c.b16 %v961, %v957
    %v1298 = vpack.c.b16 %v962, %v958
    %v1299 = vpack.c.b16 %v963, %v959
    %v1300 = vpack.c.b16 %v968, %v964
    %v1301 = vpack.c.b16 %v969, %v965
    %v1302 = vpack.c.b16 %v970, %v966
    %v1303 = vpack.c.b16 %v971, %v967
    %v1304 = vpack.c.b16 %v976, %v972
    %v1305 = vpack.c.b16 %v977, %v973
    %v1306 = vpack.c.b16 %v978, %v974
    %v1307 = vpack.c.b16 %v979, %v975
    %v1308 = vpack.c.b16 %v984, %v980
    %v1309 = vpack.c.b16 %v985, %v981
    %v1310 = vpack.c.b16 %v986, %v982
    %v1311 = vpack.c.b16 %v987, %v983
    %v1312 = vpack.c.b16 %v992, %v988
    %v1313 = vpack.c.b16 %v993, %v989
    %v1314 = vpack.c.b16 %v994, %v990
    %v1315 = vpack.c.b16 %v995, %v991
    %v1316 = vpack.c.b16 %v1000, %v996
    %v1317 = vpack.c.b16 %v1001, %v997
    %v1318 = vpack.c.b16 %v1002, %v998
    %v1319 = vpack.c.b16 %v1003, %v999
    %v1320 = vpack.c.b16 %v1008, %v1004
    %v1321 = vpack.c.b16 %v1009, %v1005
    %v1322 = vpack.c.b16 %v1010, %v1006
    %v1323 = vpack.c.b16 %v1011, %v1007
    %v1324 = vpack.c.b16 %v1016, %v1012
    %v1325 = vpack.c.b16 %v1017, %v1013
    %v1326 = vpack.c.b16 %v1018, %v1014
    %v1327 = vpack.c.b16 %v1019, %v1015
    %v1328 = vpack.c.b16 %v1024, %v1020
    %v1329 = vpack.c.b16 %v1025, %v1021
    %v1330 = vpack.c.b16 %v1026, %v1022
    %v1331 = vpack.c.b16 %v1027, %v1023
    %v1332 = vpack.c.b16 %v1032, %v1028
    %v1333 = vpack.c.b16 %v1033, %v1029
    %v1334 = vpack.c.b16 %v1034, %v1030
    %v1335 = vpack.c.b16 %v1035, %v1031
    %v1336 = vpack.c.b16 %v1040, %v1036
    %v1337 = vpack.c.b16 %v1041, %v1037
    %v1338 = vpack.c.b16 %v1042, %v1038
    %v1339 = vpack.c.b16 %v1043, %v1039
    %v1340 = vpack.c.b16 %v1048, %v1044
    %v1341 = vpack.c.b16 %v1049, %v1045
    %v1342 = vpack.c.b16 %v1050, %v1046
    %v1343 = vpack.c.b16 %v1051, %v1047
    %v1344 = vpack.c.b16 %v1056, %v1052
    %v1345 = vpack.c.b16 %v1057, %v1053
    %v1346 = vpack.c.b16 %v1058, %v1054
    %v1347 = vpack.c.b16 %v1059, %v1055
    %v1348 = vpack.c.b16 %v1064, %v1060
    %v1349 = vpack.c.b16 %v1065, %v1061
    %v1350 = vpack.c.b16 %v1066, %v1062
    %v1351 = vpack.c.b16 %v1067, %v1063
    %v1352 = vpack.c.b16 %v1072, %v1068
    %v1353 = vpack.c.b16 %v1073, %v1069
    %v1354 = vpack.c.b16 %v1074, %v1070
    %v1355 = vpack.c.b16 %v1075, %v1071
    %v1356 = vpack.c.b16 %v1080, %v1076
    %v1357 = vpack.c.b16 %v1081, %v1077
    %v1358 = vpack.c.b16 %v1082, %v1078
    %v1359 = vpack.c.b16 %v1083, %v1079
    %v1360 = vpack.c.b16 %v1088, %v1084
    %v1361 = vpack.c.b16 %v1089, %v1085
    %v1362 = vpack.c.b16 %v1090, %v1086
    %v1363 = vpack.c.b16 %v1091, %v1087
    %v1364 = vpack.c.b16 %v1096, %v1092
    %v1365 = vpack.c.b16 %v1097, %v1093
    %v1366 = vpack.c.b16 %v1098, %v1094
    %v1367 = vpack.c.b16 %v1099, %v1095
    %v1368 = vpack.c.b16 %v1104, %v1100
    %v1369 = vpack.c.b16 %v1105, %v1101
    %v1370 = vpack.c.b16 %v1106, %v1102
    %v1371 = vpack.c.b16 %v1107, %v1103
    %v1372 = vpack.c.b16 %v1112, %v1108
    %v1373 = vpack.c.b16 %v1113, %v1109
    %v1374 = vpack.c.b16 %v1114, %v1110
    %v1375 = vpack.c.b16 %v1115, %v1111
    %v1376 = vpack.c.b16 %v1120, %v1116
    %v1377 = vpack.c.b16 %v1121, %v1117
    %v1378 = vpack.c.b16 %v1122, %v1118
    %v1379 = vpack.c.b16 %v1123, %v1119
    %1636 = vmatpush.bf16.msra.mxu0 %v1152
    %1637 = vmatpush.bf16.msra.mxu0 %v1148
    %1638 = vmatpush.bf16.msra.mxu0 %v1144
    %1639 = vmatpush.bf16.msra.mxu0 %v1140
    %1640 = vmatpush.bf16.msra.mxu0 %v1136
    %1641 = vmatpush.bf16.msra.mxu0 %v1132
    %1642 = vmatpush.bf16.msra.mxu0 %v1128
    %1643 = vmatpush.bf16.msra.mxu0 %v1124
    %1644 = vmatmul.bf16.gmra.mxu0 %v340
    %v1645 = vpop.f32.mrf.mxu0
    %v1646 = vadd.f32 %v308, %v1645
    %v1647 = vpop.f32.mrf.mxu0
    %v1648 = vadd.f32 %v308, %v1647
    %1649 = vdwg.mxu0
    %1650 = vmatpush.bf16.msra.mxu0 %v1184
    %1651 = vmatpush.bf16.msra.mxu0 %v1180
    %1652 = vmatpush.bf16.msra.mxu0 %v1176
    %1653 = vmatpush.bf16.msra.mxu0 %v1172
    %1654 = vmatpush.bf16.msra.mxu0 %v1168
    %1655 = vmatpush.bf16.msra.mxu0 %v1164
    %1656 = vmatpush.bf16.msra.mxu0 %v1160
    %1657 = vmatpush.bf16.msra.mxu0 %v1156
    %1658 = vmatmul.bf16.gmra.mxu0 %v341
    %v1659 = vpop.f32.mrf.mxu0
    %v1660 = vadd.f32 %v1646, %v1659
    %v1661 = vpop.f32.mrf.mxu0
    %v1662 = vadd.f32 %v1648, %v1661
    %1663 = vdwg.mxu0
    %1664 = vmatpush.bf16.msra.mxu0 %v1216
    %1665 = vmatpush.bf16.msra.mxu0 %v1212
    %1666 = vmatpush.bf16.msra.mxu0 %v1208
    %1667 = vmatpush.bf16.msra.mxu0 %v1204
    %1668 = vmatpush.bf16.msra.mxu0 %v1200
    %1669 = vmatpush.bf16.msra.mxu0 %v1196
    %1670 = vmatpush.bf16.msra.mxu0 %v1192
    %1671 = vmatpush.bf16.msra.mxu0 %v1188
    %1672 = vmatmul.bf16.gmra.mxu0 %v342
    %v1673 = vpop.f32.mrf.mxu0
    %v1674 = vadd.f32 %v1660, %v1673
    %v1675 = vpop.f32.mrf.mxu0
    %v1676 = vadd.f32 %v1662, %v1675
    %1677 = vdwg.mxu0
    %1678 = vmatpush.bf16.msra.mxu0 %v1248
    %1679 = vmatpush.bf16.msra.mxu0 %v1244
    %1680 = vmatpush.bf16.msra.mxu0 %v1240
    %1681 = vmatpush.bf16.msra.mxu0 %v1236
    %1682 = vmatpush.bf16.msra.mxu0 %v1232
    %1683 = vmatpush.bf16.msra.mxu0 %v1228
    %1684 = vmatpush.bf16.msra.mxu0 %v1224
    %1685 = vmatpush.bf16.msra.mxu0 %v1220
    %1686 = vmatmul.bf16.gmra.mxu0 %v343
    %v1687 = vpop.f32.mrf.mxu0
    %v1688 = vadd.f32 %v1674, %v1687
    %v1689 = vpop.f32.mrf.mxu0
    %v1690 = vadd.f32 %v1676, %v1689
    %1691 = vdwg.mxu0
    %1692 = vmatpush.bf16.msra.mxu0 %v1280
    %1693 = vmatpush.bf16.msra.mxu0 %v1276
    %1694 = vmatpush.bf16.msra.mxu0 %v1272
    %1695 = vmatpush.bf16.msra.mxu0 %v1268
    %1696 = vmatpush.bf16.msra.mxu0 %v1264
    %1697 = vmatpush.bf16.msra.mxu0 %v1260
    %1698 = vmatpush.bf16.msra.mxu0 %v1256
    %1699 = vmatpush.bf16.msra.mxu0 %v1252
    %1700 = vmatmul.bf16.gmra.mxu0 %v344
    %v1701 = vpop.f32.mrf.mxu0
    %v1702 = vadd.f32 %v1688, %v1701
    %v1703 = vpop.f32.mrf.mxu0
    %v1704 = vadd.f32 %v1690, %v1703
    %1705 = vdwg.mxu0
    %1706 = vmatpush.bf16.msra.mxu0 %v1312
    %1707 = vmatpush.bf16.msra.mxu0 %v1308
    %1708 = vmatpush.bf16.msra.mxu0 %v1304
    %1709 = vmatpush.bf16.msra.mxu0 %v1300
    %1710 = vmatpush.bf16.msra.mxu0 %v1296
    %1711 = vmatpush.bf16.msra.mxu0 %v1292
    %1712 = vmatpush.bf16.msra.mxu0 %v1288
    %1713 = vmatpush.bf16.msra.mxu0 %v1284
    %1714 = vmatmul.bf16.gmra.mxu0 %v345
    %v1715 = vpop.f32.mrf.mxu0
    %v1716 = vadd.f32 %v1702, %v1715
    %v1717 = vpop.f32.mrf.mxu0
    %v1718 = vadd.f32 %v1704, %v1717
    %1719 = vdwg.mxu0
    %1720 = vmatpush.bf16.msra.mxu0 %v1344
    %1721 = vmatpush.bf16.msra.mxu0 %v1340
    %1722 = vmatpush.bf16.msra.mxu0 %v1336
    %1723 = vmatpush.bf16.msra.mxu0 %v1332
    %1724 = vmatpush.bf16.msra.mxu0 %v1328
    %1725 = vmatpush.bf16.msra.mxu0 %v1324
    %1726 = vmatpush.bf16.msra.mxu0 %v1320
    %1727 = vmatpush.bf16.msra.mxu0 %v1316
    %1728 = vmatmul.bf16.gmra.mxu0 %v346
    %v1729 = vpop.f32.mrf.mxu0
    %v1730 = vadd.f32 %v1716, %v1729
    %v1731 = vpop.f32.mrf.mxu0
    %v1732 = vadd.f32 %v1718, %v1731
    %1733 = vdwg.mxu0
    %1734 = vmatpush.bf16.msra.mxu0 %v1376
    %1735 = vmatpush.bf16.msra.mxu0 %v1372
    %1736 = vmatpush.bf16.msra.mxu0 %v1368
    %1737 = vmatpush.bf16.msra.mxu0 %v1364
    %1738 = vmatpush.bf16.msra.mxu0 %v1360
    %1739 = vmatpush.bf16.msra.mxu0 %v1356
    %1740 = vmatpush.bf16.msra.mxu0 %v1352
    %1741 = vmatpush.bf16.msra.mxu0 %v1348
    %1742 = vmatmul.bf16.gmra.mxu0 %v347
    %v1743 = vpop.f32.mrf.mxu0
    %v1744 = vadd.f32 %v1730, %v1743
    %v1745 = vpop.f32.mrf.mxu0
    %v1746 = vadd.f32 %v1732, %v1745
    %1747 = vdwg.mxu0
    %1748 = vmatpush.bf16.msra.mxu0 %v1153
    %1749 = vmatpush.bf16.msra.mxu0 %v1149
    %1750 = vmatpush.bf16.msra.mxu0 %v1145
    %1751 = vmatpush.bf16.msra.mxu0 %v1141
    %1752 = vmatpush.bf16.msra.mxu0 %v1137
    %1753 = vmatpush.bf16.msra.mxu0 %v1133
    %1754 = vmatpush.bf16.msra.mxu0 %v1129
    %1755 = vmatpush.bf16.msra.mxu0 %v1125
    %1756 = vmatmul.bf16.gmra.mxu0 %v340
    %v1757 = vpop.f32.mrf.mxu0
    %v1758 = vadd.f32 %v309, %v1757
    %v1759 = vpop.f32.mrf.mxu0
    %v1760 = vadd.f32 %v309, %v1759
    %1761 = vdwg.mxu0
    %1762 = vmatpush.bf16.msra.mxu0 %v1185
    %1763 = vmatpush.bf16.msra.mxu0 %v1181
    %1764 = vmatpush.bf16.msra.mxu0 %v1177
    %1765 = vmatpush.bf16.msra.mxu0 %v1173
    %1766 = vmatpush.bf16.msra.mxu0 %v1169
    %1767 = vmatpush.bf16.msra.mxu0 %v1165
    %1768 = vmatpush.bf16.msra.mxu0 %v1161
    %1769 = vmatpush.bf16.msra.mxu0 %v1157
    %1770 = vmatmul.bf16.gmra.mxu0 %v341
    %v1771 = vpop.f32.mrf.mxu0
    %v1772 = vadd.f32 %v1758, %v1771
    %v1773 = vpop.f32.mrf.mxu0
    %v1774 = vadd.f32 %v1760, %v1773
    %1775 = vdwg.mxu0
    %1776 = vmatpush.bf16.msra.mxu0 %v1217
    %1777 = vmatpush.bf16.msra.mxu0 %v1213
    %1778 = vmatpush.bf16.msra.mxu0 %v1209
    %1779 = vmatpush.bf16.msra.mxu0 %v1205
    %1780 = vmatpush.bf16.msra.mxu0 %v1201
    %1781 = vmatpush.bf16.msra.mxu0 %v1197
    %1782 = vmatpush.bf16.msra.mxu0 %v1193
    %1783 = vmatpush.bf16.msra.mxu0 %v1189
    %1784 = vmatmul.bf16.gmra.mxu0 %v342
    %v1785 = vpop.f32.mrf.mxu0
    %v1786 = vadd.f32 %v1772, %v1785
    %v1787 = vpop.f32.mrf.mxu0
    %v1788 = vadd.f32 %v1774, %v1787
    %1789 = vdwg.mxu0
    %1790 = vmatpush.bf16.msra.mxu0 %v1249
    %1791 = vmatpush.bf16.msra.mxu0 %v1245
    %1792 = vmatpush.bf16.msra.mxu0 %v1241
    %1793 = vmatpush.bf16.msra.mxu0 %v1237
    %1794 = vmatpush.bf16.msra.mxu0 %v1233
    %1795 = vmatpush.bf16.msra.mxu0 %v1229
    %1796 = vmatpush.bf16.msra.mxu0 %v1225
    %1797 = vmatpush.bf16.msra.mxu0 %v1221
    %1798 = vmatmul.bf16.gmra.mxu0 %v343
    %v1799 = vpop.f32.mrf.mxu0
    %v1800 = vadd.f32 %v1786, %v1799
    %v1801 = vpop.f32.mrf.mxu0
    %v1802 = vadd.f32 %v1788, %v1801
    %1803 = vdwg.mxu0
    %1804 = vmatpush.bf16.msra.mxu0 %v1281
    %1805 = vmatpush.bf16.msra.mxu0 %v1277
    %1806 = vmatpush.bf16.msra.mxu0 %v1273
    %1807 = vmatpush.bf16.msra.mxu0 %v1269
    %1808 = vmatpush.bf16.msra.mxu0 %v1265
    %1809 = vmatpush.bf16.msra.mxu0 %v1261
    %1810 = vmatpush.bf16.msra.mxu0 %v1257
    %1811 = vmatpush.bf16.msra.mxu0 %v1253
    %1812 = vmatmul.bf16.gmra.mxu0 %v344
    %v1813 = vpop.f32.mrf.mxu0
    %v1814 = vadd.f32 %v1800, %v1813
    %v1815 = vpop.f32.mrf.mxu0
    %v1816 = vadd.f32 %v1802, %v1815
    %1817 = vdwg.mxu0
    %1818 = vmatpush.bf16.msra.mxu0 %v1313
    %1819 = vmatpush.bf16.msra.mxu0 %v1309
    %1820 = vmatpush.bf16.msra.mxu0 %v1305
    %1821 = vmatpush.bf16.msra.mxu0 %v1301
    %1822 = vmatpush.bf16.msra.mxu0 %v1297
    %1823 = vmatpush.bf16.msra.mxu0 %v1293
    %1824 = vmatpush.bf16.msra.mxu0 %v1289
    %1825 = vmatpush.bf16.msra.mxu0 %v1285
    %1826 = vmatmul.bf16.gmra.mxu0 %v345
    %v1827 = vpop.f32.mrf.mxu0
    %v1828 = vadd.f32 %v1814, %v1827
    %v1829 = vpop.f32.mrf.mxu0
    %v1830 = vadd.f32 %v1816, %v1829
    %1831 = vdwg.mxu0
    %1832 = vmatpush.bf16.msra.mxu0 %v1345
    %1833 = vmatpush.bf16.msra.mxu0 %v1341
    %1834 = vmatpush.bf16.msra.mxu0 %v1337
    %1835 = vmatpush.bf16.msra.mxu0 %v1333
    %1836 = vmatpush.bf16.msra.mxu0 %v1329
    %1837 = vmatpush.bf16.msra.mxu0 %v1325
    %1838 = vmatpush.bf16.msra.mxu0 %v1321
    %1839 = vmatpush.bf16.msra.mxu0 %v1317
    %1840 = vmatmul.bf16.gmra.mxu0 %v346
    %v1841 = vpop.f32.mrf.mxu0
    %v1842 = vadd.f32 %v1828, %v1841
    %v1843 = vpop.f32.mrf.mxu0
    %v1844 = vadd.f32 %v1830, %v1843
    %1845 = vdwg.mxu0
    %1846 = vmatpush.bf16.msra.mxu0 %v1377
    %1847 = vmatpush.bf16.msra.mxu0 %v1373
    %1848 = vmatpush.bf16.msra.mxu0 %v1369
    %1849 = vmatpush.bf16.msra.mxu0 %v1365
    %1850 = vmatpush.bf16.msra.mxu0 %v1361
    %1851 = vmatpush.bf16.msra.mxu0 %v1357
    %1852 = vmatpush.bf16.msra.mxu0 %v1353
    %1853 = vmatpush.bf16.msra.mxu0 %v1349
    %1854 = vmatmul.bf16.gmra.mxu0 %v347
    %v1855 = vpop.f32.mrf.mxu0
    %v1856 = vadd.f32 %v1842, %v1855
    %v1857 = vpop.f32.mrf.mxu0
    %v1858 = vadd.f32 %v1844, %v1857
    %1859 = vdwg.mxu0
    %1860 = vmatpush.bf16.msra.mxu0 %v1154
    %1861 = vmatpush.bf16.msra.mxu0 %v1150
    %1862 = vmatpush.bf16.msra.mxu0 %v1146
    %1863 = vmatpush.bf16.msra.mxu0 %v1142
    %1864 = vmatpush.bf16.msra.mxu0 %v1138
    %1865 = vmatpush.bf16.msra.mxu0 %v1134
    %1866 = vmatpush.bf16.msra.mxu0 %v1130
    %1867 = vmatpush.bf16.msra.mxu0 %v1126
    %1868 = vmatmul.bf16.gmra.mxu0 %v340
    %v1869 = vpop.f32.mrf.mxu0
    %v1870 = vadd.f32 %v310, %v1869
    %v1871 = vpop.f32.mrf.mxu0
    %v1872 = vadd.f32 %v310, %v1871
    %1873 = vdwg.mxu0
    %1874 = vmatpush.bf16.msra.mxu0 %v1186
    %1875 = vmatpush.bf16.msra.mxu0 %v1182
    %1876 = vmatpush.bf16.msra.mxu0 %v1178
    %1877 = vmatpush.bf16.msra.mxu0 %v1174
    %1878 = vmatpush.bf16.msra.mxu0 %v1170
    %1879 = vmatpush.bf16.msra.mxu0 %v1166
    %1880 = vmatpush.bf16.msra.mxu0 %v1162
    %1881 = vmatpush.bf16.msra.mxu0 %v1158
    %1882 = vmatmul.bf16.gmra.mxu0 %v341
    %v1883 = vpop.f32.mrf.mxu0
    %v1884 = vadd.f32 %v1870, %v1883
    %v1885 = vpop.f32.mrf.mxu0
    %v1886 = vadd.f32 %v1872, %v1885
    %1887 = vdwg.mxu0
    %1888 = vmatpush.bf16.msra.mxu0 %v1218
    %1889 = vmatpush.bf16.msra.mxu0 %v1214
    %1890 = vmatpush.bf16.msra.mxu0 %v1210
    %1891 = vmatpush.bf16.msra.mxu0 %v1206
    %1892 = vmatpush.bf16.msra.mxu0 %v1202
    %1893 = vmatpush.bf16.msra.mxu0 %v1198
    %1894 = vmatpush.bf16.msra.mxu0 %v1194
    %1895 = vmatpush.bf16.msra.mxu0 %v1190
    %1896 = vmatmul.bf16.gmra.mxu0 %v342
    %v1897 = vpop.f32.mrf.mxu0
    %v1898 = vadd.f32 %v1884, %v1897
    %v1899 = vpop.f32.mrf.mxu0
    %v1900 = vadd.f32 %v1886, %v1899
    %1901 = vdwg.mxu0
    %1902 = vmatpush.bf16.msra.mxu0 %v1250
    %1903 = vmatpush.bf16.msra.mxu0 %v1246
    %1904 = vmatpush.bf16.msra.mxu0 %v1242
    %1905 = vmatpush.bf16.msra.mxu0 %v1238
    %1906 = vmatpush.bf16.msra.mxu0 %v1234
    %1907 = vmatpush.bf16.msra.mxu0 %v1230
    %1908 = vmatpush.bf16.msra.mxu0 %v1226
    %1909 = vmatpush.bf16.msra.mxu0 %v1222
    %1910 = vmatmul.bf16.gmra.mxu0 %v343
    %v1911 = vpop.f32.mrf.mxu0
    %v1912 = vadd.f32 %v1898, %v1911
    %v1913 = vpop.f32.mrf.mxu0
    %v1914 = vadd.f32 %v1900, %v1913
    %1915 = vdwg.mxu0
    %1916 = vmatpush.bf16.msra.mxu0 %v1282
    %1917 = vmatpush.bf16.msra.mxu0 %v1278
    %1918 = vmatpush.bf16.msra.mxu0 %v1274
    %1919 = vmatpush.bf16.msra.mxu0 %v1270
    %1920 = vmatpush.bf16.msra.mxu0 %v1266
    %1921 = vmatpush.bf16.msra.mxu0 %v1262
    %1922 = vmatpush.bf16.msra.mxu0 %v1258
    %1923 = vmatpush.bf16.msra.mxu0 %v1254
    %1924 = vmatmul.bf16.gmra.mxu0 %v344
    %v1925 = vpop.f32.mrf.mxu0
    %v1926 = vadd.f32 %v1912, %v1925
    %v1927 = vpop.f32.mrf.mxu0
    %v1928 = vadd.f32 %v1914, %v1927
    %1929 = vdwg.mxu0
    %1930 = vmatpush.bf16.msra.mxu0 %v1314
    %1931 = vmatpush.bf16.msra.mxu0 %v1310
    %1932 = vmatpush.bf16.msra.mxu0 %v1306
    %1933 = vmatpush.bf16.msra.mxu0 %v1302
    %1934 = vmatpush.bf16.msra.mxu0 %v1298
    %1935 = vmatpush.bf16.msra.mxu0 %v1294
    %1936 = vmatpush.bf16.msra.mxu0 %v1290
    %1937 = vmatpush.bf16.msra.mxu0 %v1286
    %1938 = vmatmul.bf16.gmra.mxu0 %v345
    %v1939 = vpop.f32.mrf.mxu0
    %v1940 = vadd.f32 %v1926, %v1939
    %v1941 = vpop.f32.mrf.mxu0
    %v1942 = vadd.f32 %v1928, %v1941
    %1943 = vdwg.mxu0
    %1944 = vmatpush.bf16.msra.mxu0 %v1346
    %1945 = vmatpush.bf16.msra.mxu0 %v1342
    %1946 = vmatpush.bf16.msra.mxu0 %v1338
    %1947 = vmatpush.bf16.msra.mxu0 %v1334
    %1948 = vmatpush.bf16.msra.mxu0 %v1330
    %1949 = vmatpush.bf16.msra.mxu0 %v1326
    %1950 = vmatpush.bf16.msra.mxu0 %v1322
    %1951 = vmatpush.bf16.msra.mxu0 %v1318
    %1952 = vmatmul.bf16.gmra.mxu0 %v346
    %v1953 = vpop.f32.mrf.mxu0
    %v1954 = vadd.f32 %v1940, %v1953
    %v1955 = vpop.f32.mrf.mxu0
    %v1956 = vadd.f32 %v1942, %v1955
    %1957 = vdwg.mxu0
    %1958 = vmatpush.bf16.msra.mxu0 %v1378
    %1959 = vmatpush.bf16.msra.mxu0 %v1374
    %1960 = vmatpush.bf16.msra.mxu0 %v1370
    %1961 = vmatpush.bf16.msra.mxu0 %v1366
    %1962 = vmatpush.bf16.msra.mxu0 %v1362
    %1963 = vmatpush.bf16.msra.mxu0 %v1358
    %1964 = vmatpush.bf16.msra.mxu0 %v1354
    %1965 = vmatpush.bf16.msra.mxu0 %v1350
    %1966 = vmatmul.bf16.gmra.mxu0 %v347
    %v1967 = vpop.f32.mrf.mxu0
    %v1968 = vadd.f32 %v1954, %v1967
    %v1969 = vpop.f32.mrf.mxu0
    %v1970 = vadd.f32 %v1956, %v1969
    %1971 = vdwg.mxu0
    %1972 = vmatpush.bf16.msra.mxu0 %v1155
    %1973 = vmatpush.bf16.msra.mxu0 %v1151
    %1974 = vmatpush.bf16.msra.mxu0 %v1147
    %1975 = vmatpush.bf16.msra.mxu0 %v1143
    %1976 = vmatpush.bf16.msra.mxu0 %v1139
    %1977 = vmatpush.bf16.msra.mxu0 %v1135
    %1978 = vmatpush.bf16.msra.mxu0 %v1131
    %1979 = vmatpush.bf16.msra.mxu0 %v1127
    %1980 = vmatmul.bf16.gmra.mxu0 %v340
    %v1981 = vpop.f32.mrf.mxu0
    %v1982 = vadd.f32 %v311, %v1981
    %v1983 = vpop.f32.mrf.mxu0
    %v1984 = vadd.f32 %v311, %v1983
    %1985 = vdwg.mxu0
    %1986 = vmatpush.bf16.msra.mxu0 %v1187
    %1987 = vmatpush.bf16.msra.mxu0 %v1183
    %1988 = vmatpush.bf16.msra.mxu0 %v1179
    %1989 = vmatpush.bf16.msra.mxu0 %v1175
    %1990 = vmatpush.bf16.msra.mxu0 %v1171
    %1991 = vmatpush.bf16.msra.mxu0 %v1167
    %1992 = vmatpush.bf16.msra.mxu0 %v1163
    %1993 = vmatpush.bf16.msra.mxu0 %v1159
    %1994 = vmatmul.bf16.gmra.mxu0 %v341
    %v1995 = vpop.f32.mrf.mxu0
    %v1996 = vadd.f32 %v1982, %v1995
    %v1997 = vpop.f32.mrf.mxu0
    %v1998 = vadd.f32 %v1984, %v1997
    %1999 = vdwg.mxu0
    %2000 = vmatpush.bf16.msra.mxu0 %v1219
    %2001 = vmatpush.bf16.msra.mxu0 %v1215
    %2002 = vmatpush.bf16.msra.mxu0 %v1211
    %2003 = vmatpush.bf16.msra.mxu0 %v1207
    %2004 = vmatpush.bf16.msra.mxu0 %v1203
    %2005 = vmatpush.bf16.msra.mxu0 %v1199
    %2006 = vmatpush.bf16.msra.mxu0 %v1195
    %2007 = vmatpush.bf16.msra.mxu0 %v1191
    %2008 = vmatmul.bf16.gmra.mxu0 %v342
    %v2009 = vpop.f32.mrf.mxu0
    %v2010 = vadd.f32 %v1996, %v2009
    %v2011 = vpop.f32.mrf.mxu0
    %v2012 = vadd.f32 %v1998, %v2011
    %2013 = vdwg.mxu0
    %2014 = vmatpush.bf16.msra.mxu0 %v1251
    %2015 = vmatpush.bf16.msra.mxu0 %v1247
    %2016 = vmatpush.bf16.msra.mxu0 %v1243
    %2017 = vmatpush.bf16.msra.mxu0 %v1239
    %2018 = vmatpush.bf16.msra.mxu0 %v1235
    %2019 = vmatpush.bf16.msra.mxu0 %v1231
    %2020 = vmatpush.bf16.msra.mxu0 %v1227
    %2021 = vmatpush.bf16.msra.mxu0 %v1223
    %2022 = vmatmul.bf16.gmra.mxu0 %v343
    %v2023 = vpop.f32.mrf.mxu0
    %v2024 = vadd.f32 %v2010, %v2023
    %v2025 = vpop.f32.mrf.mxu0
    %v2026 = vadd.f32 %v2012, %v2025
    %2027 = vdwg.mxu0
    %2028 = vmatpush.bf16.msra.mxu0 %v1283
    %2029 = vmatpush.bf16.msra.mxu0 %v1279
    %2030 = vmatpush.bf16.msra.mxu0 %v1275
    %2031 = vmatpush.bf16.msra.mxu0 %v1271
    %2032 = vmatpush.bf16.msra.mxu0 %v1267
    %2033 = vmatpush.bf16.msra.mxu0 %v1263
    %2034 = vmatpush.bf16.msra.mxu0 %v1259
    %2035 = vmatpush.bf16.msra.mxu0 %v1255
    %2036 = vmatmul.bf16.gmra.mxu0 %v344
    %v2037 = vpop.f32.mrf.mxu0
    %v2038 = vadd.f32 %v2024, %v2037
    %v2039 = vpop.f32.mrf.mxu0
    %v2040 = vadd.f32 %v2026, %v2039
    %2041 = vdwg.mxu0
    %2042 = vmatpush.bf16.msra.mxu0 %v1315
    %2043 = vmatpush.bf16.msra.mxu0 %v1311
    %2044 = vmatpush.bf16.msra.mxu0 %v1307
    %2045 = vmatpush.bf16.msra.mxu0 %v1303
    %2046 = vmatpush.bf16.msra.mxu0 %v1299
    %2047 = vmatpush.bf16.msra.mxu0 %v1295
    %2048 = vmatpush.bf16.msra.mxu0 %v1291
    %2049 = vmatpush.bf16.msra.mxu0 %v1287
    %2050 = vmatmul.bf16.gmra.mxu0 %v345
    %v2051 = vpop.f32.mrf.mxu0
    %v2052 = vadd.f32 %v2038, %v2051
    %v2053 = vpop.f32.mrf.mxu0
    %v2054 = vadd.f32 %v2040, %v2053
    %2055 = vdwg.mxu0
    %2056 = vmatpush.bf16.msra.mxu0 %v1347
    %2057 = vmatpush.bf16.msra.mxu0 %v1343
    %2058 = vmatpush.bf16.msra.mxu0 %v1339
    %2059 = vmatpush.bf16.msra.mxu0 %v1335
    %2060 = vmatpush.bf16.msra.mxu0 %v1331
    %2061 = vmatpush.bf16.msra.mxu0 %v1327
    %2062 = vmatpush.bf16.msra.mxu0 %v1323
    %2063 = vmatpush.bf16.msra.mxu0 %v1319
    %2064 = vmatmul.bf16.gmra.mxu0 %v346
    %v2065 = vpop.f32.mrf.mxu0
    %v2066 = vadd.f32 %v2052, %v2065
    %v2067 = vpop.f32.mrf.mxu0
    %v2068 = vadd.f32 %v2054, %v2067
    %2069 = vdwg.mxu0
    %2070 = vmatpush.bf16.msra.mxu0 %v1379
    %2071 = vmatpush.bf16.msra.mxu0 %v1375
    %2072 = vmatpush.bf16.msra.mxu0 %v1371
    %2073 = vmatpush.bf16.msra.mxu0 %v1367
    %2074 = vmatpush.bf16.msra.mxu0 %v1363
    %2075 = vmatpush.bf16.msra.mxu0 %v1359
    %2076 = vmatpush.bf16.msra.mxu0 %v1355
    %2077 = vmatpush.bf16.msra.mxu0 %v1351
    %2078 = vmatmul.bf16.gmra.mxu0 %v347
    %v2079 = vpop.f32.mrf.mxu0
    %v2080 = vadd.f32 %v2066, %v2079
    %v2081 = vpop.f32.mrf.mxu0
    %v2082 = vadd.f32 %v2068, %v2081
    %2083 = vdwg.mxu0
    %v2084 = vmax.f32 %v1744, 0.0
    %v2085 = vmax.f32 %v1856, 0.0
    %v2086 = vmax.f32 %v1968, 0.0
    %v2087 = vmax.f32 %v2080, 0.0
    %v2088 = vmax.f32 %v1746, 0.0
    %v2089 = vmax.f32 %v1858, 0.0
    %v2090 = vmax.f32 %v1970, 0.0
    %v2091 = vmax.f32 %v2082, 0.0
    %v2092 = vpack.c.bf16 %v2088, %v2084
    %v2093 = vpack.c.bf16 %v2089, %v2085
    %v2094 = vpack.c.bf16 %v2090, %v2086
    %v2095 = vpack.c.bf16 %v2091, %v2087
    %v2096 = vld [vmem:[%s3] sm:$0xf]
    %v2097 = vld [vmem:[%s3 + $0x4] sm:$0xf]
    %v2098 = vld [vmem:[%s3 + $0x8] sm:$0xf]
    %v2099 = vld [vmem:[%s3 + $0xc] sm:$0xf]
    %v2100 = vld [vmem:[%s3 + $0x10] sm:$0xf]
    %v2101 = vld [vmem:[%s3 + $0x14] sm:$0xf]
    %v2102 = vld [vmem:[%s3 + $0x18] sm:$0xf]
    %v2103 = vld [vmem:[%s3 + $0x1c] sm:$0xf]
    %v2104 = vld [vmem:[%s3 + $0x20] sm:$0xf]
    %v2105 = vld [vmem:[%s3 + $0x24] sm:$0xf]
    %v2106 = vld [vmem:[%s3 + $0x28] sm:$0xf]
    %v2107 = vld [vmem:[%s3 + $0x2c] sm:$0xf]
    %v2108 = vld [vmem:[%s3 + $0x30] sm:$0xf]
    %v2109 = vld [vmem:[%s3 + $0x34] sm:$0xf]
    %v2110 = vld [vmem:[%s3 + $0x38] sm:$0xf]
    %v2111 = vld [vmem:[%s3 + $0x3c] sm:$0xf]
    %v2112 = vld [vmem:[%s3 + $0x40] sm:$0xf]
    %v2113 = vld [vmem:[%s3 + $0x44] sm:$0xf]
    %v2114 = vld [vmem:[%s3 + $0x48] sm:$0xf]
    %v2115 = vld [vmem:[%s3 + $0x4c] sm:$0xf]
    %v2116 = vld [vmem:[%s3 + $0x50] sm:$0xf]
    %v2117 = vld [vmem:[%s3 + $0x54] sm:$0xf]
    %v2118 = vld [vmem:[%s3 + $0x58] sm:$0xf]
    %v2119 = vld [vmem:[%s3 + $0x5c] sm:$0xf]
    %v2120 = vld [vmem:[%s3 + $0x60] sm:$0xf]
    %v2121 = vld [vmem:[%s3 + $0x64] sm:$0xf]
    %v2122 = vld [vmem:[%s3 + $0x68] sm:$0xf]
    %v2123 = vld [vmem:[%s3 + $0x6c] sm:$0xf]
    %v2124 = vld [vmem:[%s3 + $0x70] sm:$0xf]
    %v2125 = vld [vmem:[%s3 + $0x74] sm:$0xf]
    %v2126 = vld [vmem:[%s3 + $0x78] sm:$0xf]
    %v2127 = vld [vmem:[%s3 + $0x7c] sm:$0xf]
    %v2128 = vld [vmem:[%s3 + $0x80] sm:$0xf]
    %v2129 = vld [vmem:[%s3 + $0x84] sm:$0xf]
    %v2130 = vld [vmem:[%s3 + $0x88] sm:$0xf]
    %v2131 = vld [vmem:[%s3 + $0x8c] sm:$0xf]
    %v2132 = vld [vmem:[%s3 + $0x90] sm:$0xf]
    %v2133 = vld [vmem:[%s3 + $0x94] sm:$0xf]
    %v2134 = vld [vmem:[%s3 + $0x98] sm:$0xf]
    %v2135 = vld [vmem:[%s3 + $0x9c] sm:$0xf]
    %v2136 = vld [vmem:[%s3 + $0xa0] sm:$0xf]
    %v2137 = vld [vmem:[%s3 + $0xa4] sm:$0xf]
    %v2138 = vld [vmem:[%s3 + $0xa8] sm:$0xf]
    %v2139 = vld [vmem:[%s3 + $0xac] sm:$0xf]
    %v2140 = vld [vmem:[%s3 + $0xb0] sm:$0xf]
    %v2141 = vld [vmem:[%s3 + $0xb4] sm:$0xf]
    %v2142 = vld [vmem:[%s3 + $0xb8] sm:$0xf]
    %v2143 = vld [vmem:[%s3 + $0xbc] sm:$0xf]
    %v2144 = vld [vmem:[%s3 + $0xc0] sm:$0xf]
    %v2145 = vld [vmem:[%s3 + $0xc4] sm:$0xf]
    %v2146 = vld [vmem:[%s3 + $0xc8] sm:$0xf]
    %v2147 = vld [vmem:[%s3 + $0xcc] sm:$0xf]
    %v2148 = vld [vmem:[%s3 + $0xd0] sm:$0xf]
    %v2149 = vld [vmem:[%s3 + $0xd4] sm:$0xf]
    %v2150 = vld [vmem:[%s3 + $0xd8] sm:$0xf]
    %v2151 = vld [vmem:[%s3 + $0xdc] sm:$0xf]
    %v2152 = vld [vmem:[%s3 + $0xe0] sm:$0xf]
    %v2153 = vld [vmem:[%s3 + $0xe4] sm:$0xf]
    %v2154 = vld [vmem:[%s3 + $0xe8] sm:$0xf]
    %v2155 = vld [vmem:[%s3 + $0xec] sm:$0xf]
    %v2156 = vld [vmem:[%s3 + $0xf0] sm:$0xf]
    %v2157 = vld [vmem:[%s3 + $0xf4] sm:$0xf]
    %v2158 = vld [vmem:[%s3 + $0xf8] sm:$0xf]
    %v2159 = vld [vmem:[%s3 + $0xfc] sm:$0xf]
    %v2160 = vld [vmem:[%s4] sm:$0x1]
    %v2162 = vperm.slane %v2160, 0
    %v2228 = vunpack.c.l.b16 %v2096
    %v2229 = vunpack.c.l.b16 %v2097
    %v2230 = vunpack.c.l.b16 %v2098
    %v2231 = vunpack.c.l.b16 %v2099
    %v2232 = vunpack.c.l.b16 %v2100
    %v2233 = vunpack.c.l.b16 %v2101
    %v2234 = vunpack.c.l.b16 %v2102
    %v2235 = vunpack.c.l.b16 %v2103
    %v2236 = vunpack.c.l.b16 %v2104
    %v2237 = vunpack.c.l.b16 %v2105
    %v2238 = vunpack.c.l.b16 %v2106
    %v2239 = vunpack.c.l.b16 %v2107
    %v2240 = vunpack.c.l.b16 %v2108
    %v2241 = vunpack.c.l.b16 %v2109
    %v2242 = vunpack.c.l.b16 %v2110
    %v2243 = vunpack.c.l.b16 %v2111
    %v2244 = vunpack.c.l.b16 %v2112
    %v2245 = vunpack.c.l.b16 %v2113
    %v2246 = vunpack.c.l.b16 %v2114
    %v2247 = vunpack.c.l.b16 %v2115
    %v2248 = vunpack.c.l.b16 %v2116
    %v2249 = vunpack.c.l.b16 %v2117
    %v2250 = vunpack.c.l.b16 %v2118
    %v2251 = vunpack.c.l.b16 %v2119
    %v2252 = vunpack.c.l.b16 %v2120
    %v2253 = vunpack.c.l.b16 %v2121
    %v2254 = vunpack.c.l.b16 %v2122
    %v2255 = vunpack.c.l.b16 %v2123
    %v2256 = vunpack.c.l.b16 %v2124
    %v2257 = vunpack.c.l.b16 %v2125
    %v2258 = vunpack.c.l.b16 %v2126
    %v2259 = vunpack.c.l.b16 %v2127
    %v2260 = vunpack.c.l.b16 %v2128
    %v2261 = vunpack.c.l.b16 %v2129
    %v2262 = vunpack.c.l.b16 %v2130
    %v2263 = vunpack.c.l.b16 %v2131
    %v2264 = vunpack.c.l.b16 %v2132
    %v2265 = vunpack.c.l.b16 %v2133
    %v2266 = vunpack.c.l.b16 %v2134
    %v2267 = vunpack.c.l.b16 %v2135
    %v2268 = vunpack.c.l.b16 %v2136
    %v2269 = vunpack.c.l.b16 %v2137
    %v2270 = vunpack.c.l.b16 %v2138
    %v2271 = vunpack.c.l.b16 %v2139
    %v2272 = vunpack.c.l.b16 %v2140
    %v2273 = vunpack.c.l.b16 %v2141
    %v2274 = vunpack.c.l.b16 %v2142
    %v2275 = vunpack.c.l.b16 %v2143
    %v2276 = vunpack.c.l.b16 %v2144
    %v2277 = vunpack.c.l.b16 %v2145
    %v2278 = vunpack.c.l.b16 %v2146
    %v2279 = vunpack.c.l.b16 %v2147
    %v2280 = vunpack.c.l.b16 %v2148
    %v2281 = vunpack.c.l.b16 %v2149
    %v2282 = vunpack.c.l.b16 %v2150
    %v2283 = vunpack.c.l.b16 %v2151
    %v2284 = vunpack.c.l.b16 %v2152
    %v2285 = vunpack.c.l.b16 %v2153
    %v2286 = vunpack.c.l.b16 %v2154
    %v2287 = vunpack.c.l.b16 %v2155
    %v2288 = vunpack.c.l.b16 %v2156
    %v2289 = vunpack.c.l.b16 %v2157
    %v2290 = vunpack.c.l.b16 %v2158
    %v2291 = vunpack.c.l.b16 %v2159
    %v2292 = vpack.c.b16 %v2229, %v2228
    %v2293 = vpack.c.b16 %v2231, %v2230
    %v2294 = vpack.c.b16 %v2233, %v2232
    %v2295 = vpack.c.b16 %v2235, %v2234
    %v2296 = vpack.c.b16 %v2237, %v2236
    %v2297 = vpack.c.b16 %v2239, %v2238
    %v2298 = vpack.c.b16 %v2241, %v2240
    %v2299 = vpack.c.b16 %v2243, %v2242
    %v2300 = vpack.c.b16 %v2245, %v2244
    %v2301 = vpack.c.b16 %v2247, %v2246
    %v2302 = vpack.c.b16 %v2249, %v2248
    %v2303 = vpack.c.b16 %v2251, %v2250
    %v2304 = vpack.c.b16 %v2253, %v2252
    %v2305 = vpack.c.b16 %v2255, %v2254
    %v2306 = vpack.c.b16 %v2257, %v2256
    %v2307 = vpack.c.b16 %v2259, %v2258
    %v2308 = vpack.c.b16 %v2261, %v2260
    %v2309 = vpack.c.b16 %v2263, %v2262
    %v2310 = vpack.c.b16 %v2265, %v2264
    %v2311 = vpack.c.b16 %v2267, %v2266
    %v2312 = vpack.c.b16 %v2269, %v2268
    %v2313 = vpack.c.b16 %v2271, %v2270
    %v2314 = vpack.c.b16 %v2273, %v2272
    %v2315 = vpack.c.b16 %v2275, %v2274
    %v2316 = vpack.c.b16 %v2277, %v2276
    %v2317 = vpack.c.b16 %v2279, %v2278
    %v2318 = vpack.c.b16 %v2281, %v2280
    %v2319 = vpack.c.b16 %v2283, %v2282
    %v2320 = vpack.c.b16 %v2285, %v2284
    %v2321 = vpack.c.b16 %v2287, %v2286
    %v2322 = vpack.c.b16 %v2289, %v2288
    %v2323 = vpack.c.b16 %v2291, %v2290
    %2356 = vmatpush.bf16.msra.mxu0 %v2299
    %2357 = vmatpush.bf16.msra.mxu0 %v2298
    %2358 = vmatpush.bf16.msra.mxu0 %v2297
    %2359 = vmatpush.bf16.msra.mxu0 %v2296
    %2360 = vmatpush.bf16.msra.mxu0 %v2295
    %2361 = vmatpush.bf16.msra.mxu0 %v2294
    %2362 = vmatpush.bf16.msra.mxu0 %v2293
    %2363 = vmatpush.bf16.msra.mxu0 %v2292
    %2364 = vmatmul.bf16.gmra.mxu0 %v2092
    %v2365 = vpop.f32.mrf.mxu0
    %v2366 = vadd.f32 %v2162, %v2365
    %v2367 = vpop.f32.mrf.mxu0
    %v2368 = vadd.f32 %v2162, %v2367
    %2369 = vdwg.mxu0
    %2370 = vmatpush.bf16.msra.mxu0 %v2307
    %2371 = vmatpush.bf16.msra.mxu0 %v2306
    %2372 = vmatpush.bf16.msra.mxu0 %v2305
    %2373 = vmatpush.bf16.msra.mxu0 %v2304
    %2374 = vmatpush.bf16.msra.mxu0 %v2303
    %2375 = vmatpush.bf16.msra.mxu0 %v2302
    %2376 = vmatpush.bf16.msra.mxu0 %v2301
    %2377 = vmatpush.bf16.msra.mxu0 %v2300
    %2378 = vmatmul.bf16.gmra.mxu0 %v2093
    %v2379 = vpop.f32.mrf.mxu0
    %v2380 = vadd.f32 %v2366, %v2379
    %v2381 = vpop.f32.mrf.mxu0
    %v2382 = vadd.f32 %v2368, %v2381
    %2383 = vdwg.mxu0
    %2384 = vmatpush.bf16.msra.mxu0 %v2315
    %2385 = vmatpush.bf16.msra.mxu0 %v2314
    %2386 = vmatpush.bf16.msra.mxu0 %v2313
    %2387 = vmatpush.bf16.msra.mxu0 %v2312
    %2388 = vmatpush.bf16.msra.mxu0 %v2311
    %2389 = vmatpush.bf16.msra.mxu0 %v2310
    %2390 = vmatpush.bf16.msra.mxu0 %v2309
    %2391 = vmatpush.bf16.msra.mxu0 %v2308
    %2392 = vmatmul.bf16.gmra.mxu0 %v2094
    %v2393 = vpop.f32.mrf.mxu0
    %v2394 = vadd.f32 %v2380, %v2393
    %v2395 = vpop.f32.mrf.mxu0
    %v2396 = vadd.f32 %v2382, %v2395
    %2397 = vdwg.mxu0
    %2398 = vmatpush.bf16.msra.mxu0 %v2323
    %2399 = vmatpush.bf16.msra.mxu0 %v2322
    %2400 = vmatpush.bf16.msra.mxu0 %v2321
    %2401 = vmatpush.bf16.msra.mxu0 %v2320
    %2402 = vmatpush.bf16.msra.mxu0 %v2319
    %2403 = vmatpush.bf16.msra.mxu0 %v2318
    %2404 = vmatpush.bf16.msra.mxu0 %v2317
    %2405 = vmatpush.bf16.msra.mxu0 %v2316
    %2406 = vmatmul.bf16.gmra.mxu0 %v2095
    %v2407 = vpop.f32.mrf.mxu0
    %v2408 = vadd.f32 %v2394, %v2407
    %v2409 = vpop.f32.mrf.mxu0
    %v2410 = vadd.f32 %v2396, %v2409
    %2411 = vdwg.mxu0
    %v2412 = vmax.f32 %v2408, 0.0
    %v2413 = vmax.f32 %v2410, 0.0
    %v2414 = vpack.c.bf16 %v2413, %v2412
    %v2415 = vld [vmem:[%s5] sm:$0xf]
    %v2416 = vld [vmem:[%s5 + $0x4] sm:$0xf]
    %v2417 = vld [vmem:[%s5 + $0x8] sm:$0xf]
    %v2418 = vld [vmem:[%s5 + $0xc] sm:$0xf]
    %v2419 = vld [vmem:[%s5 + $0x10] sm:$0xf]
    %v2420 = vld [vmem:[%s5 + $0x14] sm:$0xf]
    %v2421 = vld [vmem:[%s5 + $0x18] sm:$0xf]
    %v2422 = vld [vmem:[%s5 + $0x1c] sm:$0xf]
    %v2423 = vld [vmem:[%s5 + $0x20] sm:$0xf]
    %v2424 = vld [vmem:[%s5 + $0x24] sm:$0xf]
    %v2425 = vld [vmem:[%s5 + $0x28] sm:$0xf]
    %v2426 = vld [vmem:[%s5 + $0x2c] sm:$0xf]
    %v2427 = vld [vmem:[%s5 + $0x30] sm:$0xf]
    %v2428 = vld [vmem:[%s5 + $0x34] sm:$0xf]
    %v2429 = vld [vmem:[%s5 + $0x38] sm:$0xf]
    %v2430 = vld [vmem:[%s5 + $0x3c] sm:$0xf]
    %v2431 = vld [vmem:[%s6] sm:$0x1]
    %v2433 = vperm.slane %v2431, 0
    %v2451 = vunpack.c.l.b16 %v2415
    %v2452 = vunpack.c.l.b16 %v2416
    %v2453 = vunpack.c.l.b16 %v2417
    %v2454 = vunpack.c.l.b16 %v2418
    %v2455 = vunpack.c.l.b16 %v2419
    %v2456 = vunpack.c.l.b16 %v2420
    %v2457 = vunpack.c.l.b16 %v2421
    %v2458 = vunpack.c.l.b16 %v2422
    %v2459 = vunpack.c.l.b16 %v2423
    %v2460 = vunpack.c.l.b16 %v2424
    %v2461 = vunpack.c.l.b16 %v2425
    %v2462 = vunpack.c.l.b16 %v2426
    %v2463 = vunpack.c.l.b16 %v2427
    %v2464 = vunpack.c.l.b16 %v2428
    %v2465 = vunpack.c.l.b16 %v2429
    %v2466 = vunpack.c.l.b16 %v2430
    %v2467 = vpack.c.b16 %v2452, %v2451
    %v2468 = vpack.c.b16 %v2454, %v2453
    %v2469 = vpack.c.b16 %v2456, %v2455
    %v2470 = vpack.c.b16 %v2458, %v2457
    %v2471 = vpack.c.b16 %v2460, %v2459
    %v2472 = vpack.c.b16 %v2462, %v2461
    %v2473 = vpack.c.b16 %v2464, %v2463
    %v2474 = vpack.c.b16 %v2466, %v2465
    %2483 = vmatpush.bf16.msra.mxu0 %v2474
    %2484 = vmatpush.bf16.msra.mxu0 %v2473
    %2485 = vmatpush.bf16.msra.mxu0 %v2472
    %2486 = vmatpush.bf16.msra.mxu0 %v2471
    %2487 = vmatpush.bf16.msra.mxu0 %v2470
    %2488 = vmatpush.bf16.msra.mxu0 %v2469
    %2489 = vmatpush.bf16.msra.mxu0 %v2468
    %2490 = vmatpush.bf16.msra.mxu0 %v2467
    %2491 = vmatmul.bf16.gmra.mxu0 %v2414
    %v2492 = vpop.f32.mrf.mxu0
    %v2493 = vadd.f32 %v2433, %v2492
    %v2494 = vpop.f32.mrf.mxu0
    %v2495 = vadd.f32 %v2433, %v2494
    %2496 = vdwg.mxu0
    %2497 = vst [vmem:[%s7] sm:$0xff] %v2493
    %2498 = vst [vmem:[%s7 + $0x8] sm:$0xff] %v2495
    // Predicated region
    $region34: #{_forward_impl.1} parent=1 // pred_check
      _
    $region35: #{_forward_impl.1} parent=1 // pred_check_branch
      %2500 = sbr.rel (0) target = $region37
    $region36: #{_forward_impl.1} parent=1 // pred_region
      _
    $region37: #{_forward_impl.1} parent=1 // pred_fallthru
      _
    // Predicated region
    $region38: #{_forward_impl.1} parent=1 // pred_check
      _
    $region39: #{_forward_impl.1} parent=1 // pred_check_branch
      %2502 = sbr.rel (0) target = $region41
    $region40: #{_forward_impl.1} parent=1 // pred_region
      _
    $region41: #{_forward_impl.1} parent=1 // pred_fallthru
      _
    %2503 = vsyncpa [#allocation3], 1

// kernel: _forward_impl.1
$region0: #{_forward_impl.1}
  #allocation0 [shape = 'u32[]', space=smem, size = 0x4, offset = 0x4, fixed_abs, tag = 'smem constant byte address 0x4 - core index']
  #allocation1 [shape = 'u32[72,128]{1,0:T(1,128)}', space=vmem, size = 0x9000, scoped, tag = 'internal scratch']
  %s0 = inlined_call_operand.vmem [shape: bf16[16,1024], index: 0, kind: input, shape index: {}]
  %s1 = inlined_call_operand.hbm [shape: bf16[1024,512], index: 1, kind: input, shape index: {}]
  %s2 = inlined_call_operand.vmem [shape: f32[1,512], index: 2, kind: input, shape index: {}]
  %s3 = inlined_call_operand.vmem [shape: bf16[512,128], index: 3, kind: input, shape index: {}]
  %s4 = inlined_call_operand.vmem [shape: f32[1,128], index: 4, kind: input, shape index: {}]
  %s5 = inlined_call_operand.vmem [shape: bf16[128,128], index: 5, kind: input, shape index: {}]
  %s6 = inlined_call_operand.vmem [shape: f32[1,128], index: 6, kind: input, shape index: {}]
  %s7 = inlined_call_operand.vmem [shape: f32[16,128], index: 7, kind: output, shape index: {}]
  %s8 = sld [smem:[#allocation0]]
  $region42: #{_forward_impl.1} parent=0
    _
  %s10 = ssub.s32 1, %s8
  %s11 = scalar_select 0, %s10, %s8
  $region1: #{_forward_impl.1} parent=0
    #allocation2 [shape = 'u8[1048576]{0}', space=vmem, size = 0x100000, scoped, tag = 'input window, operand 1, single buffered']
    #allocation3 [shape = 's32[1]{0}', space=sflag, size = 0x4, scoped, tag = 'scoped memory for _forward_impl.1']
    %12 = vsyncpa [#allocation3], 0
    // Predicated region
    $region2: #{_forward_impl.1} parent=1 // pred_check
      _
    $region3: #{_forward_impl.1} parent=1 // pred_check_branch
      %14 = sbr.rel (0) target = $region5
    $region4: #{_forward_impl.1} parent=1 // pred_region
      _
    $region5: #{_forward_impl.1} parent=1 // pred_fallthru
      _
    // Predicated region
    $region6: #{_forward_impl.1} parent=1 // pred_check
      _
    $region7: #{_forward_impl.1} parent=1 // pred_check_branch
      %16 = sbr.rel (0) target = $region9
    $region8: #{_forward_impl.1} parent=1 // pred_region
      %18 = vsyncadd [#allocation3], 0
      %s19 = sshll.u32 %s1, 4
      %s20 = int_to_ptr.hbm [resolvable:$true] %s19
      %s21 = sshll.u32 [#allocation2], 4
      %s22 = int_to_ptr.vmem [resolvable:$true] %s21
      %27 = dma.hbm_to_vmem [thread:$0]  %s20, 32768, %s22, [#allocation3], 256, 256, 16
    $region9: #{_forward_impl.1} parent=1 // pred_fallthru
      _
    // Predicated region
    $region10: #{_forward_impl.1} parent=1 // pred_check
      _
    $region11: #{_forward_impl.1} parent=1 // pred_check_branch
      %29 = sbr.rel (0) target = $region13
    $region12: #{_forward_impl.1} parent=1 // pred_region
      _
    $region13: #{_forward_impl.1} parent=1 // pred_fallthru
      _
    // Predicated region
    $region14: #{_forward_impl.1} parent=1 // pred_check
      _
    $region15: #{_forward_impl.1} parent=1 // pred_check_branch
      %31 = sbr.rel (0) target = $region17
    $region16: #{_forward_impl.1} parent=1 // pred_region
      _
    $region17: #{_forward_impl.1} parent=1 // pred_fallthru
      _
    // Predicated region
    $region18: #{_forward_impl.1} parent=1 // pred_check
      _
    $region19: #{_forward_impl.1} parent=1 // pred_check_branch
      %33 = sbr.rel (0) target = $region21
    $region20: #{_forward_impl.1} parent=1 // pred_region
      _
    $region21: #{_forward_impl.1} parent=1 // pred_fallthru
      _
    // Predicated region
    $region22: #{_forward_impl.1} parent=1 // pred_check
      _
    $region23: #{_forward_impl.1} parent=1 // pred_check_branch
      %35 = sbr.rel (0) target = $region25
    $region24: #{_forward_impl.1} parent=1 // pred_region
      _
    $region25: #{_forward_impl.1} parent=1 // pred_fallthru
      _
    // Predicated region
    $region26: #{_forward_impl.1} parent=1 // pred_check
      _
    $region27: #{_forward_impl.1} parent=1 // pred_check_branch
      %37 = sbr.rel (0) target = $region29
    $region28: #{_forward_impl.1} parent=1 // pred_region
      _
    $region29: #{_forward_impl.1} parent=1 // pred_fallthru
      _
    // Predicated region
    $region30: #{_forward_impl.1} parent=1 // pred_check
      _
    $region31: #{_forward_impl.1} parent=1 // pred_check_branch
      %39 = sbr.rel (0) target = $region33
    $region32: #{_forward_impl.1} parent=1 // pred_region
      %41 = dma.done [#allocation3], 32768
    $region33: #{_forward_impl.1} parent=1 // pred_fallthru
      _
    %v42 = vld [vmem:[%s0] sm:$0xff]
    %v43 = vld [vmem:[%s0 + $0x8] sm:$0xff]
    %v44 = vld [vmem:[%s0 + $0x10] sm:$0xff]
    %v45 = vld [vmem:[%s0 + $0x18] sm:$0xff]
    %v46 = vld [vmem:[%s0 + $0x20] sm:$0xff]
    %v47 = vld [vmem:[%s0 + $0x28] sm:$0xff]
    %v48 = vld [vmem:[%s0 + $0x30] sm:$0xff]
    %v49 = vld [vmem:[%s0 + $0x38] sm:$0xff]
    %v50 = vld [vmem:[#allocation2] sm:$0xff]
    %v51 = vld [vmem:[#allocation2 + $0x8] sm:$0xff]
    %v52 = vld [vmem:[#allocation2 + $0x10] sm:$0xff]
    %v53 = vld [vmem:[#allocation2 + $0x18] sm:$0xff]
    %v54 = vld [vmem:[#allocation2 + $0x20] sm:$0xff]
    %v55 = vld [vmem:[#allocation2 + $0x28] sm:$0xff]
    %v56 = vld [vmem:[#allocation2 + $0x30] sm:$0xff]
    %v57 = vld [vmem:[#allocation2 + $0x38] sm:$0xff]
    %v58 = vld [vmem:[#allocation2 + $0x40] sm:$0xff]
    %v59 = vld [vmem:[#allocation2 + $0x48] sm:$0xff]
    %v60 = vld [vmem:[#allocation2 + $0x50] sm:$0xff]
    %v61 = vld [vmem:[#allocation2 + $0x58] sm:$0xff]
    %v62 = vld [vmem:[#allocation2 + $0x60] sm:$0xff]
    %v63 = vld [vmem:[#allocation2 + $0x68] sm:$0xff]
    %v64 = vld [vmem:[#allocation2 + $0x70] sm:$0xff]
    %v65 = vld [vmem:[#allocation2 + $0x78] sm:$0xff]
    %v66 = vld [vmem:[#allocation2 + $0x80] sm:$0xff]
    %v67 = vld [vmem:[#allocation2 + $0x88] sm:$0xff]
    %v68 = vld [vmem:[#allocation2 + $0x90] sm:$0xff]
    %v69 = vld [vmem:[#allocation2 + $0x98] sm:$0xff]
    %v70 = vld [vmem:[#allocation2 + $0xa0] sm:$0xff]
    %v71 = vld [vmem:[#allocation2 + $0xa8] sm:$0xff]
    %v72 = vld [vmem:[#allocation2 + $0xb0] sm:$0xff]
    %v73 = vld [vmem:[#allocation2 + $0xb8] sm:$0xff]
    %v74 = vld [vmem:[#allocation2 + $0xc0] sm:$0xff]
    %v75 = vld [vmem:[#allocation2 + $0xc8] sm:$0xff]
    %v76 = vld [vmem:[#allocation2 + $0xd0] sm:$0xff]
    %v77 = vld [vmem:[#allocation2 + $0xd8] sm:$0xff]
    %v78 = vld [vmem:[#allocation2 + $0xe0] sm:$0xff]
    %v79 = vld [vmem:[#allocation2 + $0xe8] sm:$0xff]
    %v80 = vld [vmem:[#allocation2 + $0xf0] sm:$0xff]
    %v81 = vld [vmem:[#allocation2 + $0xf8] sm:$0xff]
    %v82 = vld [vmem:[#allocation2 + $0x100] sm:$0xff]
    %v83 = vld [vmem:[#allocation2 + $0x108] sm:$0xff]
    %v84 = vld [vmem:[#allocation2 + $0x110] sm:$0xff]
    %v85 = vld [vmem:[#allocation2 + $0x118] sm:$0xff]
    %v86 = vld [vmem:[#allocation2 + $0x120] sm:$0xff]
    %v87 = vld [vmem:[#allocation2 + $0x128] sm:$0xff]
    %v88 = vld [vmem:[#allocation2 + $0x130] sm:$0xff]
    %v89 = vld [vmem:[#allocation2 + $0x138] sm:$0xff]
    %v90 = vld [vmem:[#allocation2 + $0x140] sm:$0xff]
    %v91 = vld [vmem:[#allocation2 + $0x148] sm:$0xff]
    %v92 = vld [vmem:[#allocation2 + $0x150] sm:$0xff]
    %v93 = vld [vmem:[#allocation2 + $0x158] sm:$0xff]
    %v94 = vld [vmem:[#allocation2 + $0x160] sm:$0xff]
    %v95 = vld [vmem:[#allocation2 + $0x168] sm:$0xff]
    %v96 = vld [vmem:[#allocation2 + $0x170] sm:$0xff]
    %v97 = vld [vmem:[#allocation2 + $0x178] sm:$0xff]
    %v98 = vld [vmem:[#allocation2 + $0x180] sm:$0xff]
    %v99 = vld [vmem:[#allocation2 + $0x188] sm:$0xff]
    %v100 = vld [vmem:[#allocation2 + $0x190] sm:$0xff]
    %v101 = vld [vmem:[#allocation2 + $0x198] sm:$0xff]
    %v102 = vld [vmem:[#allocation2 + $0x1a0] sm:$0xff]
    %v103 = vld [vmem:[#allocation2 + $0x1a8] sm:$0xff]
    %v104 = vld [vmem:[#allocation2 + $0x1b0] sm:$0xff]
    %v105 = vld [vmem:[#allocation2 + $0x1b8] sm:$0xff]
    %v106 = vld [vmem:[#allocation2 + $0x1c0] sm:$0xff]
    %v107 = vld [vmem:[#allocation2 + $0x1c8] sm:$0xff]
    %v108 = vld [vmem:[#allocation2 + $0x1d0] sm:$0xff]
    %v109 = vld [vmem:[#allocation2 + $0x1d8] sm:$0xff]
    %v110 = vld [vmem:[#allocation2 + $0x1e0] sm:$0xff]
    %v111 = vld [vmem:[#allocation2 + $0x1e8] sm:$0xff]
    %v112 = vld [vmem:[#allocation2 + $0x1f0] sm:$0xff]
    %v113 = vld [vmem:[#allocation2 + $0x1f8] sm:$0xff]
    %v114 = vld [vmem:[#allocation2 + $0x200] sm:$0xff]
    %v115 = vld [vmem:[#allocation2 + $0x208] sm:$0xff]
    %v116 = vld [vmem:[#allocation2 + $0x210] sm:$0xff]
    %v117 = vld [vmem:[#allocation2 + $0x218] sm:$0xff]
    %v118 = vld [vmem:[#allocation2 + $0x220] sm:$0xff]
    %v119 = vld [vmem:[#allocation2 + $0x228] sm:$0xff]
    %v120 = vld [vmem:[#allocation2 + $0x230] sm:$0xff]
    %v121 = vld [vmem:[#allocation2 + $0x238] sm:$0xff]
    %v122 = vld [vmem:[#allocation2 + $0x240] sm:$0xff]
    %v123 = vld [vmem:[#allocation2 + $0x248] sm:$0xff]
    %v124 = vld [vmem:[#allocation2 + $0x250] sm:$0xff]
    %v125 = vld [vmem:[#allocation2 + $0x258] sm:$0xff]
    %v126 = vld [vmem:[#allocation2 + $0x260] sm:$0xff]
    %v127 = vld [vmem:[#allocation2 + $0x268] sm:$0xff]
    %v128 = vld [vmem:[#allocation2 + $0x270] sm:$0xff]
    %v129 = vld [vmem:[#allocation2 + $0x278] sm:$0xff]
    %v130 = vld [vmem:[#allocation2 + $0x280] sm:$0xff]
    %v131 = vld [vmem:[#allocation2 + $0x288] sm:$0xff]
    %v132 = vld [vmem:[#allocation2 + $0x290] sm:$0xff]
    %v133 = vld [vmem:[#allocation2 + $0x298] sm:$0xff]
    %v134 = vld [vmem:[#allocation2 + $0x2a0] sm:$0xff]
    %v135 = vld [vmem:[#allocation2 + $0x2a8] sm:$0xff]
    %v136 = vld [vmem:[#allocation2 + $0x2b0] sm:$0xff]
    %v137 = vld [vmem:[#allocation2 + $0x2b8] sm:$0xff]
    %v138 = vld [vmem:[#allocation2 + $0x2c0] sm:$0xff]
    %v139 = vld [vmem:[#allocation2 + $0x2c8] sm:$0xff]
    %v140 = vld [vmem:[#allocation2 + $0x2d0] sm:$0xff]
    %v141 = vld [vmem:[#allocation2 + $0x2d8] sm:$0xff]
    %v142 = vld [vmem:[#allocation2 + $0x2e0] sm:$0xff]
    %v143 = vld [vmem:[#allocation2 + $0x2e8] sm:$0xff]
    %v144 = vld [vmem:[#allocation2 + $0x2f0] sm:$0xff]
    %v145 = vld [vmem:[#allocation2 + $0x2f8] sm:$0xff]
    %v146 = vld [vmem:[#allocation2 + $0x300] sm:$0xff]
    %v147 = vld [vmem:[#allocation2 + $0x308] sm:$0xff]
    %v148 = vld [vmem:[#allocation2 + $0x310] sm:$0xff]
    %v149 = vld [vmem:[#allocation2 + $0x318] sm:$0xff]
    %v150 = vld [vmem:[#allocation2 + $0x320] sm:$0xff]
    %v151 = vld [vmem:[#allocation2 + $0x328] sm:$0xff]
    %v152 = vld [vmem:[#allocation2 + $0x330] sm:$0xff]
    %v153 = vld [vmem:[#allocation2 + $0x338] sm:$0xff]
    %v154 = vld [vmem:[#allocation2 + $0x340] sm:$0xff]
    %v155 = vld [vmem:[#allocation2 + $0x348] sm:$0xff]
    %v156 = vld [vmem:[#allocation2 + $0x350] sm:$0xff]
    %v157 = vld [vmem:[#allocation2 + $0x358] sm:$0xff]
    %v158 = vld [vmem:[#allocation2 + $0x360] sm:$0xff]
    %v159 = vld [vmem:[#allocation2 + $0x368] sm:$0xff]
    %v160 = vld [vmem:[#allocation2 + $0x370] sm:$0xff]
    %v161 = vld [vmem:[#allocation2 + $0x378] sm:$0xff]
    %v162 = vld [vmem:[#allocation2 + $0x380] sm:$0xff]
    %v163 = vld [vmem:[#allocation2 + $0x388] sm:$0xff]
    %v164 = vld [vmem:[#allocation2 + $0x390] sm:$0xff]
    %v165 = vld [vmem:[#allocation2 + $0x398] sm:$0xff]
    %v166 = vld [vmem:[#allocation2 + $0x3a0] sm:$0xff]
    %v167 = vld [vmem:[#allocation2 + $0x3a8] sm:$0xff]
    %v168 = vld [vmem:[#allocation2 + $0x3b0] sm:$0xff]
    %v169 = vld [vmem:[#allocation2 + $0x3b8] sm:$0xff]
    %v170 = vld [vmem:[#allocation2 + $0x3c0] sm:$0xff]
    %v171 = vld [vmem:[#allocation2 + $0x3c8] sm:$0xff]
    %v172 = vld [vmem:[#allocation2 + $0x3d0] sm:$0xff]
    %v173 = vld [vmem:[#allocation2 + $0x3d8] sm:$0xff]
    %v174 = vld [vmem:[#allocation2 + $0x3e0] sm:$0xff]
    %v175 = vld [vmem:[#allocation2 + $0x3e8] sm:$0xff]
    %v176 = vld [vmem:[#allocation2 + $0x3f0] sm:$0xff]
    %v177 = vld [vmem:[#allocation2 + $0x3f8] sm:$0xff]
    %v178 = vld [vmem:[#allocation2 + $0x400] sm:$0xff]
    %v179 = vld [vmem:[#allocation2 + $0x408] sm:$0xff]
    %v180 = vld [vmem:[#allocation2 + $0x410] sm:$0xff]
    %v181 = vld [vmem:[#allocation2 + $0x418] sm:$0xff]
    %v182 = vld [vmem:[#allocation2 + $0x420] sm:$0xff]
    %v183 = vld [vmem:[#allocation2 + $0x428] sm:$0xff]
    %v184 = vld [vmem:[#allocation2 + $0x430] sm:$0xff]
    %v185 = vld [vmem:[#allocation2 + $0x438] sm:$0xff]
    %v186 = vld [vmem:[#allocation2 + $0x440] sm:$0xff]
    %v187 = vld [vmem:[#allocation2 + $0x448] sm:$0xff]
    %v188 = vld [vmem:[#allocation2 + $0x450] sm:$0xff]
    %v189 = vld [vmem:[#allocation2 + $0x458] sm:$0xff]
    %v190 = vld [vmem:[#allocation2 + $0x460] sm:$0xff]
    %v191 = vld [vmem:[#allocation2 + $0x468] sm:$0xff]
    %v192 = vld [vmem:[#allocation2 + $0x470] sm:$0xff]
    %v193 = vld [vmem:[#allocation2 + $0x478] sm:$0xff]
    %v194 = vld [vmem:[#allocation2 + $0x480] sm:$0xff]
    %v195 = vld [vmem:[#allocation2 + $0x488] sm:$0xff]
    %v196 = vld [vmem:[#allocation2 + $0x490] sm:$0xff]
    %v197 = vld [vmem:[#allocation2 + $0x498] sm:$0xff]
    %v198 = vld [vmem:[#allocation2 + $0x4a0] sm:$0xff]
    %v199 = vld [vmem:[#allocation2 + $0x4a8] sm:$0xff]
    %v200 = vld [vmem:[#allocation2 + $0x4b0] sm:$0xff]
    %v201 = vld [vmem:[#allocation2 + $0x4b8] sm:$0xff]
    %v202 = vld [vmem:[#allocation2 + $0x4c0] sm:$0xff]
    %v203 = vld [vmem:[#allocation2 + $0x4c8] sm:$0xff]
    %v204 = vld [vmem:[#allocation2 + $0x4d0] sm:$0xff]
    %v205 = vld [vmem:[#allocation2 + $0x4d8] sm:$0xff]
    %v206 = vld [vmem:[#allocation2 + $0x4e0] sm:$0xff]
    %v207 = vld [vmem:[#allocation2 + $0x4e8] sm:$0xff]
    %v208 = vld [vmem:[#allocation2 + $0x4f0] sm:$0xff]
    %v209 = vld [vmem:[#allocation2 + $0x4f8] sm:$0xff]
    %v210 = vld [vmem:[#allocation2 + $0x500] sm:$0xff]
    %v211 = vld [vmem:[#allocation2 + $0x508] sm:$0xff]
    %v212 = vld [vmem:[#allocation2 + $0x510] sm:$0xff]
    %v213 = vld [vmem:[#allocation2 + $0x518] sm:$0xff]
    %v214 = vld [vmem:[#allocation2 + $0x520] sm:$0xff]
    %v215 = vld [vmem:[#allocation2 + $0x528] sm:$0xff]
    %v216 = vld [vmem:[#allocation2 + $0x530] sm:$0xff]
    %v217 = vld [vmem:[#allocation2 + $0x538] sm:$0xff]
    %v218 = vld [vmem:[#allocation2 + $0x540] sm:$0xff]
    %v219 = vld [vmem:[#allocation2 + $0x548] sm:$0xff]
    %v220 = vld [vmem:[#allocation2 + $0x550] sm:$0xff]
    %v221 = vld [vmem:[#allocation2 + $0x558] sm:$0xff]
    %v222 = vld [vmem:[#allocation2 + $0x560] sm:$0xff]
    %v223 = vld [vmem:[#allocation2 + $0x568] sm:$0xff]
    %v224 = vld [vmem:[#allocation2 + $0x570] sm:$0xff]
    %v225 = vld [vmem:[#allocation2 + $0x578] sm:$0xff]
    %v226 = vld [vmem:[#allocation2 + $0x580] sm:$0xff]
    %v227 = vld [vmem:[#allocation2 + $0x588] sm:$0xff]
    %v228 = vld [vmem:[#allocation2 + $0x590] sm:$0xff]
    %v229 = vld [vmem:[#allocation2 + $0x598] sm:$0xff]
    %v230 = vld [vmem:[#allocation2 + $0x5a0] sm:$0xff]
    %v231 = vld [vmem:[#allocation2 + $0x5a8] sm:$0xff]
    %v232 = vld [vmem:[#allocation2 + $0x5b0] sm:$0xff]
    %v233 = vld [vmem:[#allocation2 + $0x5b8] sm:$0xff]
    %v234 = vld [vmem:[#allocation2 + $0x5c0] sm:$0xff]
    %v235 = vld [vmem:[#allocation2 + $0x5c8] sm:$0xff]
    %v236 = vld [vmem:[#allocation2 + $0x5d0] sm:$0xff]
    %v237 = vld [vmem:[#allocation2 + $0x5d8] sm:$0xff]
    %v238 = vld [vmem:[#allocation2 + $0x5e0] sm:$0xff]
    %v239 = vld [vmem:[#allocation2 + $0x5e8] sm:$0xff]
    %v240 = vld [vmem:[#allocation2 + $0x5f0] sm:$0xff]
    %v241 = vld [vmem:[#allocation2 + $0x5f8] sm:$0xff]
    %v242 = vld [vmem:[#allocation2 + $0x600] sm:$0xff]
    %v243 = vld [vmem:[#allocation2 + $0x608] sm:$0xff]
    %v244 = vld [vmem:[#allocation2 + $0x610] sm:$0xff]
    %v245 = vld [vmem:[#allocation2 + $0x618] sm:$0xff]
    %v246 = vld [vmem:[#allocation2 + $0x620] sm:$0xff]
    %v247 = vld [vmem:[#allocation2 + $0x628] sm:$0xff]
    %v248 = vld [vmem:[#allocation2 + $0x630] sm:$0xff]
    %v249 = vld [vmem:[#allocation2 + $0x638] sm:$0xff]
    %v250 = vld [vmem:[#allocation2 + $0x640] sm:$0xff]
    %v251 = vld [vmem:[#allocation2 + $0x648] sm:$0xff]
    %v252 = vld [vmem:[#allocation2 + $0x650] sm:$0xff]
    %v253 = vld [vmem:[#allocation2 + $0x658] sm:$0xff]
    %v254 = vld [vmem:[#allocation2 + $0x660] sm:$0xff]
    %v255 = vld [vmem:[#allocation2 + $0x668] sm:$0xff]
    %v256 = vld [vmem:[#allocation2 + $0x670] sm:$0xff]
    %v257 = vld [vmem:[#allocation2 + $0x678] sm:$0xff]
    %v258 = vld [vmem:[#allocation2 + $0x680] sm:$0xff]
    %v259 = vld [vmem:[#allocation2 + $0x688] sm:$0xff]
    %v260 = vld [vmem:[#allocation2 + $0x690] sm:$0xff]
    %v261 = vld [vmem:[#allocation2 + $0x698] sm:$0xff]
    %v262 = vld [vmem:[#allocation2 + $0x6a0] sm:$0xff]
    %v263 = vld [vmem:[#allocation2 + $0x6a8] sm:$0xff]
    %v264 = vld [vmem:[#allocation2 + $0x6b0] sm:$0xff]
    %v265 = vld [vmem:[#allocation2 + $0x6b8] sm:$0xff]
    %v266 = vld [vmem:[#allocation2 + $0x6c0] sm:$0xff]
    %v267 = vld [vmem:[#allocation2 + $0x6c8] sm:$0xff]
    %v268 = vld [vmem:[#allocation2 + $0x6d0] sm:$0xff]
    %v269 = vld [vmem:[#allocation2 + $0x6d8] sm:$0xff]
    %v270 = vld [vmem:[#allocation2 + $0x6e0] sm:$0xff]
    %v271 = vld [vmem:[#allocation2 + $0x6e8] sm:$0xff]
    %v272 = vld [vmem:[#allocation2 + $0x6f0] sm:$0xff]
    %v273 = vld [vmem:[#allocation2 + $0x6f8] sm:$0xff]
    %v274 = vld [vmem:[#allocation2 + $0x700] sm:$0xff]
    %v275 = vld [vmem:[#allocation2 + $0x708] sm:$0xff]
    %v276 = vld [vmem:[#allocation2 + $0x710] sm:$0xff]
    %v277 = vld [vmem:[#allocation2 + $0x718] sm:$0xff]
    %v278 = vld [vmem:[#allocation2 + $0x720] sm:$0xff]
    %v279 = vld [vmem:[#allocation2 + $0x728] sm:$0xff]
    %v280 = vld [vmem:[#allocation2 + $0x730] sm:$0xff]
    %v281 = vld [vmem:[#allocation2 + $0x738] sm:$0xff]
    %v282 = vld [vmem:[#allocation2 + $0x740] sm:$0xff]
    %v283 = vld [vmem:[#allocation2 + $0x748] sm:$0xff]
    %v284 = vld [vmem:[#allocation2 + $0x750] sm:$0xff]
    %v285 = vld [vmem:[#allocation2 + $0x758] sm:$0xff]
    %v286 = vld [vmem:[#allocation2 + $0x760] sm:$0xff]
    %v287 = vld [vmem:[#allocation2 + $0x768] sm:$0xff]
    %v288 = vld [vmem:[#allocation2 + $0x770] sm:$0xff]
    %v289 = vld [vmem:[#allocation2 + $0x778] sm:$0xff]
    %v290 = vld [vmem:[#allocation2 + $0x780] sm:$0xff]
    %v291 = vld [vmem:[#allocation2 + $0x788] sm:$0xff]
    %v292 = vld [vmem:[#allocation2 + $0x790] sm:$0xff]
    %v293 = vld [vmem:[#allocation2 + $0x798] sm:$0xff]
    %v294 = vld [vmem:[#allocation2 + $0x7a0] sm:$0xff]
    %v295 = vld [vmem:[#allocation2 + $0x7a8] sm:$0xff]
    %v296 = vld [vmem:[#allocation2 + $0x7b0] sm:$0xff]
    %v297 = vld [vmem:[#allocation2 + $0x7b8] sm:$0xff]
    %v298 = vld [vmem:[#allocation2 + $0x7c0] sm:$0xff]
    %v299 = vld [vmem:[#allocation2 + $0x7c8] sm:$0xff]
    %v300 = vld [vmem:[#allocation2 + $0x7d0] sm:$0xff]
    %v301 = vld [vmem:[#allocation2 + $0x7d8] sm:$0xff]
    %v302 = vld [vmem:[#allocation2 + $0x7e0] sm:$0xff]
    %v303 = vld [vmem:[#allocation2 + $0x7e8] sm:$0xff]
    %v304 = vld [vmem:[#allocation2 + $0x7f0] sm:$0xff]
    %v305 = vld [vmem:[#allocation2 + $0x7f8] sm:$0xff]
    %v306 = vld [vmem:[%s2] sm:$0xf]
    %v308 = vperm.slane %v306, 0
    %v309 = vperm.slane %v306, 1
    %v310 = vperm.slane %v306, 2
    %v311 = vperm.slane %v306, 3
    %v324 = vunpack.c.l.b16 %v42
    %v325 = vunpack.c.h.b16 %v42
    %v326 = vunpack.c.l.b16 %v43
    %v327 = vunpack.c.h.b16 %v43
    %v328 = vunpack.c.l.b16 %v44
    %v329 = vunpack.c.h.b16 %v44
    %v330 = vunpack.c.l.b16 %v45
    %v331 = vunpack.c.h.b16 %v45
    %v332 = vunpack.c.l.b16 %v46
    %v333 = vunpack.c.h.b16 %v46
    %v334 = vunpack.c.l.b16 %v47
    %v335 = vunpack.c.h.b16 %v47
    %v336 = vunpack.c.l.b16 %v48
    %v337 = vunpack.c.h.b16 %v48
    %v338 = vunpack.c.l.b16 %v49
    %v339 = vunpack.c.h.b16 %v49
    %v340 = vpack.c.b16 %v332, %v324
    %v341 = vpack.c.b16 %v333, %v325
    %v342 = vpack.c.b16 %v334, %v326
    %v343 = vpack.c.b16 %v335, %v327
    %v344 = vpack.c.b16 %v336, %v328
    %v345 = vpack.c.b16 %v337, %v329
    %v346 = vpack.c.b16 %v338, %v330
    %v347 = vpack.c.b16 %v339, %v331
    %v612 = vunpack.c.l.b16 %v50
    %v613 = vunpack.c.h.b16 %v50
    %v614 = vunpack.c.l.b16 %v51
    %v615 = vunpack.c.h.b16 %v51
    %v616 = vunpack.c.l.b16 %v52
    %v617 = vunpack.c.h.b16 %v52
    %v618 = vunpack.c.l.b16 %v53
    %v619 = vunpack.c.h.b16 %v53
    %v620 = vunpack.c.l.b16 %v54
    %v621 = vunpack.c.h.b16 %v54
    %v622 = vunpack.c.l.b16 %v55
    %v623 = vunpack.c.h.b16 %v55
    %v624 = vunpack.c.l.b16 %v56
    %v625 = vunpack.c.h.b16 %v56
    %v626 = vunpack.c.l.b16 %v57
    %v627 = vunpack.c.h.b16 %v57
    %v628 = vunpack.c.l.b16 %v58
    %v629 = vunpack.c.h.b16 %v58
    %v630 = vunpack.c.l.b16 %v59
    %v631 = vunpack.c.h.b16 %v59
    %v632 = vunpack.c.l.b16 %v60
    %v633 = vunpack.c.h.b16 %v60
    %v634 = vunpack.c.l.b16 %v61
    %v635 = vunpack.c.h.b16 %v61
    %v636 = vunpack.c.l.b16 %v62
    %v637 = vunpack.c.h.b16 %v62
    %v638 = vunpack.c.l.b16 %v63
    %v639 = vunpack.c.h.b16 %v63
    %v640 = vunpack.c.l.b16 %v64
    %v641 = vunpack.c.h.b16 %v64
    %v642 = vunpack.c.l.b16 %v65
    %v643 = vunpack.c.h.b16 %v65
    %v644 = vunpack.c.l.b16 %v66
    %v645 = vunpack.c.h.b16 %v66
    %v646 = vunpack.c.l.b16 %v67
    %v647 = vunpack.c.h.b16 %v67
    %v648 = vunpack.c.l.b16 %v68
    %v649 = vunpack.c.h.b16 %v68
    %v650 = vunpack.c.l.b16 %v69
    %v651 = vunpack.c.h.b16 %v69
    %v652 = vunpack.c.l.b16 %v70
    %v653 = vunpack.c.h.b16 %v70
    %v654 = vunpack.c.l.b16 %v71
    %v655 = vunpack.c.h.b16 %v71
    %v656 = vunpack.c.l.b16 %v72
    %v657 = vunpack.c.h.b16 %v72
    %v658 = vunpack.c.l.b16 %v73
    %v659 = vunpack.c.h.b16 %v73
    %v660 = vunpack.c.l.b16 %v74
    %v661 = vunpack.c.h.b16 %v74
    %v662 = vunpack.c.l.b16 %v75
    %v663 = vunpack.c.h.b16 %v75
    %v664 = vunpack.c.l.b16 %v76
    %v665 = vunpack.c.h.b16 %v76
    %v666 = vunpack.c.l.b16 %v77
    %v667 = vunpack.c.h.b16 %v77
    %v668 = vunpack.c.l.b16 %v78
    %v669 = vunpack.c.h.b16 %v78
    %v670 = vunpack.c.l.b16 %v79
    %v671 = vunpack.c.h.b16 %v79
    %v672 = vunpack.c.l.b16 %v80
    %v673 = vunpack.c.h.b16 %v80
    %v674 = vunpack.c.l.b16 %v81
    %v675 = vunpack.c.h.b16 %v81
    %v676 = vunpack.c.l.b16 %v82
    %v677 = vunpack.c.h.b16 %v82
    %v678 = vunpack.c.l.b16 %v83
    %v679 = vunpack.c.h.b16 %v83
    %v680 = vunpack.c.l.b16 %v84
    %v681 = vunpack.c.h.b16 %v84
    %v682 = vunpack.c.l.b16 %v85
    %v683 = vunpack.c.h.b16 %v85
    %v684 = vunpack.c.l.b16 %v86
    %v685 = vunpack.c.h.b16 %v86
    %v686 = vunpack.c.l.b16 %v87
    %v687 = vunpack.c.h.b16 %v87
    %v688 = vunpack.c.l.b16 %v88
    %v689 = vunpack.c.h.b16 %v88
    %v690 = vunpack.c.l.b16 %v89
    %v691 = vunpack.c.h.b16 %v89
    %v692 = vunpack.c.l.b16 %v90
    %v693 = vunpack.c.h.b16 %v90
    %v694 = vunpack.c.l.b16 %v91
    %v695 = vunpack.c.h.b16 %v91
    %v696 = vunpack.c.l.b16 %v92
    %v697 = vunpack.c.h.b16 %v92
    %v698 = vunpack.c.l.b16 %v93
    %v699 = vunpack.c.h.b16 %v93
    %v700 = vunpack.c.l.b16 %v94
    %v701 = vunpack.c.h.b16 %v94
    %v702 = vunpack.c.l.b16 %v95
    %v703 = vunpack.c.h.b16 %v95
    %v704 = vunpack.c.l.b16 %v96
    %v705 = vunpack.c.h.b16 %v96
    %v706 = vunpack.c.l.b16 %v97
    %v707 = vunpack.c.h.b16 %v97
    %v708 = vunpack.c.l.b16 %v98
    %v709 = vunpack.c.h.b16 %v98
    %v710 = vunpack.c.l.b16 %v99
    %v711 = vunpack.c.h.b16 %v99
    %v712 = vunpack.c.l.b16 %v100
    %v713 = vunpack.c.h.b16 %v100
    %v714 = vunpack.c.l.b16 %v101
    %v715 = vunpack.c.h.b16 %v101
    %v716 = vunpack.c.l.b16 %v102
    %v717 = vunpack.c.h.b16 %v102
    %v718 = vunpack.c.l.b16 %v103
    %v719 = vunpack.c.h.b16 %v103
    %v720 = vunpack.c.l.b16 %v104
    %v721 = vunpack.c.h.b16 %v104
    %v722 = vunpack.c.l.b16 %v105
    %v723 = vunpack.c.h.b16 %v105
    %v724 = vunpack.c.l.b16 %v106
    %v725 = vunpack.c.h.b16 %v106
    %v726 = vunpack.c.l.b16 %v107
    %v727 = vunpack.c.h.b16 %v107
    %v728 = vunpack.c.l.b16 %v108
    %v729 = vunpack.c.h.b16 %v108
    %v730 = vunpack.c.l.b16 %v109
    %v731 = vunpack.c.h.b16 %v109
    %v732 = vunpack.c.l.b16 %v110
    %v733 = vunpack.c.h.b16 %v110
    %v734 = vunpack.c.l.b16 %v111
    %v735 = vunpack.c.h.b16 %v111
    %v736 = vunpack.c.l.b16 %v112
    %v737 = vunpack.c.h.b16 %v112
    %v738 = vunpack.c.l.b16 %v113
    %v739 = vunpack.c.h.b16 %v113
    %v740 = vunpack.c.l.b16 %v114
    %v741 = vunpack.c.h.b16 %v114
    %v742 = vunpack.c.l.b16 %v115
    %v743 = vunpack.c.h.b16 %v115
    %v744 = vunpack.c.l.b16 %v116
    %v745 = vunpack.c.h.b16 %v116
    %v746 = vunpack.c.l.b16 %v117
    %v747 = vunpack.c.h.b16 %v117
    %v748 = vunpack.c.l.b16 %v118
    %v749 = vunpack.c.h.b16 %v118
    %v750 = vunpack.c.l.b16 %v119
    %v751 = vunpack.c.h.b16 %v119
    %v752 = vunpack.c.l.b16 %v120
    %v753 = vunpack.c.h.b16 %v120
    %v754 = vunpack.c.l.b16 %v121
    %v755 = vunpack.c.h.b16 %v121
    %v756 = vunpack.c.l.b16 %v122
    %v757 = vunpack.c.h.b16 %v122
    %v758 = vunpack.c.l.b16 %v123
    %v759 = vunpack.c.h.b16 %v123
    %v760 = vunpack.c.l.b16 %v124
    %v761 = vunpack.c.h.b16 %v124
    %v762 = vunpack.c.l.b16 %v125
    %v763 = vunpack.c.h.b16 %v125
    %v764 = vunpack.c.l.b16 %v126
    %v765 = vunpack.c.h.b16 %v126
    %v766 = vunpack.c.l.b16 %v127
    %v767 = vunpack.c.h.b16 %v127
    %v768 = vunpack.c.l.b16 %v128
    %v769 = vunpack.c.h.b16 %v128
    %v770 = vunpack.c.l.b16 %v129
    %v771 = vunpack.c.h.b16 %v129
    %v772 = vunpack.c.l.b16 %v130
    %v773 = vunpack.c.h.b16 %v130
    %v774 = vunpack.c.l.b16 %v131
    %v775 = vunpack.c.h.b16 %v131
    %v776 = vunpack.c.l.b16 %v132
    %v777 = vunpack.c.h.b16 %v132
    %v778 = vunpack.c.l.b16 %v133
    %v779 = vunpack.c.h.b16 %v133
    %v780 = vunpack.c.l.b16 %v134
    %v781 = vunpack.c.h.b16 %v134
    %v782 = vunpack.c.l.b16 %v135
    %v783 = vunpack.c.h.b16 %v135
    %v784 = vunpack.c.l.b16 %v136
    %v785 = vunpack.c.h.b16 %v136
    %v786 = vunpack.c.l.b16 %v137
    %v787 = vunpack.c.h.b16 %v137
    %v788 = vunpack.c.l.b16 %v138
    %v789 = vunpack.c.h.b16 %v138
    %v790 = vunpack.c.l.b16 %v139
    %v791 = vunpack.c.h.b16 %v139
    %v792 = vunpack.c.l.b16 %v140
    %v793 = vunpack.c.h.b16 %v140
    %v794 = vunpack.c.l.b16 %v141
    %v795 = vunpack.c.h.b16 %v141
    %v796 = vunpack.c.l.b16 %v142
    %v797 = vunpack.c.h.b16 %v142
    %v798 = vunpack.c.l.b16 %v143
    %v799 = vunpack.c.h.b16 %v143
    %v800 = vunpack.c.l.b16 %v144
    %v801 = vunpack.c.h.b16 %v144
    %v802 = vunpack.c.l.b16 %v145
    %v803 = vunpack.c.h.b16 %v145
    %v804 = vunpack.c.l.b16 %v146
    %v805 = vunpack.c.h.b16 %v146
    %v806 = vunpack.c.l.b16 %v147
    %v807 = vunpack.c.h.b16 %v147
    %v808 = vunpack.c.l.b16 %v148
    %v809 = vunpack.c.h.b16 %v148
    %v810 = vunpack.c.l.b16 %v149
    %v811 = vunpack.c.h.b16 %v149
    %v812 = vunpack.c.l.b16 %v150
    %v813 = vunpack.c.h.b16 %v150
    %v814 = vunpack.c.l.b16 %v151
    %v815 = vunpack.c.h.b16 %v151
    %v816 = vunpack.c.l.b16 %v152
    %v817 = vunpack.c.h.b16 %v152
    %v818 = vunpack.c.l.b16 %v153
    %v819 = vunpack.c.h.b16 %v153
    %v820 = vunpack.c.l.b16 %v154
    %v821 = vunpack.c.h.b16 %v154
    %v822 = vunpack.c.l.b16 %v155
    %v823 = vunpack.c.h.b16 %v155
    %v824 = vunpack.c.l.b16 %v156
    %v825 = vunpack.c.h.b16 %v156
    %v826 = vunpack.c.l.b16 %v157
    %v827 = vunpack.c.h.b16 %v157
    %v828 = vunpack.c.l.b16 %v158
    %v829 = vunpack.c.h.b16 %v158
    %v830 = vunpack.c.l.b16 %v159
    %v831 = vunpack.c.h.b16 %v159
    %v832 = vunpack.c.l.b16 %v160
    %v833 = vunpack.c.h.b16 %v160
    %v834 = vunpack.c.l.b16 %v161
    %v835 = vunpack.c.h.b16 %v161
    %v836 = vunpack.c.l.b16 %v162
    %v837 = vunpack.c.h.b16 %v162
    %v838 = vunpack.c.l.b16 %v163
    %v839 = vunpack.c.h.b16 %v163
    %v840 = vunpack.c.l.b16 %v164
    %v841 = vunpack.c.h.b16 %v164
    %v842 = vunpack.c.l.b16 %v165
    %v843 = vunpack.c.h.b16 %v165
    %v844 = vunpack.c.l.b16 %v166
    %v845 = vunpack.c.h.b16 %v166
    %v846 = vunpack.c.l.b16 %v167
    %v847 = vunpack.c.h.b16 %v167
    %v848 = vunpack.c.l.b16 %v168
    %v849 = vunpack.c.h.b16 %v168
    %v850 = vunpack.c.l.b16 %v169
    %v851 = vunpack.c.h.b16 %v169
    %v852 = vunpack.c.l.b16 %v170
    %v853 = vunpack.c.h.b16 %v170
    %v854 = vunpack.c.l.b16 %v171
    %v855 = vunpack.c.h.b16 %v171
    %v856 = vunpack.c.l.b16 %v172
    %v857 = vunpack.c.h.b16 %v172
    %v858 = vunpack.c.l.b16 %v173
    %v859 = vunpack.c.h.b16 %v173
    %v860 = vunpack.c.l.b16 %v174
    %v861 = vunpack.c.h.b16 %v174
    %v862 = vunpack.c.l.b16 %v175
    %v863 = vunpack.c.h.b16 %v175
    %v864 = vunpack.c.l.b16 %v176
    %v865 = vunpack.c.h.b16 %v176
    %v866 = vunpack.c.l.b16 %v177
    %v867 = vunpack.c.h.b16 %v177
    %v868 = vunpack.c.l.b16 %v178
    %v869 = vunpack.c.h.b16 %v178
    %v870 = vunpack.c.l.b16 %v179
    %v871 = vunpack.c.h.b16 %v179
    %v872 = vunpack.c.l.b16 %v180
    %v873 = vunpack.c.h.b16 %v180
    %v874 = vunpack.c.l.b16 %v181
    %v875 = vunpack.c.h.b16 %v181
    %v876 = vunpack.c.l.b16 %v182
    %v877 = vunpack.c.h.b16 %v182
    %v878 = vunpack.c.l.b16 %v183
    %v879 = vunpack.c.h.b16 %v183
    %v880 = vunpack.c.l.b16 %v184
    %v881 = vunpack.c.h.b16 %v184
    %v882 = vunpack.c.l.b16 %v185
    %v883 = vunpack.c.h.b16 %v185
    %v884 = vunpack.c.l.b16 %v186
    %v885 = vunpack.c.h.b16 %v186
    %v886 = vunpack.c.l.b16 %v187
    %v887 = vunpack.c.h.b16 %v187
    %v888 = vunpack.c.l.b16 %v188
    %v889 = vunpack.c.h.b16 %v188
    %v890 = vunpack.c.l.b16 %v189
    %v891 = vunpack.c.h.b16 %v189
    %v892 = vunpack.c.l.b16 %v190
    %v893 = vunpack.c.h.b16 %v190
    %v894 = vunpack.c.l.b16 %v191
    %v895 = vunpack.c.h.b16 %v191
    %v896 = vunpack.c.l.b16 %v192
    %v897 = vunpack.c.h.b16 %v192
    %v898 = vunpack.c.l.b16 %v193
    %v899 = vunpack.c.h.b16 %v193
    %v900 = vunpack.c.l.b16 %v194
    %v901 = vunpack.c.h.b16 %v194
    %v902 = vunpack.c.l.b16 %v195
    %v903 = vunpack.c.h.b16 %v195
    %v904 = vunpack.c.l.b16 %v196
    %v905 = vunpack.c.h.b16 %v196
    %v906 = vunpack.c.l.b16 %v197
    %v907 = vunpack.c.h.b16 %v197
    %v908 = vunpack.c.l.b16 %v198
    %v909 = vunpack.c.h.b16 %v198
    %v910 = vunpack.c.l.b16 %v199
    %v911 = vunpack.c.h.b16 %v199
    %v912 = vunpack.c.l.b16 %v200
    %v913 = vunpack.c.h.b16 %v200
    %v914 = vunpack.c.l.b16 %v201
    %v915 = vunpack.c.h.b16 %v201
    %v916 = vunpack.c.l.b16 %v202
    %v917 = vunpack.c.h.b16 %v202
    %v918 = vunpack.c.l.b16 %v203
    %v919 = vunpack.c.h.b16 %v203
    %v920 = vunpack.c.l.b16 %v204
    %v921 = vunpack.c.h.b16 %v204
    %v922 = vunpack.c.l.b16 %v205
    %v923 = vunpack.c.h.b16 %v205
    %v924 = vunpack.c.l.b16 %v206
    %v925 = vunpack.c.h.b16 %v206
    %v926 = vunpack.c.l.b16 %v207
    %v927 = vunpack.c.h.b16 %v207
    %v928 = vunpack.c.l.b16 %v208
    %v929 = vunpack.c.h.b16 %v208
    %v930 = vunpack.c.l.b16 %v209
    %v931 = vunpack.c.h.b16 %v209
    %v932 = vunpack.c.l.b16 %v210
    %v933 = vunpack.c.h.b16 %v210
    %v934 = vunpack.c.l.b16 %v211
    %v935 = vunpack.c.h.b16 %v211
    %v936 = vunpack.c.l.b16 %v212
    %v937 = vunpack.c.h.b16 %v212
    %v938 = vunpack.c.l.b16 %v213
    %v939 = vunpack.c.h.b16 %v213
    %v940 = vunpack.c.l.b16 %v214
    %v941 = vunpack.c.h.b16 %v214
    %v942 = vunpack.c.l.b16 %v215
    %v943 = vunpack.c.h.b16 %v215
    %v944 = vunpack.c.l.b16 %v216
    %v945 = vunpack.c.h.b16 %v216
    %v946 = vunpack.c.l.b16 %v217
    %v947 = vunpack.c.h.b16 %v217
    %v948 = vunpack.c.l.b16 %v218
    %v949 = vunpack.c.h.b16 %v218
    %v950 = vunpack.c.l.b16 %v219
    %v951 = vunpack.c.h.b16 %v219
    %v952 = vunpack.c.l.b16 %v220
    %v953 = vunpack.c.h.b16 %v220
    %v954 = vunpack.c.l.b16 %v221
    %v955 = vunpack.c.h.b16 %v221
    %v956 = vunpack.c.l.b16 %v222
    %v957 = vunpack.c.h.b16 %v222
    %v958 = vunpack.c.l.b16 %v223
    %v959 = vunpack.c.h.b16 %v223
    %v960 = vunpack.c.l.b16 %v224
    %v961 = vunpack.c.h.b16 %v224
    %v962 = vunpack.c.l.b16 %v225
    %v963 = vunpack.c.h.b16 %v225
    %v964 = vunpack.c.l.b16 %v226
    %v965 = vunpack.c.h.b16 %v226
    %v966 = vunpack.c.l.b16 %v227
    %v967 = vunpack.c.h.b16 %v227
    %v968 = vunpack.c.l.b16 %v228
    %v969 = vunpack.c.h.b16 %v228
    %v970 = vunpack.c.l.b16 %v229
    %v971 = vunpack.c.h.b16 %v229
    %v972 = vunpack.c.l.b16 %v230
    %v973 = vunpack.c.h.b16 %v230
    %v974 = vunpack.c.l.b16 %v231
    %v975 = vunpack.c.h.b16 %v231
    %v976 = vunpack.c.l.b16 %v232
    %v977 = vunpack.c.h.b16 %v232
    %v978 = vunpack.c.l.b16 %v233
    %v979 = vunpack.c.h.b16 %v233
    %v980 = vunpack.c.l.b16 %v234
    %v981 = vunpack.c.h.b16 %v234
    %v982 = vunpack.c.l.b16 %v235
    %v983 = vunpack.c.h.b16 %v235
    %v984 = vunpack.c.l.b16 %v236
    %v985 = vunpack.c.h.b16 %v236
    %v986 = vunpack.c.l.b16 %v237
    %v987 = vunpack.c.h.b16 %v237
    %v988 = vunpack.c.l.b16 %v238
    %v989 = vunpack.c.h.b16 %v238
    %v990 = vunpack.c.l.b16 %v239
    %v991 = vunpack.c.h.b16 %v239
    %v992 = vunpack.c.l.b16 %v240
    %v993 = vunpack.c.h.b16 %v240
    %v994 = vunpack.c.l.b16 %v241
    %v995 = vunpack.c.h.b16 %v241
    %v996 = vunpack.c.l.b16 %v242
    %v997 = vunpack.c.h.b16 %v242
    %v998 = vunpack.c.l.b16 %v243
    %v999 = vunpack.c.h.b16 %v243
    %v1000 = vunpack.c.l.b16 %v244
    %v1001 = vunpack.c.h.b16 %v244
    %v1002 = vunpack.c.l.b16 %v245
    %v1003 = vunpack.c.h.b16 %v245
    %v1004 = vunpack.c.l.b16 %v246
    %v1005 = vunpack.c.h.b16 %v246
    %v1006 = vunpack.c.l.b16 %v247
    %v1007 = vunpack.c.h.b16 %v247
    %v1008 = vunpack.c.l.b16 %v248
    %v1009 = vunpack.c.h.b16 %v248
    %v1010 = vunpack.c.l.b16 %v249
    %v1011 = vunpack.c.h.b16 %v249
    %v1012 = vunpack.c.l.b16 %v250
    %v1013 = vunpack.c.h.b16 %v250
    %v1014 = vunpack.c.l.b16 %v251
    %v1015 = vunpack.c.h.b16 %v251
    %v1016 = vunpack.c.l.b16 %v252
    %v1017 = vunpack.c.h.b16 %v252
    %v1018 = vunpack.c.l.b16 %v253
    %v1019 = vunpack.c.h.b16 %v253
    %v1020 = vunpack.c.l.b16 %v254
    %v1021 = vunpack.c.h.b16 %v254
    %v1022 = vunpack.c.l.b16 %v255
    %v1023 = vunpack.c.h.b16 %v255
    %v1024 = vunpack.c.l.b16 %v256
    %v1025 = vunpack.c.h.b16 %v256
    %v1026 = vunpack.c.l.b16 %v257
    %v1027 = vunpack.c.h.b16 %v257
    %v1028 = vunpack.c.l.b16 %v258
    %v1029 = vunpack.c.h.b16 %v258
    %v1030 = vunpack.c.l.b16 %v259
    %v1031 = vunpack.c.h.b16 %v259
    %v1032 = vunpack.c.l.b16 %v260
    %v1033 = vunpack.c.h.b16 %v260
    %v1034 = vunpack.c.l.b16 %v261
    %v1035 = vunpack.c.h.b16 %v261
    %v1036 = vunpack.c.l.b16 %v262
    %v1037 = vunpack.c.h.b16 %v262
    %v1038 = vunpack.c.l.b16 %v263
    %v1039 = vunpack.c.h.b16 %v263
    %v1040 = vunpack.c.l.b16 %v264
    %v1041 = vunpack.c.h.b16 %v264
    %v1042 = vunpack.c.l.b16 %v265
    %v1043 = vunpack.c.h.b16 %v265
    %v1044 = vunpack.c.l.b16 %v266
    %v1045 = vunpack.c.h.b16 %v266
    %v1046 = vunpack.c.l.b16 %v267
    %v1047 = vunpack.c.h.b16 %v267
    %v1048 = vunpack.c.l.b16 %v268
    %v1049 = vunpack.c.h.b16 %v268
    %v1050 = vunpack.c.l.b16 %v269
    %v1051 = vunpack.c.h.b16 %v269
    %v1052 = vunpack.c.l.b16 %v270
    %v1053 = vunpack.c.h.b16 %v270
    %v1054 = vunpack.c.l.b16 %v271
    %v1055 = vunpack.c.h.b16 %v271
    %v1056 = vunpack.c.l.b16 %v272
    %v1057 = vunpack.c.h.b16 %v272
    %v1058 = vunpack.c.l.b16 %v273
    %v1059 = vunpack.c.h.b16 %v273
    %v1060 = vunpack.c.l.b16 %v274
    %v1061 = vunpack.c.h.b16 %v274
    %v1062 = vunpack.c.l.b16 %v275
    %v1063 = vunpack.c.h.b16 %v275
    %v1064 = vunpack.c.l.b16 %v276
    %v1065 = vunpack.c.h.b16 %v276
    %v1066 = vunpack.c.l.b16 %v277
    %v1067 = vunpack.c.h.b16 %v277
    %v1068 = vunpack.c.l.b16 %v278
    %v1069 = vunpack.c.h.b16 %v278
    %v1070 = vunpack.c.l.b16 %v279
    %v1071 = vunpack.c.h.b16 %v279
    %v1072 = vunpack.c.l.b16 %v280
    %v1073 = vunpack.c.h.b16 %v280
    %v1074 = vunpack.c.l.b16 %v281
    %v1075 = vunpack.c.h.b16 %v281
    %v1076 = vunpack.c.l.b16 %v282
    %v1077 = vunpack.c.h.b16 %v282
    %v1078 = vunpack.c.l.b16 %v283
    %v1079 = vunpack.c.h.b16 %v283
    %v1080 = vunpack.c.l.b16 %v284
    %v1081 = vunpack.c.h.b16 %v284
    %v1082 = vunpack.c.l.b16 %v285
    %v1083 = vunpack.c.h.b16 %v285
    %v1084 = vunpack.c.l.b16 %v286
    %v1085 = vunpack.c.h.b16 %v286
    %v1086 = vunpack.c.l.b16 %v287
    %v1087 = vunpack.c.h.b16 %v287
    %v1088 = vunpack.c.l.b16 %v288
    %v1089 = vunpack.c.h.b16 %v288
    %v1090 = vunpack.c.l.b16 %v289
    %v1091 = vunpack.c.h.b16 %v289
    %v1092 = vunpack.c.l.b16 %v290
    %v1093 = vunpack.c.h.b16 %v290
    %v1094 = vunpack.c.l.b16 %v291
    %v1095 = vunpack.c.h.b16 %v291
    %v1096 = vunpack.c.l.b16 %v292
    %v1097 = vunpack.c.h.b16 %v292
    %v1098 = vunpack.c.l.b16 %v293
    %v1099 = vunpack.c.h.b16 %v293
    %v1100 = vunpack.c.l.b16 %v294
    %v1101 = vunpack.c.h.b16 %v294
    %v1102 = vunpack.c.l.b16 %v295
    %v1103 = vunpack.c.h.b16 %v295
    %v1104 = vunpack.c.l.b16 %v296
    %v1105 = vunpack.c.h.b16 %v296
    %v1106 = vunpack.c.l.b16 %v297
    %v1107 = vunpack.c.h.b16 %v297
    %v1108 = vunpack.c.l.b16 %v298
    %v1109 = vunpack.c.h.b16 %v298
    %v1110 = vunpack.c.l.b16 %v299
    %v1111 = vunpack.c.h.b16 %v299
    %v1112 = vunpack.c.l.b16 %v300
    %v1113 = vunpack.c.h.b16 %v300
    %v1114 = vunpack.c.l.b16 %v301
    %v1115 = vunpack.c.h.b16 %v301
    %v1116 = vunpack.c.l.b16 %v302
    %v1117 = vunpack.c.h.b16 %v302
    %v1118 = vunpack.c.l.b16 %v303
    %v1119 = vunpack.c.h.b16 %v303
    %v1120 = vunpack.c.l.b16 %v304
    %v1121 = vunpack.c.h.b16 %v304
    %v1122 = vunpack.c.l.b16 %v305
    %v1123 = vunpack.c.h.b16 %v305
    %v1124 = vpack.c.b16 %v616, %v612
    %v1125 = vpack.c.b16 %v617, %v613
    %v1126 = vpack.c.b16 %v618, %v614
    %v1127 = vpack.c.b16 %v619, %v615
    %v1128 = vpack.c.b16 %v624, %v620
    %v1129 = vpack.c.b16 %v625, %v621
    %v1130 = vpack.c.b16 %v626, %v622
    %v1131 = vpack.c.b16 %v627, %v623
    %v1132 = vpack.c.b16 %v632, %v628
    %v1133 = vpack.c.b16 %v633, %v629
    %v1134 = vpack.c.b16 %v634, %v630
    %v1135 = vpack.c.b16 %v635, %v631
    %v1136 = vpack.c.b16 %v640, %v636
    %v1137 = vpack.c.b16 %v641, %v637
    %v1138 = vpack.c.b16 %v642, %v638
    %v1139 = vpack.c.b16 %v643, %v639
    %v1140 = vpack.c.b16 %v648, %v644
    %v1141 = vpack.c.b16 %v649, %v645
    %v1142 = vpack.c.b16 %v650, %v646
    %v1143 = vpack.c.b16 %v651, %v647
    %v1144 = vpack.c.b16 %v656, %v652
    %v1145 = vpack.c.b16 %v657, %v653
    %v1146 = vpack.c.b16 %v658, %v654
    %v1147 = vpack.c.b16 %v659, %v655
    %v1148 = vpack.c.b16 %v664, %v660
    %v1149 = vpack.c.b16 %v665, %v661
    %v1150 = vpack.c.b16 %v666, %v662
    %v1151 = vpack.c.b16 %v667, %v663
    %v1152 = vpack.c.b16 %v672, %v668
    %v1153 = vpack.c.b16 %v673, %v669
    %v1154 = vpack.c.b16 %v674, %v670
    %v1155 = vpack.c.b16 %v675, %v671
    %v1156 = vpack.c.b16 %v680, %v676
    %v1157 = vpack.c.b16 %v681, %v677
    %v1158 = vpack.c.b16 %v682, %v678
    %v1159 = vpack.c.b16 %v683, %v679
    %v1160 = vpack.c.b16 %v688, %v684
    %v1161 = vpack.c.b16 %v689, %v685
    %v1162 = vpack.c.b16 %v690, %v686
    %v1163 = vpack.c.b16 %v691, %v687
    %v1164 = vpack.c.b16 %v696, %v692
    %v1165 = vpack.c.b16 %v697, %v693
    %v1166 = vpack.c.b16 %v698, %v694
    %v1167 = vpack.c.b16 %v699, %v695
    %v1168 = vpack.c.b16 %v704, %v700
    %v1169 = vpack.c.b16 %v705, %v701
    %v1170 = vpack.c.b16 %v706, %v702
    %v1171 = vpack.c.b16 %v707, %v703
    %v1172 = vpack.c.b16 %v712, %v708
    %v1173 = vpack.c.b16 %v713, %v709
    %v1174 = vpack.c.b16 %v714, %v710
    %v1175 = vpack.c.b16 %v715, %v711
    %v1176 = vpack.c.b16 %v720, %v716
    %v1177 = vpack.c.b16 %v721, %v717
    %v1178 = vpack.c.b16 %v722, %v718
    %v1179 = vpack.c.b16 %v723, %v719
    %v1180 = vpack.c.b16 %v728, %v724
    %v1181 = vpack.c.b16 %v729, %v725
    %v1182 = vpack.c.b16 %v730, %v726
    %v1183 = vpack.c.b16 %v731, %v727
    %v1184 = vpack.c.b16 %v736, %v732
    %v1185 = vpack.c.b16 %v737, %v733
    %v1186 = vpack.c.b16 %v738, %v734
    %v1187 = vpack.c.b16 %v739, %v735
    %v1188 = vpack.c.b16 %v744, %v740
    %v1189 = vpack.c.b16 %v745, %v741
    %v1190 = vpack.c.b16 %v746, %v742
    %v1191 = vpack.c.b16 %v747, %v743
    %v1192 = vpack.c.b16 %v752, %v748
    %v1193 = vpack.c.b16 %v753, %v749
    %v1194 = vpack.c.b16 %v754, %v750
    %v1195 = vpack.c.b16 %v755, %v751
    %v1196 = vpack.c.b16 %v760, %v756
    %v1197 = vpack.c.b16 %v761, %v757
    %v1198 = vpack.c.b16 %v762, %v758
    %v1199 = vpack.c.b16 %v763, %v759
    %v1200 = vpack.c.b16 %v768, %v764
    %v1201 = vpack.c.b16 %v769, %v765
    %v1202 = vpack.c.b16 %v770, %v766
    %v1203 = vpack.c.b16 %v771, %v767
    %v1204 = vpack.c.b16 %v776, %v772
    %v1205 = vpack.c.b16 %v777, %v773
    %v1206 = vpack.c.b16 %v778, %v774
    %v1207 = vpack.c.b16 %v779, %v775
    %v1208 = vpack.c.b16 %v784, %v780
    %v1209 = vpack.c.b16 %v785, %v781
    %v1210 = vpack.c.b16 %v786, %v782
    %v1211 = vpack.c.b16 %v787, %v783
    %v1212 = vpack.c.b16 %v792, %v788
    %v1213 = vpack.c.b16 %v793, %v789
    %v1214 = vpack.c.b16 %v794, %v790
    %v1215 = vpack.c.b16 %v795, %v791
    %v1216 = vpack.c.b16 %v800, %v796
    %v1217 = vpack.c.b16 %v801, %v797
    %v1218 = vpack.c.b16 %v802, %v798
    %v1219 = vpack.c.b16 %v803, %v799
    %v1220 = vpack.c.b16 %v808, %v804
    %v1221 = vpack.c.b16 %v809, %v805
    %v1222 = vpack.c.b16 %v810, %v806
    %v1223 = vpack.c.b16 %v811, %v807
    %v1224 = vpack.c.b16 %v816, %v812
    %v1225 = vpack.c.b16 %v817, %v813
    %v1226 = vpack.c.b16 %v818, %v814
    %v1227 = vpack.c.b16 %v819, %v815
    %v1228 = vpack.c.b16 %v824, %v820
    %v1229 = vpack.c.b16 %v825, %v821
    %v1230 = vpack.c.b16 %v826, %v822
    %v1231 = vpack.c.b16 %v827, %v823
    %v1232 = vpack.c.b16 %v832, %v828
    %v1233 = vpack.c.b16 %v833, %v829
    %v1234 = vpack.c.b16 %v834, %v830
    %v1235 = vpack.c.b16 %v835, %v831
    %v1236 = vpack.c.b16 %v840, %v836
    %v1237 = vpack.c.b16 %v841, %v837
    %v1238 = vpack.c.b16 %v842, %v838
    %v1239 = vpack.c.b16 %v843, %v839
    %v1240 = vpack.c.b16 %v848, %v844
    %v1241 = vpack.c.b16 %v849, %v845
    %v1242 = vpack.c.b16 %v850, %v846
    %v1243 = vpack.c.b16 %v851, %v847
    %v1244 = vpack.c.b16 %v856, %v852
    %v1245 = vpack.c.b16 %v857, %v853
    %v1246 = vpack.c.b16 %v858, %v854
    %v1247 = vpack.c.b16 %v859, %v855
    %v1248 = vpack.c.b16 %v864, %v860
    %v1249 = vpack.c.b16 %v865, %v861
    %v1250 = vpack.c.b16 %v866, %v862
    %v1251 = vpack.c.b16 %v867, %v863
    %v1252 = vpack.c.b16 %v872, %v868
    %v1253 = vpack.c.b16 %v873, %v869
    %v1254 = vpack.c.b16 %v874, %v870
    %v1255 = vpack.c.b16 %v875, %v871
    %v1256 = vpack.c.b16 %v880, %v876
    %v1257 = vpack.c.b16 %v881, %v877
    %v1258 = vpack.c.b16 %v882, %v878
    %v1259 = vpack.c.b16 %v883, %v879
    %v1260 = vpack.c.b16 %v888, %v884
    %v1261 = vpack.c.b16 %v889, %v885
    %v1262 = vpack.c.b16 %v890, %v886
    %v1263 = vpack.c.b16 %v891, %v887
    %v1264 = vpack.c.b16 %v896, %v892
    %v1265 = vpack.c.b16 %v897, %v893
    %v1266 = vpack.c.b16 %v898, %v894
    %v1267 = vpack.c.b16 %v899, %v895
    %v1268 = vpack.c.b16 %v904, %v900
    %v1269 = vpack.c.b16 %v905, %v901
    %v1270 = vpack.c.b16 %v906, %v902
    %v1271 = vpack.c.b16 %v907, %v903
    %v1272 = vpack.c.b16 %v912, %v908
    %v1273 = vpack.c.b16 %v913, %v909
    %v1274 = vpack.c.b16 %v914, %v910
    %v1275 = vpack.c.b16 %v915, %v911
    %v1276 = vpack.c.b16 %v920, %v916
    %v1277 = vpack.c.b16 %v921, %v917
    %v1278 = vpack.c.b16 %v922, %v918
    %v1279 = vpack.c.b16 %v923, %v919
    %v1280 = vpack.c.b16 %v928, %v924
    %v1281 = vpack.c.b16 %v929, %v925
    %v1282 = vpack.c.b16 %v930, %v926
    %v1283 = vpack.c.b16 %v931, %v927
    %v1284 = vpack.c.b16 %v936, %v932
    %v1285 = vpack.c.b16 %v937, %v933
    %v1286 = vpack.c.b16 %v938, %v934
    %v1287 = vpack.c.b16 %v939, %v935
    %v1288 = vpack.c.b16 %v944, %v940
    %v1289 = vpack.c.b16 %v945, %v941
    %v1290 = vpack.c.b16 %v946, %v942
    %v1291 = vpack.c.b16 %v947, %v943
    %v1292 = vpack.c.b16 %v952, %v948
    %v1293 = vpack.c.b16 %v953, %v949
    %v1294 = vpack.c.b16 %v954, %v950
    %v1295 = vpack.c.b16 %v955, %v951
    %v1296 = vpack.c.b16 %v960, %v956
    %v1297 = vpack.c.b16 %v961, %v957
    %v1298 = vpack.c.b16 %v962, %v958
    %v1299 = vpack.c.b16 %v963, %v959
    %v1300 = vpack.c.b16 %v968, %v964
    %v1301 = vpack.c.b16 %v969, %v965
    %v1302 = vpack.c.b16 %v970, %v966
    %v1303 = vpack.c.b16 %v971, %v967
    %v1304 = vpack.c.b16 %v976, %v972
    %v1305 = vpack.c.b16 %v977, %v973
    %v1306 = vpack.c.b16 %v978, %v974
    %v1307 = vpack.c.b16 %v979, %v975
    %v1308 = vpack.c.b16 %v984, %v980
    %v1309 = vpack.c.b16 %v985, %v981
    %v1310 = vpack.c.b16 %v986, %v982
    %v1311 = vpack.c.b16 %v987, %v983
    %v1312 = vpack.c.b16 %v992, %v988
    %v1313 = vpack.c.b16 %v993, %v989
    %v1314 = vpack.c.b16 %v994, %v990
    %v1315 = vpack.c.b16 %v995, %v991
    %v1316 = vpack.c.b16 %v1000, %v996
    %v1317 = vpack.c.b16 %v1001, %v997
    %v1318 = vpack.c.b16 %v1002, %v998
    %v1319 = vpack.c.b16 %v1003, %v999
    %v1320 = vpack.c.b16 %v1008, %v1004
    %v1321 = vpack.c.b16 %v1009, %v1005
    %v1322 = vpack.c.b16 %v1010, %v1006
    %v1323 = vpack.c.b16 %v1011, %v1007
    %v1324 = vpack.c.b16 %v1016, %v1012
    %v1325 = vpack.c.b16 %v1017, %v1013
    %v1326 = vpack.c.b16 %v1018, %v1014
    %v1327 = vpack.c.b16 %v1019, %v1015
    %v1328 = vpack.c.b16 %v1024, %v1020
    %v1329 = vpack.c.b16 %v1025, %v1021
    %v1330 = vpack.c.b16 %v1026, %v1022
    %v1331 = vpack.c.b16 %v1027, %v1023
    %v1332 = vpack.c.b16 %v1032, %v1028
    %v1333 = vpack.c.b16 %v1033, %v1029
    %v1334 = vpack.c.b16 %v1034, %v1030
    %v1335 = vpack.c.b16 %v1035, %v1031
    %v1336 = vpack.c.b16 %v1040, %v1036
    %v1337 = vpack.c.b16 %v1041, %v1037
    %v1338 = vpack.c.b16 %v1042, %v1038
    %v1339 = vpack.c.b16 %v1043, %v1039
    %v1340 = vpack.c.b16 %v1048, %v1044
    %v1341 = vpack.c.b16 %v1049, %v1045
    %v1342 = vpack.c.b16 %v1050, %v1046
    %v1343 = vpack.c.b16 %v1051, %v1047
    %v1344 = vpack.c.b16 %v1056, %v1052
    %v1345 = vpack.c.b16 %v1057, %v1053
    %v1346 = vpack.c.b16 %v1058, %v1054
    %v1347 = vpack.c.b16 %v1059, %v1055
    %v1348 = vpack.c.b16 %v1064, %v1060
    %v1349 = vpack.c.b16 %v1065, %v1061
    %v1350 = vpack.c.b16 %v1066, %v1062
    %v1351 = vpack.c.b16 %v1067, %v1063
    %v1352 = vpack.c.b16 %v1072, %v1068
    %v1353 = vpack.c.b16 %v1073, %v1069
    %v1354 = vpack.c.b16 %v1074, %v1070
    %v1355 = vpack.c.b16 %v1075, %v1071
    %v1356 = vpack.c.b16 %v1080, %v1076
    %v1357 = vpack.c.b16 %v1081, %v1077
    %v1358 = vpack.c.b16 %v1082, %v1078
    %v1359 = vpack.c.b16 %v1083, %v1079
    %v1360 = vpack.c.b16 %v1088, %v1084
    %v1361 = vpack.c.b16 %v1089, %v1085
    %v1362 = vpack.c.b16 %v1090, %v1086
    %v1363 = vpack.c.b16 %v1091, %v1087
    %v1364 = vpack.c.b16 %v1096, %v1092
    %v1365 = vpack.c.b16 %v1097, %v1093
    %v1366 = vpack.c.b16 %v1098, %v1094
    %v1367 = vpack.c.b16 %v1099, %v1095
    %v1368 = vpack.c.b16 %v1104, %v1100
    %v1369 = vpack.c.b16 %v1105, %v1101
    %v1370 = vpack.c.b16 %v1106, %v1102
    %v1371 = vpack.c.b16 %v1107, %v1103
    %v1372 = vpack.c.b16 %v1112, %v1108
    %v1373 = vpack.c.b16 %v1113, %v1109
    %v1374 = vpack.c.b16 %v1114, %v1110
    %v1375 = vpack.c.b16 %v1115, %v1111
    %v1376 = vpack.c.b16 %v1120, %v1116
    %v1377 = vpack.c.b16 %v1121, %v1117
    %v1378 = vpack.c.b16 %v1122, %v1118
    %v1379 = vpack.c.b16 %v1123, %v1119
    %1636 = vmatpush.bf16.msra.mxu0 %v1152
    %1637 = vmatpush.bf16.msra.mxu0 %v1148
    %1638 = vmatpush.bf16.msra.mxu0 %v1144
    %1639 = vmatpush.bf16.msra.mxu0 %v1140
    %1640 = vmatpush.bf16.msra.mxu0 %v1136
    %1641 = vmatpush.bf16.msra.mxu0 %v1132
    %1642 = vmatpush.bf16.msra.mxu0 %v1128
    %1643 = vmatpush.bf16.msra.mxu0 %v1124
    %1644 = vmatmul.bf16.gmra.mxu0 %v340
    %v1645 = vpop.f32.mrf.mxu0
    %v1646 = vadd.f32 %v308, %v1645
    %v1647 = vpop.f32.mrf.mxu0
    %v1648 = vadd.f32 %v308, %v1647
    %1649 = vdwg.mxu0
    %1650 = vmatpush.bf16.msra.mxu0 %v1184
    %1651 = vmatpush.bf16.msra.mxu0 %v1180
    %1652 = vmatpush.bf16.msra.mxu0 %v1176
    %1653 = vmatpush.bf16.msra.mxu0 %v1172
    %1654 = vmatpush.bf16.msra.mxu0 %v1168
    %1655 = vmatpush.bf16.msra.mxu0 %v1164
    %1656 = vmatpush.bf16.msra.mxu0 %v1160
    %1657 = vmatpush.bf16.msra.mxu0 %v1156
    %1658 = vmatmul.bf16.gmra.mxu0 %v341
    %v1659 = vpop.f32.mrf.mxu0
    %v1660 = vadd.f32 %v1646, %v1659
    %v1661 = vpop.f32.mrf.mxu0
    %v1662 = vadd.f32 %v1648, %v1661
    %1663 = vdwg.mxu0
    %1664 = vmatpush.bf16.msra.mxu0 %v1216
    %1665 = vmatpush.bf16.msra.mxu0 %v1212
    %1666 = vmatpush.bf16.msra.mxu0 %v1208
    %1667 = vmatpush.bf16.msra.mxu0 %v1204
    %1668 = vmatpush.bf16.msra.mxu0 %v1200
    %1669 = vmatpush.bf16.msra.mxu0 %v1196
    %1670 = vmatpush.bf16.msra.mxu0 %v1192
    %1671 = vmatpush.bf16.msra.mxu0 %v1188
    %1672 = vmatmul.bf16.gmra.mxu0 %v342
    %v1673 = vpop.f32.mrf.mxu0
    %v1674 = vadd.f32 %v1660, %v1673
    %v1675 = vpop.f32.mrf.mxu0
    %v1676 = vadd.f32 %v1662, %v1675
    %1677 = vdwg.mxu0
    %1678 = vmatpush.bf16.msra.mxu0 %v1248
    %1679 = vmatpush.bf16.msra.mxu0 %v1244
    %1680 = vmatpush.bf16.msra.mxu0 %v1240
    %1681 = vmatpush.bf16.msra.mxu0 %v1236
    %1682 = vmatpush.bf16.msra.mxu0 %v1232
    %1683 = vmatpush.bf16.msra.mxu0 %v1228
    %1684 = vmatpush.bf16.msra.mxu0 %v1224
    %1685 = vmatpush.bf16.msra.mxu0 %v1220
    %1686 = vmatmul.bf16.gmra.mxu0 %v343
    %v1687 = vpop.f32.mrf.mxu0
    %v1688 = vadd.f32 %v1674, %v1687
    %v1689 = vpop.f32.mrf.mxu0
    %v1690 = vadd.f32 %v1676, %v1689
    %1691 = vdwg.mxu0
    %1692 = vmatpush.bf16.msra.mxu0 %v1280
    %1693 = vmatpush.bf16.msra.mxu0 %v1276
    %1694 = vmatpush.bf16.msra.mxu0 %v1272
    %1695 = vmatpush.bf16.msra.mxu0 %v1268
    %1696 = vmatpush.bf16.msra.mxu0 %v1264
    %1697 = vmatpush.bf16.msra.mxu0 %v1260
    %1698 = vmatpush.bf16.msra.mxu0 %v1256
    %1699 = vmatpush.bf16.msra.mxu0 %v1252
    %1700 = vmatmul.bf16.gmra.mxu0 %v344
    %v1701 = vpop.f32.mrf.mxu0
    %v1702 = vadd.f32 %v1688, %v1701
    %v1703 = vpop.f32.mrf.mxu0
    %v1704 = vadd.f32 %v1690, %v1703
    %1705 = vdwg.mxu0
    %1706 = vmatpush.bf16.msra.mxu0 %v1312
    %1707 = vmatpush.bf16.msra.mxu0 %v1308
    %1708 = vmatpush.bf16.msra.mxu0 %v1304
    %1709 = vmatpush.bf16.msra.mxu0 %v1300
    %1710 = vmatpush.bf16.msra.mxu0 %v1296
    %1711 = vmatpush.bf16.msra.mxu0 %v1292
    %1712 = vmatpush.bf16.msra.mxu0 %v1288
    %1713 = vmatpush.bf16.msra.mxu0 %v1284
    %1714 = vmatmul.bf16.gmra.mxu0 %v345
    %v1715 = vpop.f32.mrf.mxu0
    %v1716 = vadd.f32 %v1702, %v1715
    %v1717 = vpop.f32.mrf.mxu0
    %v1718 = vadd.f32 %v1704, %v1717
    %1719 = vdwg.mxu0
    %1720 = vmatpush.bf16.msra.mxu0 %v1344
    %1721 = vmatpush.bf16.msra.mxu0 %v1340
    %1722 = vmatpush.bf16.msra.mxu0 %v1336
    %1723 = vmatpush.bf16.msra.mxu0 %v1332
    %1724 = vmatpush.bf16.msra.mxu0 %v1328
    %1725 = vmatpush.bf16.msra.mxu0 %v1324
    %1726 = vmatpush.bf16.msra.mxu0 %v1320
    %1727 = vmatpush.bf16.msra.mxu0 %v1316
    %1728 = vmatmul.bf16.gmra.mxu0 %v346
    %v1729 = vpop.f32.mrf.mxu0
    %v1730 = vadd.f32 %v1716, %v1729
    %v1731 = vpop.f32.mrf.mxu0
    %v1732 = vadd.f32 %v1718, %v1731
    %1733 = vdwg.mxu0
    %1734 = vmatpush.bf16.msra.mxu0 %v1376
    %1735 = vmatpush.bf16.msra.mxu0 %v1372
    %1736 = vmatpush.bf16.msra.mxu0 %v1368
    %1737 = vmatpush.bf16.msra.mxu0 %v1364
    %1738 = vmatpush.bf16.msra.mxu0 %v1360
    %1739 = vmatpush.bf16.msra.mxu0 %v1356
    %1740 = vmatpush.bf16.msra.mxu0 %v1352
    %1741 = vmatpush.bf16.msra.mxu0 %v1348
    %1742 = vmatmul.bf16.gmra.mxu0 %v347
    %v1743 = vpop.f32.mrf.mxu0
    %v1744 = vadd.f32 %v1730, %v1743
    %v1745 = vpop.f32.mrf.mxu0
    %v1746 = vadd.f32 %v1732, %v1745
    %1747 = vdwg.mxu0
    %1748 = vmatpush.bf16.msra.mxu0 %v1153
    %1749 = vmatpush.bf16.msra.mxu0 %v1149
    %1750 = vmatpush.bf16.msra.mxu0 %v1145
    %1751 = vmatpush.bf16.msra.mxu0 %v1141
    %1752 = vmatpush.bf16.msra.mxu0 %v1137
    %1753 = vmatpush.bf16.msra.mxu0 %v1133
    %1754 = vmatpush.bf16.msra.mxu0 %v1129
    %1755 = vmatpush.bf16.msra.mxu0 %v1125
    %1756 = vmatmul.bf16.gmra.mxu0 %v340
    %v1757 = vpop.f32.mrf.mxu0
    %v1758 = vadd.f32 %v309, %v1757
    %v1759 = vpop.f32.mrf.mxu0
    %v1760 = vadd.f32 %v309, %v1759
    %1761 = vdwg.mxu0
    %1762 = vmatpush.bf16.msra.mxu0 %v1185
    %1763 = vmatpush.bf16.msra.mxu0 %v1181
    %1764 = vmatpush.bf16.msra.mxu0 %v1177
    %1765 = vmatpush.bf16.msra.mxu0 %v1173
    %1766 = vmatpush.bf16.msra.mxu0 %v1169
    %1767 = vmatpush.bf16.msra.mxu0 %v1165
    %1768 = vmatpush.bf16.msra.mxu0 %v1161
    %1769 = vmatpush.bf16.msra.mxu0 %v1157
    %1770 = vmatmul.bf16.gmra.mxu0 %v341
    %v1771 = vpop.f32.mrf.mxu0
    %v1772 = vadd.f32 %v1758, %v1771
    %v1773 = vpop.f32.mrf.mxu0
    %v1774 = vadd.f32 %v1760, %v1773
    %1775 = vdwg.mxu0
    %1776 = vmatpush.bf16.msra.mxu0 %v1217
    %1777 = vmatpush.bf16.msra.mxu0 %v1213
    %1778 = vmatpush.bf16.msra.mxu0 %v1209
    %1779 = vmatpush.bf16.msra.mxu0 %v1205
    %1780 = vmatpush.bf16.msra.mxu0 %v1201
    %1781 = vmatpush.bf16.msra.mxu0 %v1197
    %1782 = vmatpush.bf16.msra.mxu0 %v1193
    %1783 = vmatpush.bf16.msra.mxu0 %v1189
    %1784 = vmatmul.bf16.gmra.mxu0 %v342
    %v1785 = vpop.f32.mrf.mxu0
    %v1786 = vadd.f32 %v1772, %v1785
    %v1787 = vpop.f32.mrf.mxu0
    %v1788 = vadd.f32 %v1774, %v1787
    %1789 = vdwg.mxu0
    %1790 = vmatpush.bf16.msra.mxu0 %v1249
    %1791 = vmatpush.bf16.msra.mxu0 %v1245
    %1792 = vmatpush.bf16.msra.mxu0 %v1241
    %1793 = vmatpush.bf16.msra.mxu0 %v1237
    %1794 = vmatpush.bf16.msra.mxu0 %v1233
    %1795 = vmatpush.bf16.msra.mxu0 %v1229
    %1796 = vmatpush.bf16.msra.mxu0 %v1225
    %1797 = vmatpush.bf16.msra.mxu0 %v1221
    %1798 = vmatmul.bf16.gmra.mxu0 %v343
    %v1799 = vpop.f32.mrf.mxu0
    %v1800 = vadd.f32 %v1786, %v1799
    %v1801 = vpop.f32.mrf.mxu0
    %v1802 = vadd.f32 %v1788, %v1801
    %1803 = vdwg.mxu0
    %1804 = vmatpush.bf16.msra.mxu0 %v1281
    %1805 = vmatpush.bf16.msra.mxu0 %v1277
    %1806 = vmatpush.bf16.msra.mxu0 %v1273
    %1807 = vmatpush.bf16.msra.mxu0 %v1269
    %1808 = vmatpush.bf16.msra.mxu0 %v1265
    %1809 = vmatpush.bf16.msra.mxu0 %v1261
    %1810 = vmatpush.bf16.msra.mxu0 %v1257
    %1811 = vmatpush.bf16.msra.mxu0 %v1253
    %1812 = vmatmul.bf16.gmra.mxu0 %v344
    %v1813 = vpop.f32.mrf.mxu0
    %v1814 = vadd.f32 %v1800, %v1813
    %v1815 = vpop.f32.mrf.mxu0
    %v1816 = vadd.f32 %v1802, %v1815
    %1817 = vdwg.mxu0
    %1818 = vmatpush.bf16.msra.mxu0 %v1313
    %1819 = vmatpush.bf16.msra.mxu0 %v1309
    %1820 = vmatpush.bf16.msra.mxu0 %v1305
    %1821 = vmatpush.bf16.msra.mxu0 %v1301
    %1822 = vmatpush.bf16.msra.mxu0 %v1297
    %1823 = vmatpush.bf16.msra.mxu0 %v1293
    %1824 = vmatpush.bf16.msra.mxu0 %v1289
    %1825 = vmatpush.bf16.msra.mxu0 %v1285
    %1826 = vmatmul.bf16.gmra.mxu0 %v345
    %v1827 = vpop.f32.mrf.mxu0
    %v1828 = vadd.f32 %v1814, %v1827
    %v1829 = vpop.f32.mrf.mxu0
    %v1830 = vadd.f32 %v1816, %v1829
    %1831 = vdwg.mxu0
    %1832 = vmatpush.bf16.msra.mxu0 %v1345
    %1833 = vmatpush.bf16.msra.mxu0 %v1341
    %1834 = vmatpush.bf16.msra.mxu0 %v1337
    %1835 = vmatpush.bf16.msra.mxu0 %v1333
    %1836 = vmatpush.bf16.msra.mxu0 %v1329
    %1837 = vmatpush.bf16.msra.mxu0 %v1325
    %1838 = vmatpush.bf16.msra.mxu0 %v1321
    %1839 = vmatpush.bf16.msra.mxu0 %v1317
    %1840 = vmatmul.bf16.gmra.mxu0 %v346
    %v1841 = vpop.f32.mrf.mxu0
    %v1842 = vadd.f32 %v1828, %v1841
    %v1843 = vpop.f32.mrf.mxu0
    %v1844 = vadd.f32 %v1830, %v1843
    %1845 = vdwg.mxu0
    %1846 = vmatpush.bf16.msra.mxu0 %v1377
    %1847 = vmatpush.bf16.msra.mxu0 %v1373
    %1848 = vmatpush.bf16.msra.mxu0 %v1369
    %1849 = vmatpush.bf16.msra.mxu0 %v1365
    %1850 = vmatpush.bf16.msra.mxu0 %v1361
    %1851 = vmatpush.bf16.msra.mxu0 %v1357
    %1852 = vmatpush.bf16.msra.mxu0 %v1353
    %1853 = vmatpush.bf16.msra.mxu0 %v1349
    %1854 = vmatmul.bf16.gmra.mxu0 %v347
    %v1855 = vpop.f32.mrf.mxu0
    %v1856 = vadd.f32 %v1842, %v1855
    %v1857 = vpop.f32.mrf.mxu0
    %v1858 = vadd.f32 %v1844, %v1857
    %1859 = vdwg.mxu0
    %1860 = vmatpush.bf16.msra.mxu0 %v1154
    %1861 = vmatpush.bf16.msra.mxu0 %v1150
    %1862 = vmatpush.bf16.msra.mxu0 %v1146
    %1863 = vmatpush.bf16.msra.mxu0 %v1142
    %1864 = vmatpush.bf16.msra.mxu0 %v1138
    %1865 = vmatpush.bf16.msra.mxu0 %v1134
    %1866 = vmatpush.bf16.msra.mxu0 %v1130
    %1867 = vmatpush.bf16.msra.mxu0 %v1126
    %1868 = vmatmul.bf16.gmra.mxu0 %v340
    %v1869 = vpop.f32.mrf.mxu0
    %v1870 = vadd.f32 %v310, %v1869
    %v1871 = vpop.f32.mrf.mxu0
    %v1872 = vadd.f32 %v310, %v1871
    %1873 = vdwg.mxu0
    %1874 = vmatpush.bf16.msra.mxu0 %v1186
    %1875 = vmatpush.bf16.msra.mxu0 %v1182
    %1876 = vmatpush.bf16.msra.mxu0 %v1178
    %1877 = vmatpush.bf16.msra.mxu0 %v1174
    %1878 = vmatpush.bf16.msra.mxu0 %v1170
    %1879 = vmatpush.bf16.msra.mxu0 %v1166
    %1880 = vmatpush.bf16.msra.mxu0 %v1162
    %1881 = vmatpush.bf16.msra.mxu0 %v1158
    %1882 = vmatmul.bf16.gmra.mxu0 %v341
    %v1883 = vpop.f32.mrf.mxu0
    %v1884 = vadd.f32 %v1870, %v1883
    %v1885 = vpop.f32.mrf.mxu0
    %v1886 = vadd.f32 %v1872, %v1885
    %1887 = vdwg.mxu0
    %1888 = vmatpush.bf16.msra.mxu0 %v1218
    %1889 = vmatpush.bf16.msra.mxu0 %v1214
    %1890 = vmatpush.bf16.msra.mxu0 %v1210
    %1891 = vmatpush.bf16.msra.mxu0 %v1206
    %1892 = vmatpush.bf16.msra.mxu0 %v1202
    %1893 = vmatpush.bf16.msra.mxu0 %v1198
    %1894 = vmatpush.bf16.msra.mxu0 %v1194
    %1895 = vmatpush.bf16.msra.mxu0 %v1190
    %1896 = vmatmul.bf16.gmra.mxu0 %v342
    %v1897 = vpop.f32.mrf.mxu0
    %v1898 = vadd.f32 %v1884, %v1897
    %v1899 = vpop.f32.mrf.mxu0
    %v1900 = vadd.f32 %v1886, %v1899
    %1901 = vdwg.mxu0
    %1902 = vmatpush.bf16.msra.mxu0 %v1250
    %1903 = vmatpush.bf16.msra.mxu0 %v1246
    %1904 = vmatpush.bf16.msra.mxu0 %v1242
    %1905 = vmatpush.bf16.msra.mxu0 %v1238
    %1906 = vmatpush.bf16.msra.mxu0 %v1234
    %1907 = vmatpush.bf16.msra.mxu0 %v1230
    %1908 = vmatpush.bf16.msra.mxu0 %v1226
    %1909 = vmatpush.bf16.msra.mxu0 %v1222
    %1910 = vmatmul.bf16.gmra.mxu0 %v343
    %v1911 = vpop.f32.mrf.mxu0
    %v1912 = vadd.f32 %v1898, %v1911
    %v1913 = vpop.f32.mrf.mxu0
    %v1914 = vadd.f32 %v1900, %v1913
    %1915 = vdwg.mxu0
    %1916 = vmatpush.bf16.msra.mxu0 %v1282
    %1917 = vmatpush.bf16.msra.mxu0 %v1278
    %1918 = vmatpush.bf16.msra.mxu0 %v1274
    %1919 = vmatpush.bf16.msra.mxu0 %v1270
    %1920 = vmatpush.bf16.msra.mxu0 %v1266
    %1921 = vmatpush.bf16.msra.mxu0 %v1262
    %1922 = vmatpush.bf16.msra.mxu0 %v1258
    %1923 = vmatpush.bf16.msra.mxu0 %v1254
    %1924 = vmatmul.bf16.gmra.mxu0 %v344
    %v1925 = vpop.f32.mrf.mxu0
    %v1926 = vadd.f32 %v1912, %v1925
    %v1927 = vpop.f32.mrf.mxu0
    %v1928 = vadd.f32 %v1914, %v1927
    %1929 = vdwg.mxu0
    %1930 = vmatpush.bf16.msra.mxu0 %v1314
    %1931 = vmatpush.bf16.msra.mxu0 %v1310
    %1932 = vmatpush.bf16.msra.mxu0 %v1306
    %1933 = vmatpush.bf16.msra.mxu0 %v1302
    %1934 = vmatpush.bf16.msra.mxu0 %v1298
    %1935 = vmatpush.bf16.msra.mxu0 %v1294
    %1936 = vmatpush.bf16.msra.mxu0 %v1290
    %1937 = vmatpush.bf16.msra.mxu0 %v1286
    %1938 = vmatmul.bf16.gmra.mxu0 %v345
    %v1939 = vpop.f32.mrf.mxu0
    %v1940 = vadd.f32 %v1926, %v1939
    %v1941 = vpop.f32.mrf.mxu0
    %v1942 = vadd.f32 %v1928, %v1941
    %1943 = vdwg.mxu0
    %1944 = vmatpush.bf16.msra.mxu0 %v1346
    %1945 = vmatpush.bf16.msra.mxu0 %v1342
    %1946 = vmatpush.bf16.msra.mxu0 %v1338
    %1947 = vmatpush.bf16.msra.mxu0 %v1334
    %1948 = vmatpush.bf16.msra.mxu0 %v1330
    %1949 = vmatpush.bf16.msra.mxu0 %v1326
    %1950 = vmatpush.bf16.msra.mxu0 %v1322
    %1951 = vmatpush.bf16.msra.mxu0 %v1318
    %1952 = vmatmul.bf16.gmra.mxu0 %v346
    %v1953 = vpop.f32.mrf.mxu0
    %v1954 = vadd.f32 %v1940, %v1953
    %v1955 = vpop.f32.mrf.mxu0
    %v1956 = vadd.f32 %v1942, %v1955
    %1957 = vdwg.mxu0
    %1958 = vmatpush.bf16.msra.mxu0 %v1378
    %1959 = vmatpush.bf16.msra.mxu0 %v1374
    %1960 = vmatpush.bf16.msra.mxu0 %v1370
    %1961 = vmatpush.bf16.msra.mxu0 %v1366
    %1962 = vmatpush.bf16.msra.mxu0 %v1362
    %1963 = vmatpush.bf16.msra.mxu0 %v1358
    %1964 = vmatpush.bf16.msra.mxu0 %v1354
    %1965 = vmatpush.bf16.msra.mxu0 %v1350
    %1966 = vmatmul.bf16.gmra.mxu0 %v347
    %v1967 = vpop.f32.mrf.mxu0
    %v1968 = vadd.f32 %v1954, %v1967
    %v1969 = vpop.f32.mrf.mxu0
    %v1970 = vadd.f32 %v1956, %v1969
    %1971 = vdwg.mxu0
    %1972 = vmatpush.bf16.msra.mxu0 %v1155
    %1973 = vmatpush.bf16.msra.mxu0 %v1151
    %1974 = vmatpush.bf16.msra.mxu0 %v1147
    %1975 = vmatpush.bf16.msra.mxu0 %v1143
    %1976 = vmatpush.bf16.msra.mxu0 %v1139
    %1977 = vmatpush.bf16.msra.mxu0 %v1135
    %1978 = vmatpush.bf16.msra.mxu0 %v1131
    %1979 = vmatpush.bf16.msra.mxu0 %v1127
    %1980 = vmatmul.bf16.gmra.mxu0 %v340
    %v1981 = vpop.f32.mrf.mxu0
    %v1982 = vadd.f32 %v311, %v1981
    %v1983 = vpop.f32.mrf.mxu0
    %v1984 = vadd.f32 %v311, %v1983
    %1985 = vdwg.mxu0
    %1986 = vmatpush.bf16.msra.mxu0 %v1187
    %1987 = vmatpush.bf16.msra.mxu0 %v1183
    %1988 = vmatpush.bf16.msra.mxu0 %v1179
    %1989 = vmatpush.bf16.msra.mxu0 %v1175
    %1990 = vmatpush.bf16.msra.mxu0 %v1171
    %1991 = vmatpush.bf16.msra.mxu0 %v1167
    %1992 = vmatpush.bf16.msra.mxu0 %v1163
    %1993 = vmatpush.bf16.msra.mxu0 %v1159
    %1994 = vmatmul.bf16.gmra.mxu0 %v341
    %v1995 = vpop.f32.mrf.mxu0
    %v1996 = vadd.f32 %v1982, %v1995
    %v1997 = vpop.f32.mrf.mxu0
    %v1998 = vadd.f32 %v1984, %v1997
    %1999 = vdwg.mxu0
    %2000 = vmatpush.bf16.msra.mxu0 %v1219
    %2001 = vmatpush.bf16.msra.mxu0 %v1215
    %2002 = vmatpush.bf16.msra.mxu0 %v1211
    %2003 = vmatpush.bf16.msra.mxu0 %v1207
    %2004 = vmatpush.bf16.msra.mxu0 %v1203
    %2005 = vmatpush.bf16.msra.mxu0 %v1199
    %2006 = vmatpush.bf16.msra.mxu0 %v1195
    %2007 = vmatpush.bf16.msra.mxu0 %v1191
    %2008 = vmatmul.bf16.gmra.mxu0 %v342
    %v2009 = vpop.f32.mrf.mxu0
    %v2010 = vadd.f32 %v1996, %v2009
    %v2011 = vpop.f32.mrf.mxu0
    %v2012 = vadd.f32 %v1998, %v2011
    %2013 = vdwg.mxu0
    %2014 = vmatpush.bf16.msra.mxu0 %v1251
    %2015 = vmatpush.bf16.msra.mxu0 %v1247
    %2016 = vmatpush.bf16.msra.mxu0 %v1243
    %2017 = vmatpush.bf16.msra.mxu0 %v1239
    %2018 = vmatpush.bf16.msra.mxu0 %v1235
    %2019 = vmatpush.bf16.msra.mxu0 %v1231
    %2020 = vmatpush.bf16.msra.mxu0 %v1227
    %2021 = vmatpush.bf16.msra.mxu0 %v1223
    %2022 = vmatmul.bf16.gmra.mxu0 %v343
    %v2023 = vpop.f32.mrf.mxu0
    %v2024 = vadd.f32 %v2010, %v2023
    %v2025 = vpop.f32.mrf.mxu0
    %v2026 = vadd.f32 %v2012, %v2025
    %2027 = vdwg.mxu0
    %2028 = vmatpush.bf16.msra.mxu0 %v1283
    %2029 = vmatpush.bf16.msra.mxu0 %v1279
    %2030 = vmatpush.bf16.msra.mxu0 %v1275
    %2031 = vmatpush.bf16.msra.mxu0 %v1271
    %2032 = vmatpush.bf16.msra.mxu0 %v1267
    %2033 = vmatpush.bf16.msra.mxu0 %v1263
    %2034 = vmatpush.bf16.msra.mxu0 %v1259
    %2035 = vmatpush.bf16.msra.mxu0 %v1255
    %2036 = vmatmul.bf16.gmra.mxu0 %v344
    %v2037 = vpop.f32.mrf.mxu0
    %v2038 = vadd.f32 %v2024, %v2037
    %v2039 = vpop.f32.mrf.mxu0
    %v2040 = vadd.f32 %v2026, %v2039
    %2041 = vdwg.mxu0
    %2042 = vmatpush.bf16.msra.mxu0 %v1315
    %2043 = vmatpush.bf16.msra.mxu0 %v1311
    %2044 = vmatpush.bf16.msra.mxu0 %v1307
    %2045 = vmatpush.bf16.msra.mxu0 %v1303
    %2046 = vmatpush.bf16.msra.mxu0 %v1299
    %2047 = vmatpush.bf16.msra.mxu0 %v1295
    %2048 = vmatpush.bf16.msra.mxu0 %v1291
    %2049 = vmatpush.bf16.msra.mxu0 %v1287
    %2050 = vmatmul.bf16.gmra.mxu0 %v345
    %v2051 = vpop.f32.mrf.mxu0
    %v2052 = vadd.f32 %v2038, %v2051
    %v2053 = vpop.f32.mrf.mxu0
    %v2054 = vadd.f32 %v2040, %v2053
    %2055 = vdwg.mxu0
    %2056 = vmatpush.bf16.msra.mxu0 %v1347
    %2057 = vmatpush.bf16.msra.mxu0 %v1343
    %2058 = vmatpush.bf16.msra.mxu0 %v1339
    %2059 = vmatpush.bf16.msra.mxu0 %v1335
    %2060 = vmatpush.bf16.msra.mxu0 %v1331
    %2061 = vmatpush.bf16.msra.mxu0 %v1327
    %2062 = vmatpush.bf16.msra.mxu0 %v1323
    %2063 = vmatpush.bf16.msra.mxu0 %v1319
    %2064 = vmatmul.bf16.gmra.mxu0 %v346
    %v2065 = vpop.f32.mrf.mxu0
    %v2066 = vadd.f32 %v2052, %v2065
    %v2067 = vpop.f32.mrf.mxu0
    %v2068 = vadd.f32 %v2054, %v2067
    %2069 = vdwg.mxu0
    %2070 = vmatpush.bf16.msra.mxu0 %v1379
    %2071 = vmatpush.bf16.msra.mxu0 %v1375
    %2072 = vmatpush.bf16.msra.mxu0 %v1371
    %2073 = vmatpush.bf16.msra.mxu0 %v1367
    %2074 = vmatpush.bf16.msra.mxu0 %v1363
    %2075 = vmatpush.bf16.msra.mxu0 %v1359
    %2076 = vmatpush.bf16.msra.mxu0 %v1355
    %2077 = vmatpush.bf16.msra.mxu0 %v1351
    %2078 = vmatmul.bf16.gmra.mxu0 %v347
    %v2079 = vpop.f32.mrf.mxu0
    %v2080 = vadd.f32 %v2066, %v2079
    %v2081 = vpop.f32.mrf.mxu0
    %v2082 = vadd.f32 %v2068, %v2081
    %2083 = vdwg.mxu0
    %v2084 = vmax.f32 %v1744, 0.0
    %v2085 = vmax.f32 %v1856, 0.0
    %v2086 = vmax.f32 %v1968, 0.0
    %v2087 = vmax.f32 %v2080, 0.0
    %v2088 = vmax.f32 %v1746, 0.0
    %v2089 = vmax.f32 %v1858, 0.0
    %v2090 = vmax.f32 %v1970, 0.0
    %v2091 = vmax.f32 %v2082, 0.0
    %v2092 = vpack.c.bf16 %v2088, %v2084
    %v2093 = vpack.c.bf16 %v2089, %v2085
    %v2094 = vpack.c.bf16 %v2090, %v2086
    %v2095 = vpack.c.bf16 %v2091, %v2087
    %v2096 = vld [vmem:[%s3] sm:$0xf]
    %v2097 = vld [vmem:[%s3 + $0x4] sm:$0xf]
    %v2098 = vld [vmem:[%s3 + $0x8] sm:$0xf]
    %v2099 = vld [vmem:[%s3 + $0xc] sm:$0xf]
    %v2100 = vld [vmem:[%s3 + $0x10] sm:$0xf]
    %v2101 = vld [vmem:[%s3 + $0x14] sm:$0xf]
    %v2102 = vld [vmem:[%s3 + $0x18] sm:$0xf]
    %v2103 = vld [vmem:[%s3 + $0x1c] sm:$0xf]
    %v2104 = vld [vmem:[%s3 + $0x20] sm:$0xf]
    %v2105 = vld [vmem:[%s3 + $0x24] sm:$0xf]
    %v2106 = vld [vmem:[%s3 + $0x28] sm:$0xf]
    %v2107 = vld [vmem:[%s3 + $0x2c] sm:$0xf]
    %v2108 = vld [vmem:[%s3 + $0x30] sm:$0xf]
    %v2109 = vld [vmem:[%s3 + $0x34] sm:$0xf]
    %v2110 = vld [vmem:[%s3 + $0x38] sm:$0xf]
    %v2111 = vld [vmem:[%s3 + $0x3c] sm:$0xf]
    %v2112 = vld [vmem:[%s3 + $0x40] sm:$0xf]
    %v2113 = vld [vmem:[%s3 + $0x44] sm:$0xf]
    %v2114 = vld [vmem:[%s3 + $0x48] sm:$0xf]
    %v2115 = vld [vmem:[%s3 + $0x4c] sm:$0xf]
    %v2116 = vld [vmem:[%s3 + $0x50] sm:$0xf]
    %v2117 = vld [vmem:[%s3 + $0x54] sm:$0xf]
    %v2118 = vld [vmem:[%s3 + $0x58] sm:$0xf]
    %v2119 = vld [vmem:[%s3 + $0x5c] sm:$0xf]
    %v2120 = vld [vmem:[%s3 + $0x60] sm:$0xf]
    %v2121 = vld [vmem:[%s3 + $0x64] sm:$0xf]
    %v2122 = vld [vmem:[%s3 + $0x68] sm:$0xf]
    %v2123 = vld [vmem:[%s3 + $0x6c] sm:$0xf]
    %v2124 = vld [vmem:[%s3 + $0x70] sm:$0xf]
    %v2125 = vld [vmem:[%s3 + $0x74] sm:$0xf]
    %v2126 = vld [vmem:[%s3 + $0x78] sm:$0xf]
    %v2127 = vld [vmem:[%s3 + $0x7c] sm:$0xf]
    %v2128 = vld [vmem:[%s3 + $0x80] sm:$0xf]
    %v2129 = vld [vmem:[%s3 + $0x84] sm:$0xf]
    %v2130 = vld [vmem:[%s3 + $0x88] sm:$0xf]
    %v2131 = vld [vmem:[%s3 + $0x8c] sm:$0xf]
    %v2132 = vld [vmem:[%s3 + $0x90] sm:$0xf]
    %v2133 = vld [vmem:[%s3 + $0x94] sm:$0xf]
    %v2134 = vld [vmem:[%s3 + $0x98] sm:$0xf]
    %v2135 = vld [vmem:[%s3 + $0x9c] sm:$0xf]
    %v2136 = vld [vmem:[%s3 + $0xa0] sm:$0xf]
    %v2137 = vld [vmem:[%s3 + $0xa4] sm:$0xf]
    %v2138 = vld [vmem:[%s3 + $0xa8] sm:$0xf]
    %v2139 = vld [vmem:[%s3 + $0xac] sm:$0xf]
    %v2140 = vld [vmem:[%s3 + $0xb0] sm:$0xf]
    %v2141 = vld [vmem:[%s3 + $0xb4] sm:$0xf]
    %v2142 = vld [vmem:[%s3 + $0xb8] sm:$0xf]
    %v2143 = vld [vmem:[%s3 + $0xbc] sm:$0xf]
    %v2144 = vld [vmem:[%s3 + $0xc0] sm:$0xf]
    %v2145 = vld [vmem:[%s3 + $0xc4] sm:$0xf]
    %v2146 = vld [vmem:[%s3 + $0xc8] sm:$0xf]
    %v2147 = vld [vmem:[%s3 + $0xcc] sm:$0xf]
    %v2148 = vld [vmem:[%s3 + $0xd0] sm:$0xf]
    %v2149 = vld [vmem:[%s3 + $0xd4] sm:$0xf]
    %v2150 = vld [vmem:[%s3 + $0xd8] sm:$0xf]
    %v2151 = vld [vmem:[%s3 + $0xdc] sm:$0xf]
    %v2152 = vld [vmem:[%s3 + $0xe0] sm:$0xf]
    %v2153 = vld [vmem:[%s3 + $0xe4] sm:$0xf]
    %v2154 = vld [vmem:[%s3 + $0xe8] sm:$0xf]
    %v2155 = vld [vmem:[%s3 + $0xec] sm:$0xf]
    %v2156 = vld [vmem:[%s3 + $0xf0] sm:$0xf]
    %v2157 = vld [vmem:[%s3 + $0xf4] sm:$0xf]
    %v2158 = vld [vmem:[%s3 + $0xf8] sm:$0xf]
    %v2159 = vld [vmem:[%s3 + $0xfc] sm:$0xf]
    %v2160 = vld [vmem:[%s4] sm:$0x1]
    %v2162 = vperm.slane %v2160, 0
    %v2228 = vunpack.c.l.b16 %v2096
    %v2229 = vunpack.c.l.b16 %v2097
    %v2230 = vunpack.c.l.b16 %v2098
    %v2231 = vunpack.c.l.b16 %v2099
    %v2232 = vunpack.c.l.b16 %v2100
    %v2233 = vunpack.c.l.b16 %v2101
    %v2234 = vunpack.c.l.b16 %v2102
    %v2235 = vunpack.c.l.b16 %v2103
    %v2236 = vunpack.c.l.b16 %v2104
    %v2237 = vunpack.c.l.b16 %v2105
    %v2238 = vunpack.c.l.b16 %v2106
    %v2239 = vunpack.c.l.b16 %v2107
    %v2240 = vunpack.c.l.b16 %v2108
    %v2241 = vunpack.c.l.b16 %v2109
    %v2242 = vunpack.c.l.b16 %v2110
    %v2243 = vunpack.c.l.b16 %v2111
    %v2244 = vunpack.c.l.b16 %v2112
    %v2245 = vunpack.c.l.b16 %v2113
    %v2246 = vunpack.c.l.b16 %v2114
    %v2247 = vunpack.c.l.b16 %v2115
    %v2248 = vunpack.c.l.b16 %v2116
    %v2249 = vunpack.c.l.b16 %v2117
    %v2250 = vunpack.c.l.b16 %v2118
    %v2251 = vunpack.c.l.b16 %v2119
    %v2252 = vunpack.c.l.b16 %v2120
    %v2253 = vunpack.c.l.b16 %v2121
    %v2254 = vunpack.c.l.b16 %v2122
    %v2255 = vunpack.c.l.b16 %v2123
    %v2256 = vunpack.c.l.b16 %v2124
    %v2257 = vunpack.c.l.b16 %v2125
    %v2258 = vunpack.c.l.b16 %v2126
    %v2259 = vunpack.c.l.b16 %v2127
    %v2260 = vunpack.c.l.b16 %v2128
    %v2261 = vunpack.c.l.b16 %v2129
    %v2262 = vunpack.c.l.b16 %v2130
    %v2263 = vunpack.c.l.b16 %v2131
    %v2264 = vunpack.c.l.b16 %v2132
    %v2265 = vunpack.c.l.b16 %v2133
    %v2266 = vunpack.c.l.b16 %v2134
    %v2267 = vunpack.c.l.b16 %v2135
    %v2268 = vunpack.c.l.b16 %v2136
    %v2269 = vunpack.c.l.b16 %v2137
    %v2270 = vunpack.c.l.b16 %v2138
    %v2271 = vunpack.c.l.b16 %v2139
    %v2272 = vunpack.c.l.b16 %v2140
    %v2273 = vunpack.c.l.b16 %v2141
    %v2274 = vunpack.c.l.b16 %v2142
    %v2275 = vunpack.c.l.b16 %v2143
    %v2276 = vunpack.c.l.b16 %v2144
    %v2277 = vunpack.c.l.b16 %v2145
    %v2278 = vunpack.c.l.b16 %v2146
    %v2279 = vunpack.c.l.b16 %v2147
    %v2280 = vunpack.c.l.b16 %v2148
    %v2281 = vunpack.c.l.b16 %v2149
    %v2282 = vunpack.c.l.b16 %v2150
    %v2283 = vunpack.c.l.b16 %v2151
    %v2284 = vunpack.c.l.b16 %v2152
    %v2285 = vunpack.c.l.b16 %v2153
    %v2286 = vunpack.c.l.b16 %v2154
    %v2287 = vunpack.c.l.b16 %v2155
    %v2288 = vunpack.c.l.b16 %v2156
    %v2289 = vunpack.c.l.b16 %v2157
    %v2290 = vunpack.c.l.b16 %v2158
    %v2291 = vunpack.c.l.b16 %v2159
    %v2292 = vpack.c.b16 %v2229, %v2228
    %v2293 = vpack.c.b16 %v2231, %v2230
    %v2294 = vpack.c.b16 %v2233, %v2232
    %v2295 = vpack.c.b16 %v2235, %v2234
    %v2296 = vpack.c.b16 %v2237, %v2236
    %v2297 = vpack.c.b16 %v2239, %v2238
    %v2298 = vpack.c.b16 %v2241, %v2240
    %v2299 = vpack.c.b16 %v2243, %v2242
    %v2300 = vpack.c.b16 %v2245, %v2244
    %v2301 = vpack.c.b16 %v2247, %v2246
    %v2302 = vpack.c.b16 %v2249, %v2248
    %v2303 = vpack.c.b16 %v2251, %v2250
    %v2304 = vpack.c.b16 %v2253, %v2252
    %v2305 = vpack.c.b16 %v2255, %v2254
    %v2306 = vpack.c.b16 %v2257, %v2256
    %v2307 = vpack.c.b16 %v2259, %v2258
    %v2308 = vpack.c.b16 %v2261, %v2260
    %v2309 = vpack.c.b16 %v2263, %v2262
    %v2310 = vpack.c.b16 %v2265, %v2264
    %v2311 = vpack.c.b16 %v2267, %v2266
    %v2312 = vpack.c.b16 %v2269, %v2268
    %v2313 = vpack.c.b16 %v2271, %v2270
    %v2314 = vpack.c.b16 %v2273, %v2272
    %v2315 = vpack.c.b16 %v2275, %v2274
    %v2316 = vpack.c.b16 %v2277, %v2276
    %v2317 = vpack.c.b16 %v2279, %v2278
    %v2318 = vpack.c.b16 %v2281, %v2280
    %v2319 = vpack.c.b16 %v2283, %v2282
    %v2320 = vpack.c.b16 %v2285, %v2284
    %v2321 = vpack.c.b16 %v2287, %v2286
    %v2322 = vpack.c.b16 %v2289, %v2288
    %v2323 = vpack.c.b16 %v2291, %v2290
    %2356 = vmatpush.bf16.msra.mxu0 %v2299
    %2357 = vmatpush.bf16.msra.mxu0 %v2298
    %2358 = vmatpush.bf16.msra.mxu0 %v2297
    %2359 = vmatpush.bf16.msra.mxu0 %v2296
    %2360 = vmatpush.bf16.msra.mxu0 %v2295
    %2361 = vmatpush.bf16.msra.mxu0 %v2294
    %2362 = vmatpush.bf16.msra.mxu0 %v2293
    %2363 = vmatpush.bf16.msra.mxu0 %v2292
    %2364 = vmatmul.bf16.gmra.mxu0 %v2092
    %v2365 = vpop.f32.mrf.mxu0
    %v2366 = vadd.f32 %v2162, %v2365
    %v2367 = vpop.f32.mrf.mxu0
    %v2368 = vadd.f32 %v2162, %v2367
    %2369 = vdwg.mxu0
    %2370 = vmatpush.bf16.msra.mxu0 %v2307
    %2371 = vmatpush.bf16.msra.mxu0 %v2306
    %2372 = vmatpush.bf16.msra.mxu0 %v2305
    %2373 = vmatpush.bf16.msra.mxu0 %v2304
    %2374 = vmatpush.bf16.msra.mxu0 %v2303
    %2375 = vmatpush.bf16.msra.mxu0 %v2302
    %2376 = vmatpush.bf16.msra.mxu0 %v2301
    %2377 = vmatpush.bf16.msra.mxu0 %v2300
    %2378 = vmatmul.bf16.gmra.mxu0 %v2093
    %v2379 = vpop.f32.mrf.mxu0
    %v2380 = vadd.f32 %v2366, %v2379
    %v2381 = vpop.f32.mrf.mxu0
    %v2382 = vadd.f32 %v2368, %v2381
    %2383 = vdwg.mxu0
    %2384 = vmatpush.bf16.msra.mxu0 %v2315
    %2385 = vmatpush.bf16.msra.mxu0 %v2314
    %2386 = vmatpush.bf16.msra.mxu0 %v2313
    %2387 = vmatpush.bf16.msra.mxu0 %v2312
    %2388 = vmatpush.bf16.msra.mxu0 %v2311
    %2389 = vmatpush.bf16.msra.mxu0 %v2310
    %2390 = vmatpush.bf16.msra.mxu0 %v2309
    %2391 = vmatpush.bf16.msra.mxu0 %v2308
    %2392 = vmatmul.bf16.gmra.mxu0 %v2094
    %v2393 = vpop.f32.mrf.mxu0
    %v2394 = vadd.f32 %v2380, %v2393
    %v2395 = vpop.f32.mrf.mxu0
    %v2396 = vadd.f32 %v2382, %v2395
    %2397 = vdwg.mxu0
    %2398 = vmatpush.bf16.msra.mxu0 %v2323
    %2399 = vmatpush.bf16.msra.mxu0 %v2322
    %2400 = vmatpush.bf16.msra.mxu0 %v2321
    %2401 = vmatpush.bf16.msra.mxu0 %v2320
    %2402 = vmatpush.bf16.msra.mxu0 %v2319
    %2403 = vmatpush.bf16.msra.mxu0 %v2318
    %2404 = vmatpush.bf16.msra.mxu0 %v2317
    %2405 = vmatpush.bf16.msra.mxu0 %v2316
    %2406 = vmatmul.bf16.gmra.mxu0 %v2095
    %v2407 = vpop.f32.mrf.mxu0
    %v2408 = vadd.f32 %v2394, %v2407
    %v2409 = vpop.f32.mrf.mxu0
    %v2410 = vadd.f32 %v2396, %v2409
    %2411 = vdwg.mxu0
    %v2412 = vmax.f32 %v2408, 0.0
    %v2413 = vmax.f32 %v2410, 0.0
    %v2414 = vpack.c.bf16 %v2413, %v2412
    %v2415 = vld [vmem:[%s5] sm:$0xf]
    %v2416 = vld [vmem:[%s5 + $0x4] sm:$0xf]
    %v2417 = vld [vmem:[%s5 + $0x8] sm:$0xf]
    %v2418 = vld [vmem:[%s5 + $0xc] sm:$0xf]
    %v2419 = vld [vmem:[%s5 + $0x10] sm:$0xf]
    %v2420 = vld [vmem:[%s5 + $0x14] sm:$0xf]
    %v2421 = vld [vmem:[%s5 + $0x18] sm:$0xf]
    %v2422 = vld [vmem:[%s5 + $0x1c] sm:$0xf]
    %v2423 = vld [vmem:[%s5 + $0x20] sm:$0xf]
    %v2424 = vld [vmem:[%s5 + $0x24] sm:$0xf]
    %v2425 = vld [vmem:[%s5 + $0x28] sm:$0xf]
    %v2426 = vld [vmem:[%s5 + $0x2c] sm:$0xf]
    %v2427 = vld [vmem:[%s5 + $0x30] sm:$0xf]
    %v2428 = vld [vmem:[%s5 + $0x34] sm:$0xf]
    %v2429 = vld [vmem:[%s5 + $0x38] sm:$0xf]
    %v2430 = vld [vmem:[%s5 + $0x3c] sm:$0xf]
    %v2431 = vld [vmem:[%s6] sm:$0x1]
    %v2433 = vperm.slane %v2431, 0
    %v2451 = vunpack.c.l.b16 %v2415
    %v2452 = vunpack.c.l.b16 %v2416
    %v2453 = vunpack.c.l.b16 %v2417
    %v2454 = vunpack.c.l.b16 %v2418
    %v2455 = vunpack.c.l.b16 %v2419
    %v2456 = vunpack.c.l.b16 %v2420
    %v2457 = vunpack.c.l.b16 %v2421
    %v2458 = vunpack.c.l.b16 %v2422
    %v2459 = vunpack.c.l.b16 %v2423
    %v2460 = vunpack.c.l.b16 %v2424
    %v2461 = vunpack.c.l.b16 %v2425
    %v2462 = vunpack.c.l.b16 %v2426
    %v2463 = vunpack.c.l.b16 %v2427
    %v2464 = vunpack.c.l.b16 %v2428
    %v2465 = vunpack.c.l.b16 %v2429
    %v2466 = vunpack.c.l.b16 %v2430
    %v2467 = vpack.c.b16 %v2452, %v2451
    %v2468 = vpack.c.b16 %v2454, %v2453
    %v2469 = vpack.c.b16 %v2456, %v2455
    %v2470 = vpack.c.b16 %v2458, %v2457
    %v2471 = vpack.c.b16 %v2460, %v2459
    %v2472 = vpack.c.b16 %v2462, %v2461
    %v2473 = vpack.c.b16 %v2464, %v2463
    %v2474 = vpack.c.b16 %v2466, %v2465
    %2483 = vmatpush.bf16.msra.mxu0 %v2474
    %2484 = vmatpush.bf16.msra.mxu0 %v2473
    %2485 = vmatpush.bf16.msra.mxu0 %v2472
    %2486 = vmatpush.bf16.msra.mxu0 %v2471
    %2487 = vmatpush.bf16.msra.mxu0 %v2470
    %2488 = vmatpush.bf16.msra.mxu0 %v2469
    %2489 = vmatpush.bf16.msra.mxu0 %v2468
    %2490 = vmatpush.bf16.msra.mxu0 %v2467
    %2491 = vmatmul.bf16.gmra.mxu0 %v2414
    %v2492 = vpop.f32.mrf.mxu0
    %v2493 = vadd.f32 %v2433, %v2492
    %v2494 = vpop.f32.mrf.mxu0
    %v2495 = vadd.f32 %v2433, %v2494
    %2496 = vdwg.mxu0
    %2497 = vst [vmem:[%s7] sm:$0xff] %v2493
    %2498 = vst [vmem:[%s7 + $0x8] sm:$0xff] %v2495
    // Predicated region
    $region34: #{_forward_impl.1} parent=1 // pred_check
      _
    $region35: #{_forward_impl.1} parent=1 // pred_check_branch
      %2500 = sbr.rel (0) target = $region37
    $region36: #{_forward_impl.1} parent=1 // pred_region
      _
    $region37: #{_forward_impl.1} parent=1 // pred_fallthru
      _
    // Predicated region
    $region38: #{_forward_impl.1} parent=1 // pred_check
      _
    $region39: #{_forward_impl.1} parent=1 // pred_check_branch
      %2502 = sbr.rel (0) target = $region41
    $region40: #{_forward_impl.1} parent=1 // pred_region
      _
    $region41: #{_forward_impl.1} parent=1 // pred_fallthru
      _
    %2503 = vsyncpa [#allocation3], 1

</llo_original>
